<compile_context>
chip_gen: v7x
topology: tpu7x:2x2x1
jax: 0.10.0
libtpu: 0.0.40
codegen_flags: <defaults>
</compile_context>

<pallas_src>
import functools
import math

import jax
import jax.numpy as jnp
from jax.experimental import pallas as pl
from jax.experimental.pallas import tpu as pltpu

WINDOW_SIZE = 11
SIGMA = 1.5
C1 = 0.01 ** 2
C2 = 0.03 ** 2
LANE_BLOCK = 128


def _gaussian_1d(window_size: int, sigma: float):
    """Deterministic 1D gaussian (python floats), sums to 1.

    The PyTorch 11x11 window is the outer product of this 1D window, so a
    separable (vertical then horizontal) pass is mathematically exact.
    """
    g = [math.exp(-((x - window_size // 2) ** 2) / (2.0 * sigma ** 2))
         for x in range(window_size)]
    s = sum(g)
    return [v / s for v in g]


# ----------------------------- Pallas kernel -------------------------------

def _ssim_sums_kernel(p1_ref, p2_ref, out_ref, *, w1d, out_h, out_w):
    """Per-slice sum of the SSIM map for a block of lane-packed slices.

    p1_ref, p2_ref: (Hp, Wp, LB) zero-padded inputs; LB slices on lanes.
    out_ref:        (1, LB) per-slice sum of the (out_h, out_w) SSIM map.
    """
    p1 = p1_ref[...]
    p2 = p2_ref[...]
    ws = len(w1d)

    def sep_gauss(x):
        # Vertical pass: slices over the leading (batched) spatial axis —
        # pure offset addressing, no lane/sublane movement.
        v = w1d[0] * x[0:out_h]
        for di in range(1, ws):
            v = v + w1d[di] * x[di:di + out_h]
        # Horizontal pass: slices over the sublane spatial axis of the
        # already row-reduced intermediate (lanes hold independent slices,
        # so no cross-lane shifts are ever needed).
        m = w1d[0] * v[:, 0:out_w, :]
        for dj in range(1, ws):
            m = m + w1d[dj] * v[:, dj:dj + out_w, :]
        return m

    # Five gaussian-filtered moments via separable 1D passes.  Products are
    # computed once per padded pixel (zero padding -> zero products, exactly
    # matching F.conv2d 'same' zero padding in the reference).
    mu1 = sep_gauss(p1)
    mu2 = sep_gauss(p2)
    s11 = sep_gauss(p1 * p1)
    s22 = sep_gauss(p2 * p2)
    s12 = sep_gauss(p1 * p2)

    mu1_sq = mu1 * mu1
    mu2_sq = mu2 * mu2
    mu1_mu2 = mu1 * mu2
    sigma1_sq = s11 - mu1_sq
    sigma2_sq = s22 - mu2_sq
    sigma12 = s12 - mu1_mu2

    num = (2.0 * mu1_mu2 + C1) * (2.0 * sigma12 + C2)
    den = (mu1_sq + mu2_sq + C1) * (sigma1_sq + sigma2_sq + C2)
    ssim_map = num / den                      # (out_h, out_w, LB)

    # Reduce spatial dims, keep lanes (slices): leading-axis adds on the VALU,
    # one cross-sublane reduce at the end, one lane-dense store.
    row_sum = jnp.sum(ssim_map, axis=0)                      # (out_w, LB)
    out_ref[...] = jnp.sum(row_sum, axis=0, keepdims=True)   # (1, LB)


def ssim_means_pallas(img1, img2, window_size=WINDOW_SIZE, sigma=SIGMA):
    """Per-pair SSIM means (size_average=True) for stacked image pairs.

    img1, img2: (P, B, C, h, w) float32.  Returns (P,) float32 of
    mean(ssim_map) for each pair p, all computed in a single pallas_call.
    """
    P, B, C, h, w = img1.shape
    pad = window_size // 2
    hp, wp = h + 2 * pad, w + 2 * pad
    N = P * B * C
    n_pad = -N % LANE_BLOCK
    Npad = N + n_pad
    w1d = _gaussian_1d(window_size, sigma)

    def prep(x):
        # (N, h, w) -> slices onto the lane (last) axis, THEN zero-pad:
        # the transpose touches only N*h*w elements, the pad is mostly
        # contiguous writes.  Result: (hp, wp, Npad).
        x = x.reshape(N, h, w).astype(jnp.float32)
        x = jnp.transpose(x, (1, 2, 0))                       # (h, w, N)
        return jnp.pad(x, ((pad, pad), (pad, pad), (0, n_pad)))

    p1 = prep(img1)
    p2 = prep(img2)

    kernel = functools.partial(_ssim_sums_kernel, w1d=w1d, out_h=h, out_w=w)

    sums = pl.pallas_call(
        kernel,
        out_shape=jax.ShapeDtypeStruct((1, Npad), jnp.float32),
        grid=(Npad // LANE_BLOCK,),
        in_specs=[
            pl.BlockSpec((hp, wp, LANE_BLOCK), lambda i: (0, 0, i)),
            pl.BlockSpec((hp, wp, LANE_BLOCK), lambda i: (0, 0, i)),
        ],
        out_specs=pl.BlockSpec((1, LANE_BLOCK), lambda i: (0, i)),
        compiler_params=pltpu.CompilerParams(
            dimension_semantics=("parallel",)),
    )(p1, p2)

    per_slice = sums[0, :N].reshape(P, B * C)         # padded lanes discarded
    return jnp.sum(per_slice, axis=1) / jnp.float32(B * C * h * w)


# ------------------------------ Haar DWT (glue) -----------------------------

def haar_dwt2d(x):
    """Orthonormal single-level Haar DWT.  x: (B, C, H, W) with even H, W."""
    B, C, H, W = x.shape
    xr = x.reshape(B, C, H // 2, 2, W // 2, 2)
    a = xr[:, :, :, 0, :, 0]
    b = xr[:, :, :, 0, :, 1]
    c = xr[:, :, :, 1, :, 0]
    d = xr[:, :, :, 1, :, 1]
    LL = (a + b + c + d) * 0.5
    LH = (a - b + c - d) * 0.5
    HL = (a + b - c - d) * 0.5
    HH = (a - b - c + d) * 0.5
    return LL, LH, HL, HH


# ------------------------------- L_SSIM loss --------------------------------

def l_ssim(image_A, image_B, image_fused, r=0.5):
    LL_ir, LH_ir, HL_ir, HH_ir = haar_dwt2d(image_A)
    LL_vis, LH_vis, HL_vis, HH_vis = haar_dwt2d(image_B)
    LL_f, LH_f, HL_f, HH_f = haar_dwt2d(image_fused)

    # All eight SSIM evaluations share one fused Pallas call.
    img1 = jnp.stack([LL_ir, LH_ir, HL_ir, HH_ir,
                      LL_vis, LH_vis, HL_vis, HH_vis])          # (8,B,C,h,w)
    img2 = jnp.stack([LL_f, LH_f, HL_f, HH_f] * 2)              # (8,B,C,h,w)

    per_pair_mean = ssim_means_pallas(img1, img2)               # (8,)

    w_ll = r * r
    w_mx = r * (1.0 - r)
    w_hh = (1.0 - r) * (1.0 - r)
    weights = jnp.array([w_ll, w_mx, w_mx, w_hh,
                         w_ll, w_mx, w_mx, w_hh], jnp.float32)
    return jnp.sum(weights * per_pair_mean)


if __name__ == "__main__":
    key = jax.random.PRNGKey(0)
    k1, k2, k3 = jax.random.split(key, 3)
    B, C, H, W = 2, 4, 16, 16
    image_A = jax.random.uniform(k1, (B, C, H, W), dtype=jnp.float32)
    image_B = jax.random.uniform(k2, (B, C, H, W), dtype=jnp.float32)
    image_F = jax.random.uniform(k3, (B, C, H, W), dtype=jnp.float32)

    loss_fn = jax.jit(functools.partial(l_ssim, r=0.5))
    loss = loss_fn(image_A, image_B, image_F)
    jax.block_until_ready(loss)
    print("KERNEL_OK")
</pallas_src>

<mosaic_0001>
module attributes {stable_mosaic.version = 11 : i64} {
  func.func @_ssim_sums_kernel(%arg0: i32, %arg1: memref<18x18x128xf32, #tpu.memory_space<vmem>>, %arg2: memref<18x18x128xf32, #tpu.memory_space<vmem>>, %arg3: memref<1x128xf32, #tpu.memory_space<vmem>>) attributes {dimension_semantics = [#tpu.dimension_semantics<parallel>], iteration_bounds = array<i64: 1>, scalar_prefetch = 0 : i64, scratch_operands = 0 : i64, tpu.core_type = #tpu.core_type<tc>, window_params = [{transform_indices = @transform_0, window_bounds = array<i64: 18, 18, 128>}, {transform_indices = @transform_1, window_bounds = array<i64: 18, 18, 128>}, {transform_indices = @transform_2, window_bounds = array<i64: 1, 128>}]} {
    %c0 = arith.constant 0 : index
    %c0_0 = arith.constant 0 : index
    %c0_1 = arith.constant 0 : index
    %0 = vector.load %arg1[%c0, %c0_0, %c0_1] : memref<18x18x128xf32, #tpu.memory_space<vmem>>, vector<18x18x128xf32>
    %c0_2 = arith.constant 0 : index
    %c0_3 = arith.constant 0 : index
    %c0_4 = arith.constant 0 : index
    %1 = vector.load %arg2[%c0_2, %c0_3, %c0_4] : memref<18x18x128xf32, #tpu.memory_space<vmem>>, vector<18x18x128xf32>
    %2 = vector.extract_strided_slice %0 {offsets = [0, 0, 0], sizes = [8, 18, 128], strides = [1, 1, 1]} : vector<18x18x128xf32> to vector<8x18x128xf32>
    %cst = arith.constant 0.00102838012 : f32
    %3 = vector.broadcast %cst : f32 to vector<8x18x128xf32>
    %4 = arith.mulf %3, %2 : vector<8x18x128xf32>
    %5 = vector.extract_strided_slice %0 {offsets = [1, 0, 0], sizes = [8, 18, 128], strides = [1, 1, 1]} : vector<18x18x128xf32> to vector<8x18x128xf32>
    %cst_5 = arith.constant 0.00759875821 : f32
    %6 = vector.broadcast %cst_5 : f32 to vector<8x18x128xf32>
    %7 = arith.mulf %6, %5 : vector<8x18x128xf32>
    %8 = arith.addf %4, %7 : vector<8x18x128xf32>
    %9 = vector.extract_strided_slice %0 {offsets = [2, 0, 0], sizes = [8, 18, 128], strides = [1, 1, 1]} : vector<18x18x128xf32> to vector<8x18x128xf32>
    %cst_6 = arith.constant 0.0360007733 : f32
    %10 = vector.broadcast %cst_6 : f32 to vector<8x18x128xf32>
    %11 = arith.mulf %10, %9 : vector<8x18x128xf32>
    %12 = arith.addf %8, %11 : vector<8x18x128xf32>
    %13 = vector.extract_strided_slice %0 {offsets = [3, 0, 0], sizes = [8, 18, 128], strides = [1, 1, 1]} : vector<18x18x128xf32> to vector<8x18x128xf32>
    %cst_7 = arith.constant 0.109360687 : f32
    %14 = vector.broadcast %cst_7 : f32 to vector<8x18x128xf32>
    %15 = arith.mulf %14, %13 : vector<8x18x128xf32>
    %16 = arith.addf %12, %15 : vector<8x18x128xf32>
    %17 = vector.extract_strided_slice %0 {offsets = [4, 0, 0], sizes = [8, 18, 128], strides = [1, 1, 1]} : vector<18x18x128xf32> to vector<8x18x128xf32>
    %cst_8 = arith.constant 0.213005543 : f32
    %18 = vector.broadcast %cst_8 : f32 to vector<8x18x128xf32>
    %19 = arith.mulf %18, %17 : vector<8x18x128xf32>
    %20 = arith.addf %16, %19 : vector<8x18x128xf32>
    %21 = vector.extract_strided_slice %0 {offsets = [5, 0, 0], sizes = [8, 18, 128], strides = [1, 1, 1]} : vector<18x18x128xf32> to vector<8x18x128xf32>
    %cst_9 = arith.constant 0.266011715 : f32
    %22 = vector.broadcast %cst_9 : f32 to vector<8x18x128xf32>
    %23 = arith.mulf %22, %21 : vector<8x18x128xf32>
    %24 = arith.addf %20, %23 : vector<8x18x128xf32>
    %25 = vector.extract_strided_slice %0 {offsets = [6, 0, 0], sizes = [8, 18, 128], strides = [1, 1, 1]} : vector<18x18x128xf32> to vector<8x18x128xf32>
    %cst_10 = arith.constant 0.213005543 : f32
    %26 = vector.broadcast %cst_10 : f32 to vector<8x18x128xf32>
    %27 = arith.mulf %26, %25 : vector<8x18x128xf32>
    %28 = arith.addf %24, %27 : vector<8x18x128xf32>
    %29 = vector.extract_strided_slice %0 {offsets = [7, 0, 0], sizes = [8, 18, 128], strides = [1, 1, 1]} : vector<18x18x128xf32> to vector<8x18x128xf32>
    %cst_11 = arith.constant 0.109360687 : f32
    %30 = vector.broadcast %cst_11 : f32 to vector<8x18x128xf32>
    %31 = arith.mulf %30, %29 : vector<8x18x128xf32>
    %32 = arith.addf %28, %31 : vector<8x18x128xf32>
    %33 = vector.extract_strided_slice %0 {offsets = [8, 0, 0], sizes = [8, 18, 128], strides = [1, 1, 1]} : vector<18x18x128xf32> to vector<8x18x128xf32>
    %cst_12 = arith.constant 0.0360007733 : f32
    %34 = vector.broadcast %cst_12 : f32 to vector<8x18x128xf32>
    %35 = arith.mulf %34, %33 : vector<8x18x128xf32>
    %36 = arith.addf %32, %35 : vector<8x18x128xf32>
    %37 = vector.extract_strided_slice %0 {offsets = [9, 0, 0], sizes = [8, 18, 128], strides = [1, 1, 1]} : vector<18x18x128xf32> to vector<8x18x128xf32>
    %cst_13 = arith.constant 0.00759875821 : f32
    %38 = vector.broadcast %cst_13 : f32 to vector<8x18x128xf32>
    %39 = arith.mulf %38, %37 : vector<8x18x128xf32>
    %40 = arith.addf %36, %39 : vector<8x18x128xf32>
    %41 = vector.extract_strided_slice %0 {offsets = [10, 0, 0], sizes = [8, 18, 128], strides = [1, 1, 1]} : vector<18x18x128xf32> to vector<8x18x128xf32>
    %cst_14 = arith.constant 0.00102838012 : f32
    %42 = vector.broadcast %cst_14 : f32 to vector<8x18x128xf32>
    %43 = arith.mulf %42, %41 : vector<8x18x128xf32>
    %44 = arith.addf %40, %43 : vector<8x18x128xf32>
    %45 = vector.extract_strided_slice %44 {offsets = [0, 0, 0], sizes = [8, 8, 128], strides = [1, 1, 1]} : vector<8x18x128xf32> to vector<8x8x128xf32>
    %cst_15 = arith.constant 0.00102838012 : f32
    %46 = vector.broadcast %cst_15 : f32 to vector<8x8x128xf32>
    %47 = arith.mulf %46, %45 : vector<8x8x128xf32>
    %48 = vector.extract_strided_slice %44 {offsets = [0, 1, 0], sizes = [8, 8, 128], strides = [1, 1, 1]} : vector<8x18x128xf32> to vector<8x8x128xf32>
    %cst_16 = arith.constant 0.00759875821 : f32
    %49 = vector.broadcast %cst_16 : f32 to vector<8x8x128xf32>
    %50 = arith.mulf %49, %48 : vector<8x8x128xf32>
    %51 = arith.addf %47, %50 : vector<8x8x128xf32>
    %52 = vector.extract_strided_slice %44 {offsets = [0, 2, 0], sizes = [8, 8, 128], strides = [1, 1, 1]} : vector<8x18x128xf32> to vector<8x8x128xf32>
    %cst_17 = arith.constant 0.0360007733 : f32
    %53 = vector.broadcast %cst_17 : f32 to vector<8x8x128xf32>
    %54 = arith.mulf %53, %52 : vector<8x8x128xf32>
    %55 = arith.addf %51, %54 : vector<8x8x128xf32>
    %56 = vector.extract_strided_slice %44 {offsets = [0, 3, 0], sizes = [8, 8, 128], strides = [1, 1, 1]} : vector<8x18x128xf32> to vector<8x8x128xf32>
    %cst_18 = arith.constant 0.109360687 : f32
    %57 = vector.broadcast %cst_18 : f32 to vector<8x8x128xf32>
    %58 = arith.mulf %57, %56 : vector<8x8x128xf32>
    %59 = arith.addf %55, %58 : vector<8x8x128xf32>
    %60 = vector.extract_strided_slice %44 {offsets = [0, 4, 0], sizes = [8, 8, 128], strides = [1, 1, 1]} : vector<8x18x128xf32> to vector<8x8x128xf32>
    %cst_19 = arith.constant 0.213005543 : f32
    %61 = vector.broadcast %cst_19 : f32 to vector<8x8x128xf32>
    %62 = arith.mulf %61, %60 : vector<8x8x128xf32>
    %63 = arith.addf %59, %62 : vector<8x8x128xf32>
    %64 = vector.extract_strided_slice %44 {offsets = [0, 5, 0], sizes = [8, 8, 128], strides = [1, 1, 1]} : vector<8x18x128xf32> to vector<8x8x128xf32>
    %cst_20 = arith.constant 0.266011715 : f32
    %65 = vector.broadcast %cst_20 : f32 to vector<8x8x128xf32>
    %66 = arith.mulf %65, %64 : vector<8x8x128xf32>
    %67 = arith.addf %63, %66 : vector<8x8x128xf32>
    %68 = vector.extract_strided_slice %44 {offsets = [0, 6, 0], sizes = [8, 8, 128], strides = [1, 1, 1]} : vector<8x18x128xf32> to vector<8x8x128xf32>
    %cst_21 = arith.constant 0.213005543 : f32
    %69 = vector.broadcast %cst_21 : f32 to vector<8x8x128xf32>
    %70 = arith.mulf %69, %68 : vector<8x8x128xf32>
    %71 = arith.addf %67, %70 : vector<8x8x128xf32>
    %72 = vector.extract_strided_slice %44 {offsets = [0, 7, 0], sizes = [8, 8, 128], strides = [1, 1, 1]} : vector<8x18x128xf32> to vector<8x8x128xf32>
    %cst_22 = arith.constant 0.109360687 : f32
    %73 = vector.broadcast %cst_22 : f32 to vector<8x8x128xf32>
    %74 = arith.mulf %73, %72 : vector<8x8x128xf32>
    %75 = arith.addf %71, %74 : vector<8x8x128xf32>
    %76 = vector.extract_strided_slice %44 {offsets = [0, 8, 0], sizes = [8, 8, 128], strides = [1, 1, 1]} : vector<8x18x128xf32> to vector<8x8x128xf32>
    %cst_23 = arith.constant 0.0360007733 : f32
    %77 = vector.broadcast %cst_23 : f32 to vector<8x8x128xf32>
    %78 = arith.mulf %77, %76 : vector<8x8x128xf32>
    %79 = arith.addf %75, %78 : vector<8x8x128xf32>
    %80 = vector.extract_strided_slice %44 {offsets = [0, 9, 0], sizes = [8, 8, 128], strides = [1, 1, 1]} : vector<8x18x128xf32> to vector<8x8x128xf32>
    %cst_24 = arith.constant 0.00759875821 : f32
    %81 = vector.broadcast %cst_24 : f32 to vector<8x8x128xf32>
    %82 = arith.mulf %81, %80 : vector<8x8x128xf32>
    %83 = arith.addf %79, %82 : vector<8x8x128xf32>
    %84 = vector.extract_strided_slice %44 {offsets = [0, 10, 0], sizes = [8, 8, 128], strides = [1, 1, 1]} : vector<8x18x128xf32> to vector<8x8x128xf32>
    %cst_25 = arith.constant 0.00102838012 : f32
    %85 = vector.broadcast %cst_25 : f32 to vector<8x8x128xf32>
    %86 = arith.mulf %85, %84 : vector<8x8x128xf32>
    %87 = arith.addf %83, %86 : vector<8x8x128xf32>
    %88 = vector.extract_strided_slice %1 {offsets = [0, 0, 0], sizes = [8, 18, 128], strides = [1, 1, 1]} : vector<18x18x128xf32> to vector<8x18x128xf32>
    %cst_26 = arith.constant 0.00102838012 : f32
    %89 = vector.broadcast %cst_26 : f32 to vector<8x18x128xf32>
    %90 = arith.mulf %89, %88 : vector<8x18x128xf32>
    %91 = vector.extract_strided_slice %1 {offsets = [1, 0, 0], sizes = [8, 18, 128], strides = [1, 1, 1]} : vector<18x18x128xf32> to vector<8x18x128xf32>
    %cst_27 = arith.constant 0.00759875821 : f32
    %92 = vector.broadcast %cst_27 : f32 to vector<8x18x128xf32>
    %93 = arith.mulf %92, %91 : vector<8x18x128xf32>
    %94 = arith.addf %90, %93 : vector<8x18x128xf32>
    %95 = vector.extract_strided_slice %1 {offsets = [2, 0, 0], sizes = [8, 18, 128], strides = [1, 1, 1]} : vector<18x18x128xf32> to vector<8x18x128xf32>
    %cst_28 = arith.constant 0.0360007733 : f32
    %96 = vector.broadcast %cst_28 : f32 to vector<8x18x128xf32>
    %97 = arith.mulf %96, %95 : vector<8x18x128xf32>
    %98 = arith.addf %94, %97 : vector<8x18x128xf32>
    %99 = vector.extract_strided_slice %1 {offsets = [3, 0, 0], sizes = [8, 18, 128], strides = [1, 1, 1]} : vector<18x18x128xf32> to vector<8x18x128xf32>
    %cst_29 = arith.constant 0.109360687 : f32
    %100 = vector.broadcast %cst_29 : f32 to vector<8x18x128xf32>
    %101 = arith.mulf %100, %99 : vector<8x18x128xf32>
    %102 = arith.addf %98, %101 : vector<8x18x128xf32>
    %103 = vector.extract_strided_slice %1 {offsets = [4, 0, 0], sizes = [8, 18, 128], strides = [1, 1, 1]} : vector<18x18x128xf32> to vector<8x18x128xf32>
    %cst_30 = arith.constant 0.213005543 : f32
    %104 = vector.broadcast %cst_30 : f32 to vector<8x18x128xf32>
    %105 = arith.mulf %104, %103 : vector<8x18x128xf32>
    %106 = arith.addf %102, %105 : vector<8x18x128xf32>
    %107 = vector.extract_strided_slice %1 {offsets = [5, 0, 0], sizes = [8, 18, 128], strides = [1, 1, 1]} : vector<18x18x128xf32> to vector<8x18x128xf32>
    %cst_31 = arith.constant 0.266011715 : f32
    %108 = vector.broadcast %cst_31 : f32 to vector<8x18x128xf32>
    %109 = arith.mulf %108, %107 : vector<8x18x128xf32>
    %110 = arith.addf %106, %109 : vector<8x18x128xf32>
    %111 = vector.extract_strided_slice %1 {offsets = [6, 0, 0], sizes = [8, 18, 128], strides = [1, 1, 1]} : vector<18x18x128xf32> to vector<8x18x128xf32>
    %cst_32 = arith.constant 0.213005543 : f32
    %112 = vector.broadcast %cst_32 : f32 to vector<8x18x128xf32>
    %113 = arith.mulf %112, %111 : vector<8x18x128xf32>
    %114 = arith.addf %110, %113 : vector<8x18x128xf32>
    %115 = vector.extract_strided_slice %1 {offsets = [7, 0, 0], sizes = [8, 18, 128], strides = [1, 1, 1]} : vector<18x18x128xf32> to vector<8x18x128xf32>
    %cst_33 = arith.constant 0.109360687 : f32
    %116 = vector.broadcast %cst_33 : f32 to vector<8x18x128xf32>
    %117 = arith.mulf %116, %115 : vector<8x18x128xf32>
    %118 = arith.addf %114, %117 : vector<8x18x128xf32>
    %119 = vector.extract_strided_slice %1 {offsets = [8, 0, 0], sizes = [8, 18, 128], strides = [1, 1, 1]} : vector<18x18x128xf32> to vector<8x18x128xf32>
    %cst_34 = arith.constant 0.0360007733 : f32
    %120 = vector.broadcast %cst_34 : f32 to vector<8x18x128xf32>
    %121 = arith.mulf %120, %119 : vector<8x18x128xf32>
    %122 = arith.addf %118, %121 : vector<8x18x128xf32>
    %123 = vector.extract_strided_slice %1 {offsets = [9, 0, 0], sizes = [8, 18, 128], strides = [1, 1, 1]} : vector<18x18x128xf32> to vector<8x18x128xf32>
    %cst_35 = arith.constant 0.00759875821 : f32
    %124 = vector.broadcast %cst_35 : f32 to vector<8x18x128xf32>
    %125 = arith.mulf %124, %123 : vector<8x18x128xf32>
    %126 = arith.addf %122, %125 : vector<8x18x128xf32>
    %127 = vector.extract_strided_slice %1 {offsets = [10, 0, 0], sizes = [8, 18, 128], strides = [1, 1, 1]} : vector<18x18x128xf32> to vector<8x18x128xf32>
    %cst_36 = arith.constant 0.00102838012 : f32
    %128 = vector.broadcast %cst_36 : f32 to vector<8x18x128xf32>
    %129 = arith.mulf %128, %127 : vector<8x18x128xf32>
    %130 = arith.addf %126, %129 : vector<8x18x128xf32>
    %131 = vector.extract_strided_slice %130 {offsets = [0, 0, 0], sizes = [8, 8, 128], strides = [1, 1, 1]} : vector<8x18x128xf32> to vector<8x8x128xf32>
    %cst_37 = arith.constant 0.00102838012 : f32
    %132 = vector.broadcast %cst_37 : f32 to vector<8x8x128xf32>
    %133 = arith.mulf %132, %131 : vector<8x8x128xf32>
    %134 = vector.extract_strided_slice %130 {offsets = [0, 1, 0], sizes = [8, 8, 128], strides = [1, 1, 1]} : vector<8x18x128xf32> to vector<8x8x128xf32>
    %cst_38 = arith.constant 0.00759875821 : f32
    %135 = vector.broadcast %cst_38 : f32 to vector<8x8x128xf32>
    %136 = arith.mulf %135, %134 : vector<8x8x128xf32>
    %137 = arith.addf %133, %136 : vector<8x8x128xf32>
    %138 = vector.extract_strided_slice %130 {offsets = [0, 2, 0], sizes = [8, 8, 128], strides = [1, 1, 1]} : vector<8x18x128xf32> to vector<8x8x128xf32>
    %cst_39 = arith.constant 0.0360007733 : f32
    %139 = vector.broadcast %cst_39 : f32 to vector<8x8x128xf32>
    %140 = arith.mulf %139, %138 : vector<8x8x128xf32>
    %141 = arith.addf %137, %140 : vector<8x8x128xf32>
    %142 = vector.extract_strided_slice %130 {offsets = [0, 3, 0], sizes = [8, 8, 128], strides = [1, 1, 1]} : vector<8x18x128xf32> to vector<8x8x128xf32>
    %cst_40 = arith.constant 0.109360687 : f32
    %143 = vector.broadcast %cst_40 : f32 to vector<8x8x128xf32>
    %144 = arith.mulf %143, %142 : vector<8x8x128xf32>
    %145 = arith.addf %141, %144 : vector<8x8x128xf32>
    %146 = vector.extract_strided_slice %130 {offsets = [0, 4, 0], sizes = [8, 8, 128], strides = [1, 1, 1]} : vector<8x18x128xf32> to vector<8x8x128xf32>
    %cst_41 = arith.constant 0.213005543 : f32
    %147 = vector.broadcast %cst_41 : f32 to vector<8x8x128xf32>
    %148 = arith.mulf %147, %146 : vector<8x8x128xf32>
    %149 = arith.addf %145, %148 : vector<8x8x128xf32>
    %150 = vector.extract_strided_slice %130 {offsets = [0, 5, 0], sizes = [8, 8, 128], strides = [1, 1, 1]} : vector<8x18x128xf32> to vector<8x8x128xf32>
    %cst_42 = arith.constant 0.266011715 : f32
    %151 = vector.broadcast %cst_42 : f32 to vector<8x8x128xf32>
    %152 = arith.mulf %151, %150 : vector<8x8x128xf32>
    %153 = arith.addf %149, %152 : vector<8x8x128xf32>
    %154 = vector.extract_strided_slice %130 {offsets = [0, 6, 0], sizes = [8, 8, 128], strides = [1, 1, 1]} : vector<8x18x128xf32> to vector<8x8x128xf32>
    %cst_43 = arith.constant 0.213005543 : f32
    %155 = vector.broadcast %cst_43 : f32 to vector<8x8x128xf32>
    %156 = arith.mulf %155, %154 : vector<8x8x128xf32>
    %157 = arith.addf %153, %156 : vector<8x8x128xf32>
    %158 = vector.extract_strided_slice %130 {offsets = [0, 7, 0], sizes = [8, 8, 128], strides = [1, 1, 1]} : vector<8x18x128xf32> to vector<8x8x128xf32>
    %cst_44 = arith.constant 0.109360687 : f32
    %159 = vector.broadcast %cst_44 : f32 to vector<8x8x128xf32>
    %160 = arith.mulf %159, %158 : vector<8x8x128xf32>
    %161 = arith.addf %157, %160 : vector<8x8x128xf32>
    %162 = vector.extract_strided_slice %130 {offsets = [0, 8, 0], sizes = [8, 8, 128], strides = [1, 1, 1]} : vector<8x18x128xf32> to vector<8x8x128xf32>
    %cst_45 = arith.constant 0.0360007733 : f32
    %163 = vector.broadcast %cst_45 : f32 to vector<8x8x128xf32>
    %164 = arith.mulf %163, %162 : vector<8x8x128xf32>
    %165 = arith.addf %161, %164 : vector<8x8x128xf32>
    %166 = vector.extract_strided_slice %130 {offsets = [0, 9, 0], sizes = [8, 8, 128], strides = [1, 1, 1]} : vector<8x18x128xf32> to vector<8x8x128xf32>
    %cst_46 = arith.constant 0.00759875821 : f32
    %167 = vector.broadcast %cst_46 : f32 to vector<8x8x128xf32>
    %168 = arith.mulf %167, %166 : vector<8x8x128xf32>
    %169 = arith.addf %165, %168 : vector<8x8x128xf32>
    %170 = vector.extract_strided_slice %130 {offsets = [0, 10, 0], sizes = [8, 8, 128], strides = [1, 1, 1]} : vector<8x18x128xf32> to vector<8x8x128xf32>
    %cst_47 = arith.constant 0.00102838012 : f32
    %171 = vector.broadcast %cst_47 : f32 to vector<8x8x128xf32>
    %172 = arith.mulf %171, %170 : vector<8x8x128xf32>
    %173 = arith.addf %169, %172 : vector<8x8x128xf32>
    %174 = arith.mulf %0, %0 : vector<18x18x128xf32>
    %175 = vector.extract_strided_slice %174 {offsets = [0, 0, 0], sizes = [8, 18, 128], strides = [1, 1, 1]} : vector<18x18x128xf32> to vector<8x18x128xf32>
    %cst_48 = arith.constant 0.00102838012 : f32
    %176 = vector.broadcast %cst_48 : f32 to vector<8x18x128xf32>
    %177 = arith.mulf %176, %175 : vector<8x18x128xf32>
    %178 = vector.extract_strided_slice %174 {offsets = [1, 0, 0], sizes = [8, 18, 128], strides = [1, 1, 1]} : vector<18x18x128xf32> to vector<8x18x128xf32>
    %cst_49 = arith.constant 0.00759875821 : f32
    %179 = vector.broadcast %cst_49 : f32 to vector<8x18x128xf32>
    %180 = arith.mulf %179, %178 : vector<8x18x128xf32>
    %181 = arith.addf %177, %180 : vector<8x18x128xf32>
    %182 = vector.extract_strided_slice %174 {offsets = [2, 0, 0], sizes = [8, 18, 128], strides = [1, 1, 1]} : vector<18x18x128xf32> to vector<8x18x128xf32>
    %cst_50 = arith.constant 0.0360007733 : f32
    %183 = vector.broadcast %cst_50 : f32 to vector<8x18x128xf32>
    %184 = arith.mulf %183, %182 : vector<8x18x128xf32>
    %185 = arith.addf %181, %184 : vector<8x18x128xf32>
    %186 = vector.extract_strided_slice %174 {offsets = [3, 0, 0], sizes = [8, 18, 128], strides = [1, 1, 1]} : vector<18x18x128xf32> to vector<8x18x128xf32>
    %cst_51 = arith.constant 0.109360687 : f32
    %187 = vector.broadcast %cst_51 : f32 to vector<8x18x128xf32>
    %188 = arith.mulf %187, %186 : vector<8x18x128xf32>
    %189 = arith.addf %185, %188 : vector<8x18x128xf32>
    %190 = vector.extract_strided_slice %174 {offsets = [4, 0, 0], sizes = [8, 18, 128], strides = [1, 1, 1]} : vector<18x18x128xf32> to vector<8x18x128xf32>
    %cst_52 = arith.constant 0.213005543 : f32
    %191 = vector.broadcast %cst_52 : f32 to vector<8x18x128xf32>
    %192 = arith.mulf %191, %190 : vector<8x18x128xf32>
    %193 = arith.addf %189, %192 : vector<8x18x128xf32>
    %194 = vector.extract_strided_slice %174 {offsets = [5, 0, 0], sizes = [8, 18, 128], strides = [1, 1, 1]} : vector<18x18x128xf32> to vector<8x18x128xf32>
    %cst_53 = arith.constant 0.266011715 : f32
    %195 = vector.broadcast %cst_53 : f32 to vector<8x18x128xf32>
    %196 = arith.mulf %195, %194 : vector<8x18x128xf32>
    %197 = arith.addf %193, %196 : vector<8x18x128xf32>
    %198 = vector.extract_strided_slice %174 {offsets = [6, 0, 0], sizes = [8, 18, 128], strides = [1, 1, 1]} : vector<18x18x128xf32> to vector<8x18x128xf32>
    %cst_54 = arith.constant 0.213005543 : f32
    %199 = vector.broadcast %cst_54 : f32 to vector<8x18x128xf32>
    %200 = arith.mulf %199, %198 : vector<8x18x128xf32>
    %201 = arith.addf %197, %200 : vector<8x18x128xf32>
    %202 = vector.extract_strided_slice %174 {offsets = [7, 0, 0], sizes = [8, 18, 128], strides = [1, 1, 1]} : vector<18x18x128xf32> to vector<8x18x128xf32>
    %cst_55 = arith.constant 0.109360687 : f32
    %203 = vector.broadcast %cst_55 : f32 to vector<8x18x128xf32>
    %204 = arith.mulf %203, %202 : vector<8x18x128xf32>
    %205 = arith.addf %201, %204 : vector<8x18x128xf32>
    %206 = vector.extract_strided_slice %174 {offsets = [8, 0, 0], sizes = [8, 18, 128], strides = [1, 1, 1]} : vector<18x18x128xf32> to vector<8x18x128xf32>
    %cst_56 = arith.constant 0.0360007733 : f32
    %207 = vector.broadcast %cst_56 : f32 to vector<8x18x128xf32>
    %208 = arith.mulf %207, %206 : vector<8x18x128xf32>
    %209 = arith.addf %205, %208 : vector<8x18x128xf32>
    %210 = vector.extract_strided_slice %174 {offsets = [9, 0, 0], sizes = [8, 18, 128], strides = [1, 1, 1]} : vector<18x18x128xf32> to vector<8x18x128xf32>
    %cst_57 = arith.constant 0.00759875821 : f32
    %211 = vector.broadcast %cst_57 : f32 to vector<8x18x128xf32>
    %212 = arith.mulf %211, %210 : vector<8x18x128xf32>
    %213 = arith.addf %209, %212 : vector<8x18x128xf32>
    %214 = vector.extract_strided_slice %174 {offsets = [10, 0, 0], sizes = [8, 18, 128], strides = [1, 1, 1]} : vector<18x18x128xf32> to vector<8x18x128xf32>
    %cst_58 = arith.constant 0.00102838012 : f32
    %215 = vector.broadcast %cst_58 : f32 to vector<8x18x128xf32>
    %216 = arith.mulf %215, %214 : vector<8x18x128xf32>
    %217 = arith.addf %213, %216 : vector<8x18x128xf32>
    %218 = vector.extract_strided_slice %217 {offsets = [0, 0, 0], sizes = [8, 8, 128], strides = [1, 1, 1]} : vector<8x18x128xf32> to vector<8x8x128xf32>
    %cst_59 = arith.constant 0.00102838012 : f32
    %219 = vector.broadcast %cst_59 : f32 to vector<8x8x128xf32>
    %220 = arith.mulf %219, %218 : vector<8x8x128xf32>
    %221 = vector.extract_strided_slice %217 {offsets = [0, 1, 0], sizes = [8, 8, 128], strides = [1, 1, 1]} : vector<8x18x128xf32> to vector<8x8x128xf32>
    %cst_60 = arith.constant 0.00759875821 : f32
    %222 = vector.broadcast %cst_60 : f32 to vector<8x8x128xf32>
    %223 = arith.mulf %222, %221 : vector<8x8x128xf32>
    %224 = arith.addf %220, %223 : vector<8x8x128xf32>
    %225 = vector.extract_strided_slice %217 {offsets = [0, 2, 0], sizes = [8, 8, 128], strides = [1, 1, 1]} : vector<8x18x128xf32> to vector<8x8x128xf32>
    %cst_61 = arith.constant 0.0360007733 : f32
    %226 = vector.broadcast %cst_61 : f32 to vector<8x8x128xf32>
    %227 = arith.mulf %226, %225 : vector<8x8x128xf32>
    %228 = arith.addf %224, %227 : vector<8x8x128xf32>
    %229 = vector.extract_strided_slice %217 {offsets = [0, 3, 0], sizes = [8, 8, 128], strides = [1, 1, 1]} : vector<8x18x128xf32> to vector<8x8x128xf32>
    %cst_62 = arith.constant 0.109360687 : f32
    %230 = vector.broadcast %cst_62 : f32 to vector<8x8x128xf32>
    %231 = arith.mulf %230, %229 : vector<8x8x128xf32>
    %232 = arith.addf %228, %231 : vector<8x8x128xf32>
    %233 = vector.extract_strided_slice %217 {offsets = [0, 4, 0], sizes = [8, 8, 128], strides = [1, 1, 1]} : vector<8x18x128xf32> to vector<8x8x128xf32>
    %cst_63 = arith.constant 0.213005543 : f32
    %234 = vector.broadcast %cst_63 : f32 to vector<8x8x128xf32>
    %235 = arith.mulf %234, %233 : vector<8x8x128xf32>
    %236 = arith.addf %232, %235 : vector<8x8x128xf32>
    %237 = vector.extract_strided_slice %217 {offsets = [0, 5, 0], sizes = [8, 8, 128], strides = [1, 1, 1]} : vector<8x18x128xf32> to vector<8x8x128xf32>
    %cst_64 = arith.constant 0.266011715 : f32
    %238 = vector.broadcast %cst_64 : f32 to vector<8x8x128xf32>
    %239 = arith.mulf %238, %237 : vector<8x8x128xf32>
    %240 = arith.addf %236, %239 : vector<8x8x128xf32>
    %241 = vector.extract_strided_slice %217 {offsets = [0, 6, 0], sizes = [8, 8, 128], strides = [1, 1, 1]} : vector<8x18x128xf32> to vector<8x8x128xf32>
    %cst_65 = arith.constant 0.213005543 : f32
    %242 = vector.broadcast %cst_65 : f32 to vector<8x8x128xf32>
    %243 = arith.mulf %242, %241 : vector<8x8x128xf32>
    %244 = arith.addf %240, %243 : vector<8x8x128xf32>
    %245 = vector.extract_strided_slice %217 {offsets = [0, 7, 0], sizes = [8, 8, 128], strides = [1, 1, 1]} : vector<8x18x128xf32> to vector<8x8x128xf32>
    %cst_66 = arith.constant 0.109360687 : f32
    %246 = vector.broadcast %cst_66 : f32 to vector<8x8x128xf32>
    %247 = arith.mulf %246, %245 : vector<8x8x128xf32>
    %248 = arith.addf %244, %247 : vector<8x8x128xf32>
    %249 = vector.extract_strided_slice %217 {offsets = [0, 8, 0], sizes = [8, 8, 128], strides = [1, 1, 1]} : vector<8x18x128xf32> to vector<8x8x128xf32>
    %cst_67 = arith.constant 0.0360007733 : f32
    %250 = vector.broadcast %cst_67 : f32 to vector<8x8x128xf32>
    %251 = arith.mulf %250, %249 : vector<8x8x128xf32>
    %252 = arith.addf %248, %251 : vector<8x8x128xf32>
    %253 = vector.extract_strided_slice %217 {offsets = [0, 9, 0], sizes = [8, 8, 128], strides = [1, 1, 1]} : vector<8x18x128xf32> to vector<8x8x128xf32>
    %cst_68 = arith.constant 0.00759875821 : f32
    %254 = vector.broadcast %cst_68 : f32 to vector<8x8x128xf32>
    %255 = arith.mulf %254, %253 : vector<8x8x128xf32>
    %256 = arith.addf %252, %255 : vector<8x8x128xf32>
    %257 = vector.extract_strided_slice %217 {offsets = [0, 10, 0], sizes = [8, 8, 128], strides = [1, 1, 1]} : vector<8x18x128xf32> to vector<8x8x128xf32>
    %cst_69 = arith.constant 0.00102838012 : f32
    %258 = vector.broadcast %cst_69 : f32 to vector<8x8x128xf32>
    %259 = arith.mulf %258, %257 : vector<8x8x128xf32>
    %260 = arith.addf %256, %259 : vector<8x8x128xf32>
    %261 = arith.mulf %1, %1 : vector<18x18x128xf32>
    %262 = vector.extract_strided_slice %261 {offsets = [0, 0, 0], sizes = [8, 18, 128], strides = [1, 1, 1]} : vector<18x18x128xf32> to vector<8x18x128xf32>
    %cst_70 = arith.constant 0.00102838012 : f32
    %263 = vector.broadcast %cst_70 : f32 to vector<8x18x128xf32>
    %264 = arith.mulf %263, %262 : vector<8x18x128xf32>
    %265 = vector.extract_strided_slice %261 {offsets = [1, 0, 0], sizes = [8, 18, 128], strides = [1, 1, 1]} : vector<18x18x128xf32> to vector<8x18x128xf32>
    %cst_71 = arith.constant 0.00759875821 : f32
    %266 = vector.broadcast %cst_71 : f32 to vector<8x18x128xf32>
    %267 = arith.mulf %266, %265 : vector<8x18x128xf32>
    %268 = arith.addf %264, %267 : vector<8x18x128xf32>
    %269 = vector.extract_strided_slice %261 {offsets = [2, 0, 0], sizes = [8, 18, 128], strides = [1, 1, 1]} : vector<18x18x128xf32> to vector<8x18x128xf32>
    %cst_72 = arith.constant 0.0360007733 : f32
    %270 = vector.broadcast %cst_72 : f32 to vector<8x18x128xf32>
    %271 = arith.mulf %270, %269 : vector<8x18x128xf32>
    %272 = arith.addf %268, %271 : vector<8x18x128xf32>
    %273 = vector.extract_strided_slice %261 {offsets = [3, 0, 0], sizes = [8, 18, 128], strides = [1, 1, 1]} : vector<18x18x128xf32> to vector<8x18x128xf32>
    %cst_73 = arith.constant 0.109360687 : f32
    %274 = vector.broadcast %cst_73 : f32 to vector<8x18x128xf32>
    %275 = arith.mulf %274, %273 : vector<8x18x128xf32>
    %276 = arith.addf %272, %275 : vector<8x18x128xf32>
    %277 = vector.extract_strided_slice %261 {offsets = [4, 0, 0], sizes = [8, 18, 128], strides = [1, 1, 1]} : vector<18x18x128xf32> to vector<8x18x128xf32>
    %cst_74 = arith.constant 0.213005543 : f32
    %278 = vector.broadcast %cst_74 : f32 to vector<8x18x128xf32>
    %279 = arith.mulf %278, %277 : vector<8x18x128xf32>
    %280 = arith.addf %276, %279 : vector<8x18x128xf32>
    %281 = vector.extract_strided_slice %261 {offsets = [5, 0, 0], sizes = [8, 18, 128], strides = [1, 1, 1]} : vector<18x18x128xf32> to vector<8x18x128xf32>
    %cst_75 = arith.constant 0.266011715 : f32
    %282 = vector.broadcast %cst_75 : f32 to vector<8x18x128xf32>
    %283 = arith.mulf %282, %281 : vector<8x18x128xf32>
    %284 = arith.addf %280, %283 : vector<8x18x128xf32>
    %285 = vector.extract_strided_slice %261 {offsets = [6, 0, 0], sizes = [8, 18, 128], strides = [1, 1, 1]} : vector<18x18x128xf32> to vector<8x18x128xf32>
    %cst_76 = arith.constant 0.213005543 : f32
    %286 = vector.broadcast %cst_76 : f32 to vector<8x18x128xf32>
    %287 = arith.mulf %286, %285 : vector<8x18x128xf32>
    %288 = arith.addf %284, %287 : vector<8x18x128xf32>
    %289 = vector.extract_strided_slice %261 {offsets = [7, 0, 0], sizes = [8, 18, 128], strides = [1, 1, 1]} : vector<18x18x128xf32> to vector<8x18x128xf32>
    %cst_77 = arith.constant 0.109360687 : f32
    %290 = vector.broadcast %cst_77 : f32 to vector<8x18x128xf32>
    %291 = arith.mulf %290, %289 : vector<8x18x128xf32>
    %292 = arith.addf %288, %291 : vector<8x18x128xf32>
    %293 = vector.extract_strided_slice %261 {offsets = [8, 0, 0], sizes = [8, 18, 128], strides = [1, 1, 1]} : vector<18x18x128xf32> to vector<8x18x128xf32>
    %cst_78 = arith.constant 0.0360007733 : f32
    %294 = vector.broadcast %cst_78 : f32 to vector<8x18x128xf32>
    %295 = arith.mulf %294, %293 : vector<8x18x128xf32>
    %296 = arith.addf %292, %295 : vector<8x18x128xf32>
    %297 = vector.extract_strided_slice %261 {offsets = [9, 0, 0], sizes = [8, 18, 128], strides = [1, 1, 1]} : vector<18x18x128xf32> to vector<8x18x128xf32>
    %cst_79 = arith.constant 0.00759875821 : f32
    %298 = vector.broadcast %cst_79 : f32 to vector<8x18x128xf32>
    %299 = arith.mulf %298, %297 : vector<8x18x128xf32>
    %300 = arith.addf %296, %299 : vector<8x18x128xf32>
    %301 = vector.extract_strided_slice %261 {offsets = [10, 0, 0], sizes = [8, 18, 128], strides = [1, 1, 1]} : vector<18x18x128xf32> to vector<8x18x128xf32>
    %cst_80 = arith.constant 0.00102838012 : f32
    %302 = vector.broadcast %cst_80 : f32 to vector<8x18x128xf32>
    %303 = arith.mulf %302, %301 : vector<8x18x128xf32>
    %304 = arith.addf %300, %303 : vector<8x18x128xf32>
    %305 = vector.extract_strided_slice %304 {offsets = [0, 0, 0], sizes = [8, 8, 128], strides = [1, 1, 1]} : vector<8x18x128xf32> to vector<8x8x128xf32>
    %cst_81 = arith.constant 0.00102838012 : f32
    %306 = vector.broadcast %cst_81 : f32 to vector<8x8x128xf32>
    %307 = arith.mulf %306, %305 : vector<8x8x128xf32>
    %308 = vector.extract_strided_slice %304 {offsets = [0, 1, 0], sizes = [8, 8, 128], strides = [1, 1, 1]} : vector<8x18x128xf32> to vector<8x8x128xf32>
    %cst_82 = arith.constant 0.00759875821 : f32
    %309 = vector.broadcast %cst_82 : f32 to vector<8x8x128xf32>
    %310 = arith.mulf %309, %308 : vector<8x8x128xf32>
    %311 = arith.addf %307, %310 : vector<8x8x128xf32>
    %312 = vector.extract_strided_slice %304 {offsets = [0, 2, 0], sizes = [8, 8, 128], strides = [1, 1, 1]} : vector<8x18x128xf32> to vector<8x8x128xf32>
    %cst_83 = arith.constant 0.0360007733 : f32
    %313 = vector.broadcast %cst_83 : f32 to vector<8x8x128xf32>
    %314 = arith.mulf %313, %312 : vector<8x8x128xf32>
    %315 = arith.addf %311, %314 : vector<8x8x128xf32>
    %316 = vector.extract_strided_slice %304 {offsets = [0, 3, 0], sizes = [8, 8, 128], strides = [1, 1, 1]} : vector<8x18x128xf32> to vector<8x8x128xf32>
    %cst_84 = arith.constant 0.109360687 : f32
    %317 = vector.broadcast %cst_84 : f32 to vector<8x8x128xf32>
    %318 = arith.mulf %317, %316 : vector<8x8x128xf32>
    %319 = arith.addf %315, %318 : vector<8x8x128xf32>
    %320 = vector.extract_strided_slice %304 {offsets = [0, 4, 0], sizes = [8, 8, 128], strides = [1, 1, 1]} : vector<8x18x128xf32> to vector<8x8x128xf32>
    %cst_85 = arith.constant 0.213005543 : f32
    %321 = vector.broadcast %cst_85 : f32 to vector<8x8x128xf32>
    %322 = arith.mulf %321, %320 : vector<8x8x128xf32>
    %323 = arith.addf %319, %322 : vector<8x8x128xf32>
    %324 = vector.extract_strided_slice %304 {offsets = [0, 5, 0], sizes = [8, 8, 128], strides = [1, 1, 1]} : vector<8x18x128xf32> to vector<8x8x128xf32>
    %cst_86 = arith.constant 0.266011715 : f32
    %325 = vector.broadcast %cst_86 : f32 to vector<8x8x128xf32>
    %326 = arith.mulf %325, %324 : vector<8x8x128xf32>
    %327 = arith.addf %323, %326 : vector<8x8x128xf32>
    %328 = vector.extract_strided_slice %304 {offsets = [0, 6, 0], sizes = [8, 8, 128], strides = [1, 1, 1]} : vector<8x18x128xf32> to vector<8x8x128xf32>
    %cst_87 = arith.constant 0.213005543 : f32
    %329 = vector.broadcast %cst_87 : f32 to vector<8x8x128xf32>
    %330 = arith.mulf %329, %328 : vector<8x8x128xf32>
    %331 = arith.addf %327, %330 : vector<8x8x128xf32>
    %332 = vector.extract_strided_slice %304 {offsets = [0, 7, 0], sizes = [8, 8, 128], strides = [1, 1, 1]} : vector<8x18x128xf32> to vector<8x8x128xf32>
    %cst_88 = arith.constant 0.109360687 : f32
    %333 = vector.broadcast %cst_88 : f32 to vector<8x8x128xf32>
    %334 = arith.mulf %333, %332 : vector<8x8x128xf32>
    %335 = arith.addf %331, %334 : vector<8x8x128xf32>
    %336 = vector.extract_strided_slice %304 {offsets = [0, 8, 0], sizes = [8, 8, 128], strides = [1, 1, 1]} : vector<8x18x128xf32> to vector<8x8x128xf32>
    %cst_89 = arith.constant 0.0360007733 : f32
    %337 = vector.broadcast %cst_89 : f32 to vector<8x8x128xf32>
    %338 = arith.mulf %337, %336 : vector<8x8x128xf32>
    %339 = arith.addf %335, %338 : vector<8x8x128xf32>
    %340 = vector.extract_strided_slice %304 {offsets = [0, 9, 0], sizes = [8, 8, 128], strides = [1, 1, 1]} : vector<8x18x128xf32> to vector<8x8x128xf32>
    %cst_90 = arith.constant 0.00759875821 : f32
    %341 = vector.broadcast %cst_90 : f32 to vector<8x8x128xf32>
    %342 = arith.mulf %341, %340 : vector<8x8x128xf32>
    %343 = arith.addf %339, %342 : vector<8x8x128xf32>
    %344 = vector.extract_strided_slice %304 {offsets = [0, 10, 0], sizes = [8, 8, 128], strides = [1, 1, 1]} : vector<8x18x128xf32> to vector<8x8x128xf32>
    %cst_91 = arith.constant 0.00102838012 : f32
    %345 = vector.broadcast %cst_91 : f32 to vector<8x8x128xf32>
    %346 = arith.mulf %345, %344 : vector<8x8x128xf32>
    %347 = arith.addf %343, %346 : vector<8x8x128xf32>
    %348 = arith.mulf %0, %1 : vector<18x18x128xf32>
    %349 = vector.extract_strided_slice %348 {offsets = [0, 0, 0], sizes = [8, 18, 128], strides = [1, 1, 1]} : vector<18x18x128xf32> to vector<8x18x128xf32>
    %cst_92 = arith.constant 0.00102838012 : f32
    %350 = vector.broadcast %cst_92 : f32 to vector<8x18x128xf32>
    %351 = arith.mulf %350, %349 : vector<8x18x128xf32>
    %352 = vector.extract_strided_slice %348 {offsets = [1, 0, 0], sizes = [8, 18, 128], strides = [1, 1, 1]} : vector<18x18x128xf32> to vector<8x18x128xf32>
    %cst_93 = arith.constant 0.00759875821 : f32
    %353 = vector.broadcast %cst_93 : f32 to vector<8x18x128xf32>
    %354 = arith.mulf %353, %352 : vector<8x18x128xf32>
    %355 = arith.addf %351, %354 : vector<8x18x128xf32>
    %356 = vector.extract_strided_slice %348 {offsets = [2, 0, 0], sizes = [8, 18, 128], strides = [1, 1, 1]} : vector<18x18x128xf32> to vector<8x18x128xf32>
    %cst_94 = arith.constant 0.0360007733 : f32
    %357 = vector.broadcast %cst_94 : f32 to vector<8x18x128xf32>
    %358 = arith.mulf %357, %356 : vector<8x18x128xf32>
    %359 = arith.addf %355, %358 : vector<8x18x128xf32>
    %360 = vector.extract_strided_slice %348 {offsets = [3, 0, 0], sizes = [8, 18, 128], strides = [1, 1, 1]} : vector<18x18x128xf32> to vector<8x18x128xf32>
    %cst_95 = arith.constant 0.109360687 : f32
    %361 = vector.broadcast %cst_95 : f32 to vector<8x18x128xf32>
    %362 = arith.mulf %361, %360 : vector<8x18x128xf32>
    %363 = arith.addf %359, %362 : vector<8x18x128xf32>
    %364 = vector.extract_strided_slice %348 {offsets = [4, 0, 0], sizes = [8, 18, 128], strides = [1, 1, 1]} : vector<18x18x128xf32> to vector<8x18x128xf32>
    %cst_96 = arith.constant 0.213005543 : f32
    %365 = vector.broadcast %cst_96 : f32 to vector<8x18x128xf32>
    %366 = arith.mulf %365, %364 : vector<8x18x128xf32>
    %367 = arith.addf %363, %366 : vector<8x18x128xf32>
    %368 = vector.extract_strided_slice %348 {offsets = [5, 0, 0], sizes = [8, 18, 128], strides = [1, 1, 1]} : vector<18x18x128xf32> to vector<8x18x128xf32>
    %cst_97 = arith.constant 0.266011715 : f32
    %369 = vector.broadcast %cst_97 : f32 to vector<8x18x128xf32>
    %370 = arith.mulf %369, %368 : vector<8x18x128xf32>
    %371 = arith.addf %367, %370 : vector<8x18x128xf32>
    %372 = vector.extract_strided_slice %348 {offsets = [6, 0, 0], sizes = [8, 18, 128], strides = [1, 1, 1]} : vector<18x18x128xf32> to vector<8x18x128xf32>
    %cst_98 = arith.constant 0.213005543 : f32
    %373 = vector.broadcast %cst_98 : f32 to vector<8x18x128xf32>
    %374 = arith.mulf %373, %372 : vector<8x18x128xf32>
    %375 = arith.addf %371, %374 : vector<8x18x128xf32>
    %376 = vector.extract_strided_slice %348 {offsets = [7, 0, 0], sizes = [8, 18, 128], strides = [1, 1, 1]} : vector<18x18x128xf32> to vector<8x18x128xf32>
    %cst_99 = arith.constant 0.109360687 : f32
    %377 = vector.broadcast %cst_99 : f32 to vector<8x18x128xf32>
    %378 = arith.mulf %377, %376 : vector<8x18x128xf32>
    %379 = arith.addf %375, %378 : vector<8x18x128xf32>
    %380 = vector.extract_strided_slice %348 {offsets = [8, 0, 0], sizes = [8, 18, 128], strides = [1, 1, 1]} : vector<18x18x128xf32> to vector<8x18x128xf32>
    %cst_100 = arith.constant 0.0360007733 : f32
    %381 = vector.broadcast %cst_100 : f32 to vector<8x18x128xf32>
    %382 = arith.mulf %381, %380 : vector<8x18x128xf32>
    %383 = arith.addf %379, %382 : vector<8x18x128xf32>
    %384 = vector.extract_strided_slice %348 {offsets = [9, 0, 0], sizes = [8, 18, 128], strides = [1, 1, 1]} : vector<18x18x128xf32> to vector<8x18x128xf32>
    %cst_101 = arith.constant 0.00759875821 : f32
    %385 = vector.broadcast %cst_101 : f32 to vector<8x18x128xf32>
    %386 = arith.mulf %385, %384 : vector<8x18x128xf32>
    %387 = arith.addf %383, %386 : vector<8x18x128xf32>
    %388 = vector.extract_strided_slice %348 {offsets = [10, 0, 0], sizes = [8, 18, 128], strides = [1, 1, 1]} : vector<18x18x128xf32> to vector<8x18x128xf32>
    %cst_102 = arith.constant 0.00102838012 : f32
    %389 = vector.broadcast %cst_102 : f32 to vector<8x18x128xf32>
    %390 = arith.mulf %389, %388 : vector<8x18x128xf32>
    %391 = arith.addf %387, %390 : vector<8x18x128xf32>
    %392 = vector.extract_strided_slice %391 {offsets = [0, 0, 0], sizes = [8, 8, 128], strides = [1, 1, 1]} : vector<8x18x128xf32> to vector<8x8x128xf32>
    %cst_103 = arith.constant 0.00102838012 : f32
    %393 = vector.broadcast %cst_103 : f32 to vector<8x8x128xf32>
    %394 = arith.mulf %393, %392 : vector<8x8x128xf32>
    %395 = vector.extract_strided_slice %391 {offsets = [0, 1, 0], sizes = [8, 8, 128], strides = [1, 1, 1]} : vector<8x18x128xf32> to vector<8x8x128xf32>
    %cst_104 = arith.constant 0.00759875821 : f32
    %396 = vector.broadcast %cst_104 : f32 to vector<8x8x128xf32>
    %397 = arith.mulf %396, %395 : vector<8x8x128xf32>
    %398 = arith.addf %394, %397 : vector<8x8x128xf32>
    %399 = vector.extract_strided_slice %391 {offsets = [0, 2, 0], sizes = [8, 8, 128], strides = [1, 1, 1]} : vector<8x18x128xf32> to vector<8x8x128xf32>
    %cst_105 = arith.constant 0.0360007733 : f32
    %400 = vector.broadcast %cst_105 : f32 to vector<8x8x128xf32>
    %401 = arith.mulf %400, %399 : vector<8x8x128xf32>
    %402 = arith.addf %398, %401 : vector<8x8x128xf32>
    %403 = vector.extract_strided_slice %391 {offsets = [0, 3, 0], sizes = [8, 8, 128], strides = [1, 1, 1]} : vector<8x18x128xf32> to vector<8x8x128xf32>
    %cst_106 = arith.constant 0.109360687 : f32
    %404 = vector.broadcast %cst_106 : f32 to vector<8x8x128xf32>
    %405 = arith.mulf %404, %403 : vector<8x8x128xf32>
    %406 = arith.addf %402, %405 : vector<8x8x128xf32>
    %407 = vector.extract_strided_slice %391 {offsets = [0, 4, 0], sizes = [8, 8, 128], strides = [1, 1, 1]} : vector<8x18x128xf32> to vector<8x8x128xf32>
    %cst_107 = arith.constant 0.213005543 : f32
    %408 = vector.broadcast %cst_107 : f32 to vector<8x8x128xf32>
    %409 = arith.mulf %408, %407 : vector<8x8x128xf32>
    %410 = arith.addf %406, %409 : vector<8x8x128xf32>
    %411 = vector.extract_strided_slice %391 {offsets = [0, 5, 0], sizes = [8, 8, 128], strides = [1, 1, 1]} : vector<8x18x128xf32> to vector<8x8x128xf32>
    %cst_108 = arith.constant 0.266011715 : f32
    %412 = vector.broadcast %cst_108 : f32 to vector<8x8x128xf32>
    %413 = arith.mulf %412, %411 : vector<8x8x128xf32>
    %414 = arith.addf %410, %413 : vector<8x8x128xf32>
    %415 = vector.extract_strided_slice %391 {offsets = [0, 6, 0], sizes = [8, 8, 128], strides = [1, 1, 1]} : vector<8x18x128xf32> to vector<8x8x128xf32>
    %cst_109 = arith.constant 0.213005543 : f32
    %416 = vector.broadcast %cst_109 : f32 to vector<8x8x128xf32>
    %417 = arith.mulf %416, %415 : vector<8x8x128xf32>
    %418 = arith.addf %414, %417 : vector<8x8x128xf32>
    %419 = vector.extract_strided_slice %391 {offsets = [0, 7, 0], sizes = [8, 8, 128], strides = [1, 1, 1]} : vector<8x18x128xf32> to vector<8x8x128xf32>
    %cst_110 = arith.constant 0.109360687 : f32
    %420 = vector.broadcast %cst_110 : f32 to vector<8x8x128xf32>
    %421 = arith.mulf %420, %419 : vector<8x8x128xf32>
    %422 = arith.addf %418, %421 : vector<8x8x128xf32>
    %423 = vector.extract_strided_slice %391 {offsets = [0, 8, 0], sizes = [8, 8, 128], strides = [1, 1, 1]} : vector<8x18x128xf32> to vector<8x8x128xf32>
    %cst_111 = arith.constant 0.0360007733 : f32
    %424 = vector.broadcast %cst_111 : f32 to vector<8x8x128xf32>
    %425 = arith.mulf %424, %423 : vector<8x8x128xf32>
    %426 = arith.addf %422, %425 : vector<8x8x128xf32>
    %427 = vector.extract_strided_slice %391 {offsets = [0, 9, 0], sizes = [8, 8, 128], strides = [1, 1, 1]} : vector<8x18x128xf32> to vector<8x8x128xf32>
    %cst_112 = arith.constant 0.00759875821 : f32
    %428 = vector.broadcast %cst_112 : f32 to vector<8x8x128xf32>
    %429 = arith.mulf %428, %427 : vector<8x8x128xf32>
    %430 = arith.addf %426, %429 : vector<8x8x128xf32>
    %431 = vector.extract_strided_slice %391 {offsets = [0, 10, 0], sizes = [8, 8, 128], strides = [1, 1, 1]} : vector<8x18x128xf32> to vector<8x8x128xf32>
    %cst_113 = arith.constant 0.00102838012 : f32
    %432 = vector.broadcast %cst_113 : f32 to vector<8x8x128xf32>
    %433 = arith.mulf %432, %431 : vector<8x8x128xf32>
    %434 = arith.addf %430, %433 : vector<8x8x128xf32>
    %435 = arith.mulf %87, %87 : vector<8x8x128xf32>
    %436 = arith.mulf %173, %173 : vector<8x8x128xf32>
    %437 = arith.mulf %87, %173 : vector<8x8x128xf32>
    %438 = arith.subf %260, %435 : vector<8x8x128xf32>
    %439 = arith.subf %347, %436 : vector<8x8x128xf32>
    %440 = arith.subf %434, %437 : vector<8x8x128xf32>
    %cst_114 = arith.constant 2.000000e+00 : f32
    %441 = vector.broadcast %cst_114 : f32 to vector<8x8x128xf32>
    %442 = arith.mulf %441, %437 : vector<8x8x128xf32>
    %cst_115 = arith.constant 9.99999974E-5 : f32
    %443 = vector.broadcast %cst_115 : f32 to vector<8x8x128xf32>
    %444 = arith.addf %442, %443 : vector<8x8x128xf32>
    %cst_116 = arith.constant 2.000000e+00 : f32
    %445 = vector.broadcast %cst_116 : f32 to vector<8x8x128xf32>
    %446 = arith.mulf %445, %440 : vector<8x8x128xf32>
    %cst_117 = arith.constant 8.99999984E-4 : f32
    %447 = vector.broadcast %cst_117 : f32 to vector<8x8x128xf32>
    %448 = arith.addf %446, %447 : vector<8x8x128xf32>
    %449 = arith.mulf %444, %448 : vector<8x8x128xf32>
    %450 = arith.addf %435, %436 : vector<8x8x128xf32>
    %cst_118 = arith.constant 9.99999974E-5 : f32
    %451 = vector.broadcast %cst_118 : f32 to vector<8x8x128xf32>
    %452 = arith.addf %450, %451 : vector<8x8x128xf32>
    %453 = arith.addf %438, %439 : vector<8x8x128xf32>
    %cst_119 = arith.constant 8.99999984E-4 : f32
    %454 = vector.broadcast %cst_119 : f32 to vector<8x8x128xf32>
    %455 = arith.addf %453, %454 : vector<8x8x128xf32>
    %456 = arith.mulf %452, %455 : vector<8x8x128xf32>
    %457 = arith.divf %449, %456 : vector<8x8x128xf32>
    %cst_120 = arith.constant dense<0.000000e+00> : vector<8x128xf32>
    %458 = vector.multi_reduction <add>, %457, %cst_120 [0] : vector<8x8x128xf32> to vector<8x128xf32>
    %cst_121 = arith.constant dense<0.000000e+00> : vector<128xf32>
    %459 = vector.multi_reduction <add>, %458, %cst_121 [0] : vector<8x128xf32> to vector<128xf32>
    %460 = vector.shape_cast %459 : vector<128xf32> to vector<1x128xf32>
    %c0_122 = arith.constant 0 : index
    %c0_123 = arith.constant 0 : index
    %461 = vector.load %arg3[%c0_122, %c0_123] : memref<1x128xf32, #tpu.memory_space<vmem>>, vector<1x128xf32>
    tpu.vector_store %arg3[%c0_122, %c0_123], %460 {strides = array<i32>} : memref<1x128xf32, #tpu.memory_space<vmem>>, vector<1x128xf32>,
    return
  }
  func.func @transform_0(%arg0: i32) -> (i32, i32, i32) {
    %c0_i32 = arith.constant 0 : i32
    %c0_i32_0 = arith.constant 0 : i32
    %c0_i32_1 = arith.constant 0 : i32
    return %c0_i32, %c0_i32_0, %arg0 : i32, i32, i32
  }
  func.func @transform_1(%arg0: i32) -> (i32, i32, i32) {
    %c0_i32 = arith.constant 0 : i32
    %c0_i32_0 = arith.constant 0 : i32
    %c0_i32_1 = arith.constant 0 : i32
    return %c0_i32, %c0_i32_0, %arg0 : i32, i32, i32
  }
  func.func @transform_2(%arg0: i32) -> (i32, i32) {
    %c0_i32 = arith.constant 0 : i32
    %c0_i32_0 = arith.constant 0 : i32
    return %c0_i32, %arg0 : i32, i32
  }
}

</mosaic_0001>

<llo_original>
// kernel: squeeze.25
$region0: #{squeeze.25}
  %s0 = inlined_call_operand.vmem [shape: f32[64], index: 0, kind: input, shape index: {}]
  %s1 = inlined_call_operand.vmem [shape: f32[8,8], index: 1, kind: output, shape index: {}]
  $region1: #{squeeze.25} parent=0
    #allocation0 [shape = 'u8[4096]{0}', space=vmem, size = 0x1000, scoped, tag = 'scoped mem for input reshape']
    %s3 = sshllo.u32 0, 1
    %v4 = vld [vmem:[%s0] sm:%s3]
    %5 = vst [vmem:[#allocation0] sm:%s3] %v4
    %v6 = vld [vmem:[#allocation0] sm:$0x1]
    %vm7 = vcmask 64512
    %8 = vst.msk [vmem:[%s1] sm:$0x1] %vm7, %v6
    %v9 = vld [vmem:[#allocation0] sm:$0x1]
    %10 = vrot.lane.b32.xlu0 %v9, 120
    %v11 = vpop.permute.xlu0 %10
    %vm12 = vcmask 64512
    %s13 = scalar_lea.vmem %s1, 1
    %14 = vst.msk [vmem:[%s13] sm:$0x1] %vm12, %v11
    %v15 = vld [vmem:[#allocation0] sm:$0x1]
    %16 = vrot.lane.b32.xlu0 %v15, 112
    %v17 = vpop.permute.xlu0 %16
    %vm18 = vcmask 64512
    %s19 = scalar_lea.vmem %s1, 2
    %20 = vst.msk [vmem:[%s19] sm:$0x1] %vm18, %v17
    %v21 = vld [vmem:[#allocation0] sm:$0x1]
    %22 = vrot.lane.b32.xlu0 %v21, 104
    %v23 = vpop.permute.xlu0 %22
    %vm24 = vcmask 64512
    %s25 = scalar_lea.vmem %s1, 3
    %26 = vst.msk [vmem:[%s25] sm:$0x1] %vm24, %v23
    %v27 = vld [vmem:[#allocation0] sm:$0x1]
    %28 = vrot.lane.b32.xlu0 %v27, 96
    %v29 = vpop.permute.xlu0 %28
    %vm30 = vcmask 64512
    %s31 = scalar_lea.vmem %s1, 4
    %32 = vst.msk [vmem:[%s31] sm:$0x1] %vm30, %v29
    %v33 = vld [vmem:[#allocation0] sm:$0x1]
    %34 = vrot.lane.b32.xlu0 %v33, 88
    %v35 = vpop.permute.xlu0 %34
    %vm36 = vcmask 64512
    %s37 = scalar_lea.vmem %s1, 5
    %38 = vst.msk [vmem:[%s37] sm:$0x1] %vm36, %v35
    %v39 = vld [vmem:[#allocation0] sm:$0x1]
    %40 = vrot.lane.b32.xlu0 %v39, 80
    %v41 = vpop.permute.xlu0 %40
    %vm42 = vcmask 64512
    %s43 = scalar_lea.vmem %s1, 6
    %44 = vst.msk [vmem:[%s43] sm:$0x1] %vm42, %v41
    %v45 = vld [vmem:[#allocation0] sm:$0x1]
    %46 = vrot.lane.b32.xlu0 %v45, 72
    %v47 = vpop.permute.xlu0 %46
    %vm48 = vcmask 64512
    %s49 = scalar_lea.vmem %s1, 7
    %50 = vst.msk [vmem:[%s49] sm:$0x1] %vm48, %v47

// kernel: l_ssim.1
$region0: #{l_ssim.1}
  #allocation0 [shape = 'u32[]', space=smem, size = 0x4, offset = 0x4, fixed_abs, tag = 'smem constant byte address 0x4 - core index']
  #allocation1 [shape = 'u32[144,128]{1,0:T(1,128)}', space=vmem, size = 0x12000, scoped, tag = 'internal scratch']
  %s0 = inlined_call_operand.vmem [shape: f32[18,18,128], index: 0, kind: input, shape index: {}]
  %s1 = inlined_call_operand.vmem [shape: f32[18,18,128], index: 1, kind: input, shape index: {}]
  %s2 = inlined_call_operand.vmem [shape: f32[1,128], index: 2, kind: output, shape index: {}]
  %s3 = sld [smem:[#allocation0]]
  $region18: #{l_ssim.1} parent=0
    _
  %s5 = ssub.s32 1, %s3
  %s6 = scalar_select 0, %s5, %s3
  // Predicated region
  $region2: #{l_ssim.1} parent=0 // pred_check
    _
  $region3: #{l_ssim.1} parent=0 // pred_check_branch
    %8 = sbr.rel (0) target = $region5
  $region4: #{l_ssim.1} parent=0 // pred_region
    _
  $region5: #{l_ssim.1} parent=0 // pred_fallthru
    _
  // Predicated region
  $region6: #{l_ssim.1} parent=0 // pred_check
    _
  $region7: #{l_ssim.1} parent=0 // pred_check_branch
    %10 = sbr.rel (0) target = $region9
  $region8: #{l_ssim.1} parent=0 // pred_region
    _
  $region9: #{l_ssim.1} parent=0 // pred_fallthru
    _
  %v11 = vld [vmem:[%s0] sm:$0xff]
  %v12 = vld [vmem:[%s0 + $0x8] sm:$0xff]
  %v13 = vld [vmem:[%s0 + $0x10] sm:$0x3]
  %v14 = vld [vmem:[%s0 + $0x18] sm:$0xff]
  %v15 = vld [vmem:[%s0 + $0x20] sm:$0xff]
  %v16 = vld [vmem:[%s0 + $0x28] sm:$0x3]
  %v17 = vld [vmem:[%s0 + $0x30] sm:$0xff]
  %v18 = vld [vmem:[%s0 + $0x38] sm:$0xff]
  %v19 = vld [vmem:[%s0 + $0x40] sm:$0x3]
  %v20 = vld [vmem:[%s0 + $0x48] sm:$0xff]
  %v21 = vld [vmem:[%s0 + $0x50] sm:$0xff]
  %v22 = vld [vmem:[%s0 + $0x58] sm:$0x3]
  %v23 = vld [vmem:[%s0 + $0x60] sm:$0xff]
  %v24 = vld [vmem:[%s0 + $0x68] sm:$0xff]
  %v25 = vld [vmem:[%s0 + $0x70] sm:$0x3]
  %v26 = vld [vmem:[%s0 + $0x78] sm:$0xff]
  %v27 = vld [vmem:[%s0 + $0x80] sm:$0xff]
  %v28 = vld [vmem:[%s0 + $0x88] sm:$0x3]
  %v29 = vld [vmem:[%s0 + $0x90] sm:$0xff]
  %v30 = vld [vmem:[%s0 + $0x98] sm:$0xff]
  %v31 = vld [vmem:[%s0 + $0xa0] sm:$0x3]
  %v32 = vld [vmem:[%s0 + $0xa8] sm:$0xff]
  %v33 = vld [vmem:[%s0 + $0xb0] sm:$0xff]
  %v34 = vld [vmem:[%s0 + $0xb8] sm:$0x3]
  %v35 = vld [vmem:[%s0 + $0xc0] sm:$0xff]
  %v36 = vld [vmem:[%s0 + $0xc8] sm:$0xff]
  %v37 = vld [vmem:[%s0 + $0xd0] sm:$0x3]
  %v38 = vld [vmem:[%s0 + $0xd8] sm:$0xff]
  %v39 = vld [vmem:[%s0 + $0xe0] sm:$0xff]
  %v40 = vld [vmem:[%s0 + $0xe8] sm:$0x3]
  %v41 = vld [vmem:[%s0 + $0xf0] sm:$0xff]
  %v42 = vld [vmem:[%s0 + $0xf8] sm:$0xff]
  %v43 = vld [vmem:[%s0 + $0x100] sm:$0x3]
  %v44 = vld [vmem:[%s0 + $0x108] sm:$0xff]
  %v45 = vld [vmem:[%s0 + $0x110] sm:$0xff]
  %v46 = vld [vmem:[%s0 + $0x118] sm:$0x3]
  %v47 = vld [vmem:[%s0 + $0x120] sm:$0xff]
  %v48 = vld [vmem:[%s0 + $0x128] sm:$0xff]
  %v49 = vld [vmem:[%s0 + $0x130] sm:$0x3]
  %v50 = vld [vmem:[%s0 + $0x138] sm:$0xff]
  %v51 = vld [vmem:[%s0 + $0x140] sm:$0xff]
  %v52 = vld [vmem:[%s0 + $0x148] sm:$0x3]
  %v53 = vld [vmem:[%s0 + $0x150] sm:$0xff]
  %v54 = vld [vmem:[%s0 + $0x158] sm:$0xff]
  %v55 = vld [vmem:[%s0 + $0x160] sm:$0x3]
  %v56 = vld [vmem:[%s0 + $0x168] sm:$0xff]
  %v57 = vld [vmem:[%s0 + $0x170] sm:$0xff]
  %v58 = vld [vmem:[%s0 + $0x178] sm:$0x3]
  %v59 = vld [vmem:[%s0 + $0x180] sm:$0xff]
  %v60 = vld [vmem:[%s0 + $0x188] sm:$0xff]
  %v61 = vld [vmem:[%s0 + $0x190] sm:$0x3]
  %v62 = vld [vmem:[%s0 + $0x198] sm:$0xff]
  %v63 = vld [vmem:[%s0 + $0x1a0] sm:$0xff]
  %v64 = vld [vmem:[%s0 + $0x1a8] sm:$0x3]
  %v65 = vld [vmem:[%s1] sm:$0xff]
  %v66 = vld [vmem:[%s1 + $0x8] sm:$0xff]
  %v67 = vld [vmem:[%s1 + $0x10] sm:$0x3]
  %v68 = vld [vmem:[%s1 + $0x18] sm:$0xff]
  %v69 = vld [vmem:[%s1 + $0x20] sm:$0xff]
  %v70 = vld [vmem:[%s1 + $0x28] sm:$0x3]
  %v71 = vld [vmem:[%s1 + $0x30] sm:$0xff]
  %v72 = vld [vmem:[%s1 + $0x38] sm:$0xff]
  %v73 = vld [vmem:[%s1 + $0x40] sm:$0x3]
  %v74 = vld [vmem:[%s1 + $0x48] sm:$0xff]
  %v75 = vld [vmem:[%s1 + $0x50] sm:$0xff]
  %v76 = vld [vmem:[%s1 + $0x58] sm:$0x3]
  %v77 = vld [vmem:[%s1 + $0x60] sm:$0xff]
  %v78 = vld [vmem:[%s1 + $0x68] sm:$0xff]
  %v79 = vld [vmem:[%s1 + $0x70] sm:$0x3]
  %v80 = vld [vmem:[%s1 + $0x78] sm:$0xff]
  %v81 = vld [vmem:[%s1 + $0x80] sm:$0xff]
  %v82 = vld [vmem:[%s1 + $0x88] sm:$0x3]
  %v83 = vld [vmem:[%s1 + $0x90] sm:$0xff]
  %v84 = vld [vmem:[%s1 + $0x98] sm:$0xff]
  %v85 = vld [vmem:[%s1 + $0xa0] sm:$0x3]
  %v86 = vld [vmem:[%s1 + $0xa8] sm:$0xff]
  %v87 = vld [vmem:[%s1 + $0xb0] sm:$0xff]
  %v88 = vld [vmem:[%s1 + $0xb8] sm:$0x3]
  %v89 = vld [vmem:[%s1 + $0xc0] sm:$0xff]
  %v90 = vld [vmem:[%s1 + $0xc8] sm:$0xff]
  %v91 = vld [vmem:[%s1 + $0xd0] sm:$0x3]
  %v92 = vld [vmem:[%s1 + $0xd8] sm:$0xff]
  %v93 = vld [vmem:[%s1 + $0xe0] sm:$0xff]
  %v94 = vld [vmem:[%s1 + $0xe8] sm:$0x3]
  %v95 = vld [vmem:[%s1 + $0xf0] sm:$0xff]
  %v96 = vld [vmem:[%s1 + $0xf8] sm:$0xff]
  %v97 = vld [vmem:[%s1 + $0x100] sm:$0x3]
  %v98 = vld [vmem:[%s1 + $0x108] sm:$0xff]
  %v99 = vld [vmem:[%s1 + $0x110] sm:$0xff]
  %v100 = vld [vmem:[%s1 + $0x118] sm:$0x3]
  %v101 = vld [vmem:[%s1 + $0x120] sm:$0xff]
  %v102 = vld [vmem:[%s1 + $0x128] sm:$0xff]
  %v103 = vld [vmem:[%s1 + $0x130] sm:$0x3]
  %v104 = vld [vmem:[%s1 + $0x138] sm:$0xff]
  %v105 = vld [vmem:[%s1 + $0x140] sm:$0xff]
  %v106 = vld [vmem:[%s1 + $0x148] sm:$0x3]
  %v107 = vld [vmem:[%s1 + $0x150] sm:$0xff]
  %v108 = vld [vmem:[%s1 + $0x158] sm:$0xff]
  %v109 = vld [vmem:[%s1 + $0x160] sm:$0x3]
  %v110 = vld [vmem:[%s1 + $0x168] sm:$0xff]
  %v111 = vld [vmem:[%s1 + $0x170] sm:$0xff]
  %v112 = vld [vmem:[%s1 + $0x178] sm:$0x3]
  %v113 = vld [vmem:[%s1 + $0x180] sm:$0xff]
  %v114 = vld [vmem:[%s1 + $0x188] sm:$0xff]
  %v115 = vld [vmem:[%s1 + $0x190] sm:$0x3]
  %v116 = vld [vmem:[%s1 + $0x198] sm:$0xff]
  %v117 = vld [vmem:[%s1 + $0x1a0] sm:$0xff]
  %v118 = vld [vmem:[%s1 + $0x1a8] sm:$0x3]
  %v119 = vmul.f32 %v11, 0.0010283801
  %v120 = vmul.f32 %v12, 0.0010283801
  %v121 = vmul.f32 %v13, 0.0010283801
  %v122 = vmul.f32 %v14, 0.0010283801
  %v123 = vmul.f32 %v15, 0.0010283801
  %v124 = vmul.f32 %v16, 0.0010283801
  %v125 = vmul.f32 %v17, 0.0010283801
  %v126 = vmul.f32 %v18, 0.0010283801
  %v127 = vmul.f32 %v19, 0.0010283801
  %v128 = vmul.f32 %v20, 0.0010283801
  %v129 = vmul.f32 %v21, 0.0010283801
  %v130 = vmul.f32 %v22, 0.0010283801
  %v131 = vmul.f32 %v23, 0.0010283801
  %v132 = vmul.f32 %v24, 0.0010283801
  %v133 = vmul.f32 %v25, 0.0010283801
  %v134 = vmul.f32 %v26, 0.0010283801
  %v135 = vmul.f32 %v27, 0.0010283801
  %v136 = vmul.f32 %v28, 0.0010283801
  %v137 = vmul.f32 %v29, 0.0010283801
  %v138 = vmul.f32 %v30, 0.0010283801
  %v139 = vmul.f32 %v31, 0.0010283801
  %v140 = vmul.f32 %v32, 0.0010283801
  %v141 = vmul.f32 %v33, 0.0010283801
  %v142 = vmul.f32 %v34, 0.0010283801
  %v143 = vmul.f32 %v14, 0.007598758
  %v144 = vmul.f32 %v15, 0.007598758
  %v145 = vmul.f32 %v16, 0.007598758
  %v146 = vmul.f32 %v17, 0.007598758
  %v147 = vmul.f32 %v18, 0.007598758
  %v148 = vmul.f32 %v19, 0.007598758
  %v149 = vmul.f32 %v20, 0.007598758
  %v150 = vmul.f32 %v21, 0.007598758
  %v151 = vmul.f32 %v22, 0.007598758
  %v152 = vmul.f32 %v23, 0.007598758
  %v153 = vmul.f32 %v24, 0.007598758
  %v154 = vmul.f32 %v25, 0.007598758
  %v155 = vmul.f32 %v26, 0.007598758
  %v156 = vmul.f32 %v27, 0.007598758
  %v157 = vmul.f32 %v28, 0.007598758
  %v158 = vmul.f32 %v29, 0.007598758
  %v159 = vmul.f32 %v30, 0.007598758
  %v160 = vmul.f32 %v31, 0.007598758
  %v161 = vmul.f32 %v32, 0.007598758
  %v162 = vmul.f32 %v33, 0.007598758
  %v163 = vmul.f32 %v34, 0.007598758
  %v164 = vmul.f32 %v35, 0.007598758
  %v165 = vmul.f32 %v36, 0.007598758
  %v166 = vmul.f32 %v37, 0.007598758
  %v167 = vadd.f32 %v119, %v143
  %v168 = vadd.f32 %v120, %v144
  %v169 = vadd.f32 %v121, %v145
  %v170 = vadd.f32 %v122, %v146
  %v171 = vadd.f32 %v123, %v147
  %v172 = vadd.f32 %v124, %v148
  %v173 = vadd.f32 %v125, %v149
  %v174 = vadd.f32 %v126, %v150
  %v175 = vadd.f32 %v127, %v151
  %v176 = vadd.f32 %v128, %v152
  %v177 = vadd.f32 %v129, %v153
  %v178 = vadd.f32 %v130, %v154
  %v179 = vadd.f32 %v131, %v155
  %v180 = vadd.f32 %v132, %v156
  %v181 = vadd.f32 %v133, %v157
  %v182 = vadd.f32 %v134, %v158
  %v183 = vadd.f32 %v135, %v159
  %v184 = vadd.f32 %v136, %v160
  %v185 = vadd.f32 %v137, %v161
  %v186 = vadd.f32 %v138, %v162
  %v187 = vadd.f32 %v139, %v163
  %v188 = vadd.f32 %v140, %v164
  %v189 = vadd.f32 %v141, %v165
  %v190 = vadd.f32 %v142, %v166
  %v191 = vmul.f32 %v17, 0.036000773
  %v192 = vmul.f32 %v18, 0.036000773
  %v193 = vmul.f32 %v19, 0.036000773
  %v194 = vmul.f32 %v20, 0.036000773
  %v195 = vmul.f32 %v21, 0.036000773
  %v196 = vmul.f32 %v22, 0.036000773
  %v197 = vmul.f32 %v23, 0.036000773
  %v198 = vmul.f32 %v24, 0.036000773
  %v199 = vmul.f32 %v25, 0.036000773
  %v200 = vmul.f32 %v26, 0.036000773
  %v201 = vmul.f32 %v27, 0.036000773
  %v202 = vmul.f32 %v28, 0.036000773
  %v203 = vmul.f32 %v29, 0.036000773
  %v204 = vmul.f32 %v30, 0.036000773
  %v205 = vmul.f32 %v31, 0.036000773
  %v206 = vmul.f32 %v32, 0.036000773
  %v207 = vmul.f32 %v33, 0.036000773
  %v208 = vmul.f32 %v34, 0.036000773
  %v209 = vmul.f32 %v35, 0.036000773
  %v210 = vmul.f32 %v36, 0.036000773
  %v211 = vmul.f32 %v37, 0.036000773
  %v212 = vmul.f32 %v38, 0.036000773
  %v213 = vmul.f32 %v39, 0.036000773
  %v214 = vmul.f32 %v40, 0.036000773
  %v215 = vadd.f32 %v167, %v191
  %v216 = vadd.f32 %v168, %v192
  %v217 = vadd.f32 %v169, %v193
  %v218 = vadd.f32 %v170, %v194
  %v219 = vadd.f32 %v171, %v195
  %v220 = vadd.f32 %v172, %v196
  %v221 = vadd.f32 %v173, %v197
  %v222 = vadd.f32 %v174, %v198
  %v223 = vadd.f32 %v175, %v199
  %v224 = vadd.f32 %v176, %v200
  %v225 = vadd.f32 %v177, %v201
  %v226 = vadd.f32 %v178, %v202
  %v227 = vadd.f32 %v179, %v203
  %v228 = vadd.f32 %v180, %v204
  %v229 = vadd.f32 %v181, %v205
  %v230 = vadd.f32 %v182, %v206
  %v231 = vadd.f32 %v183, %v207
  %v232 = vadd.f32 %v184, %v208
  %v233 = vadd.f32 %v185, %v209
  %v234 = vadd.f32 %v186, %v210
  %v235 = vadd.f32 %v187, %v211
  %v236 = vadd.f32 %v188, %v212
  %v237 = vadd.f32 %v189, %v213
  %v238 = vadd.f32 %v190, %v214
  %v239 = vmul.f32 %v20, 0.10936069
  %v240 = vmul.f32 %v21, 0.10936069
  %v241 = vmul.f32 %v22, 0.10936069
  %v242 = vmul.f32 %v23, 0.10936069
  %v243 = vmul.f32 %v24, 0.10936069
  %v244 = vmul.f32 %v25, 0.10936069
  %v245 = vmul.f32 %v26, 0.10936069
  %v246 = vmul.f32 %v27, 0.10936069
  %v247 = vmul.f32 %v28, 0.10936069
  %v248 = vmul.f32 %v29, 0.10936069
  %v249 = vmul.f32 %v30, 0.10936069
  %v250 = vmul.f32 %v31, 0.10936069
  %v251 = vmul.f32 %v32, 0.10936069
  %v252 = vmul.f32 %v33, 0.10936069
  %v253 = vmul.f32 %v34, 0.10936069
  %v254 = vmul.f32 %v35, 0.10936069
  %v255 = vmul.f32 %v36, 0.10936069
  %v256 = vmul.f32 %v37, 0.10936069
  %v257 = vmul.f32 %v38, 0.10936069
  %v258 = vmul.f32 %v39, 0.10936069
  %v259 = vmul.f32 %v40, 0.10936069
  %v260 = vmul.f32 %v41, 0.10936069
  %v261 = vmul.f32 %v42, 0.10936069
  %v262 = vmul.f32 %v43, 0.10936069
  %v263 = vadd.f32 %v215, %v239
  %v264 = vadd.f32 %v216, %v240
  %v265 = vadd.f32 %v217, %v241
  %v266 = vadd.f32 %v218, %v242
  %v267 = vadd.f32 %v219, %v243
  %v268 = vadd.f32 %v220, %v244
  %v269 = vadd.f32 %v221, %v245
  %v270 = vadd.f32 %v222, %v246
  %v271 = vadd.f32 %v223, %v247
  %v272 = vadd.f32 %v224, %v248
  %v273 = vadd.f32 %v225, %v249
  %v274 = vadd.f32 %v226, %v250
  %v275 = vadd.f32 %v227, %v251
  %v276 = vadd.f32 %v228, %v252
  %v277 = vadd.f32 %v229, %v253
  %v278 = vadd.f32 %v230, %v254
  %v279 = vadd.f32 %v231, %v255
  %v280 = vadd.f32 %v232, %v256
  %v281 = vadd.f32 %v233, %v257
  %v282 = vadd.f32 %v234, %v258
  %v283 = vadd.f32 %v235, %v259
  %v284 = vadd.f32 %v236, %v260
  %v285 = vadd.f32 %v237, %v261
  %v286 = vadd.f32 %v238, %v262
  %v287 = vmul.f32 %v23, 0.21300554
  %v288 = vmul.f32 %v24, 0.21300554
  %v289 = vmul.f32 %v25, 0.21300554
  %v290 = vmul.f32 %v26, 0.21300554
  %v291 = vmul.f32 %v27, 0.21300554
  %v292 = vmul.f32 %v28, 0.21300554
  %v293 = vmul.f32 %v29, 0.21300554
  %v294 = vmul.f32 %v30, 0.21300554
  %v295 = vmul.f32 %v31, 0.21300554
  %v296 = vmul.f32 %v32, 0.21300554
  %v297 = vmul.f32 %v33, 0.21300554
  %v298 = vmul.f32 %v34, 0.21300554
  %v299 = vmul.f32 %v35, 0.21300554
  %v300 = vmul.f32 %v36, 0.21300554
  %v301 = vmul.f32 %v37, 0.21300554
  %v302 = vmul.f32 %v38, 0.21300554
  %v303 = vmul.f32 %v39, 0.21300554
  %v304 = vmul.f32 %v40, 0.21300554
  %v305 = vmul.f32 %v41, 0.21300554
  %v306 = vmul.f32 %v42, 0.21300554
  %v307 = vmul.f32 %v43, 0.21300554
  %v308 = vmul.f32 %v44, 0.21300554
  %v309 = vmul.f32 %v45, 0.21300554
  %v310 = vmul.f32 %v46, 0.21300554
  %v311 = vadd.f32 %v263, %v287
  %v312 = vadd.f32 %v264, %v288
  %v313 = vadd.f32 %v265, %v289
  %v314 = vadd.f32 %v266, %v290
  %v315 = vadd.f32 %v267, %v291
  %v316 = vadd.f32 %v268, %v292
  %v317 = vadd.f32 %v269, %v293
  %v318 = vadd.f32 %v270, %v294
  %v319 = vadd.f32 %v271, %v295
  %v320 = vadd.f32 %v272, %v296
  %v321 = vadd.f32 %v273, %v297
  %v322 = vadd.f32 %v274, %v298
  %v323 = vadd.f32 %v275, %v299
  %v324 = vadd.f32 %v276, %v300
  %v325 = vadd.f32 %v277, %v301
  %v326 = vadd.f32 %v278, %v302
  %v327 = vadd.f32 %v279, %v303
  %v328 = vadd.f32 %v280, %v304
  %v329 = vadd.f32 %v281, %v305
  %v330 = vadd.f32 %v282, %v306
  %v331 = vadd.f32 %v283, %v307
  %v332 = vadd.f32 %v284, %v308
  %v333 = vadd.f32 %v285, %v309
  %v334 = vadd.f32 %v286, %v310
  %v335 = vmul.f32 %v26, 0.26601171
  %v336 = vmul.f32 %v27, 0.26601171
  %v337 = vmul.f32 %v28, 0.26601171
  %v338 = vmul.f32 %v29, 0.26601171
  %v339 = vmul.f32 %v30, 0.26601171
  %v340 = vmul.f32 %v31, 0.26601171
  %v341 = vmul.f32 %v32, 0.26601171
  %v342 = vmul.f32 %v33, 0.26601171
  %v343 = vmul.f32 %v34, 0.26601171
  %v344 = vmul.f32 %v35, 0.26601171
  %v345 = vmul.f32 %v36, 0.26601171
  %v346 = vmul.f32 %v37, 0.26601171
  %v347 = vmul.f32 %v38, 0.26601171
  %v348 = vmul.f32 %v39, 0.26601171
  %v349 = vmul.f32 %v40, 0.26601171
  %v350 = vmul.f32 %v41, 0.26601171
  %v351 = vmul.f32 %v42, 0.26601171
  %v352 = vmul.f32 %v43, 0.26601171
  %v353 = vmul.f32 %v44, 0.26601171
  %v354 = vmul.f32 %v45, 0.26601171
  %v355 = vmul.f32 %v46, 0.26601171
  %v356 = vmul.f32 %v47, 0.26601171
  %v357 = vmul.f32 %v48, 0.26601171
  %v358 = vmul.f32 %v49, 0.26601171
  %v359 = vadd.f32 %v311, %v335
  %v360 = vadd.f32 %v312, %v336
  %v361 = vadd.f32 %v313, %v337
  %v362 = vadd.f32 %v314, %v338
  %v363 = vadd.f32 %v315, %v339
  %v364 = vadd.f32 %v316, %v340
  %v365 = vadd.f32 %v317, %v341
  %v366 = vadd.f32 %v318, %v342
  %v367 = vadd.f32 %v319, %v343
  %v368 = vadd.f32 %v320, %v344
  %v369 = vadd.f32 %v321, %v345
  %v370 = vadd.f32 %v322, %v346
  %v371 = vadd.f32 %v323, %v347
  %v372 = vadd.f32 %v324, %v348
  %v373 = vadd.f32 %v325, %v349
  %v374 = vadd.f32 %v326, %v350
  %v375 = vadd.f32 %v327, %v351
  %v376 = vadd.f32 %v328, %v352
  %v377 = vadd.f32 %v329, %v353
  %v378 = vadd.f32 %v330, %v354
  %v379 = vadd.f32 %v331, %v355
  %v380 = vadd.f32 %v332, %v356
  %v381 = vadd.f32 %v333, %v357
  %v382 = vadd.f32 %v334, %v358
  %v383 = vmul.f32 %v47, 0.21300554
  %v384 = vmul.f32 %v48, 0.21300554
  %v385 = vmul.f32 %v49, 0.21300554
  %v386 = vmul.f32 %v50, 0.21300554
  %v387 = vmul.f32 %v51, 0.21300554
  %v388 = vmul.f32 %v52, 0.21300554
  %v389 = vadd.f32 %v359, %v293
  %v390 = vadd.f32 %v360, %v294
  %v391 = vadd.f32 %v361, %v295
  %v392 = vadd.f32 %v362, %v296
  %v393 = vadd.f32 %v363, %v297
  %v394 = vadd.f32 %v364, %v298
  %v395 = vadd.f32 %v365, %v299
  %v396 = vadd.f32 %v366, %v300
  %v397 = vadd.f32 %v367, %v301
  %v398 = vadd.f32 %v368, %v302
  %v399 = vadd.f32 %v369, %v303
  %v400 = vadd.f32 %v370, %v304
  %v401 = vadd.f32 %v371, %v305
  %v402 = vadd.f32 %v372, %v306
  %v403 = vadd.f32 %v373, %v307
  %v404 = vadd.f32 %v374, %v308
  %v405 = vadd.f32 %v375, %v309
  %v406 = vadd.f32 %v376, %v310
  %v407 = vadd.f32 %v377, %v383
  %v408 = vadd.f32 %v378, %v384
  %v409 = vadd.f32 %v379, %v385
  %v410 = vadd.f32 %v380, %v386
  %v411 = vadd.f32 %v381, %v387
  %v412 = vadd.f32 %v382, %v388
  %v413 = vmul.f32 %v44, 0.10936069
  %v414 = vmul.f32 %v45, 0.10936069
  %v415 = vmul.f32 %v46, 0.10936069
  %v416 = vmul.f32 %v47, 0.10936069
  %v417 = vmul.f32 %v48, 0.10936069
  %v418 = vmul.f32 %v49, 0.10936069
  %v419 = vmul.f32 %v50, 0.10936069
  %v420 = vmul.f32 %v51, 0.10936069
  %v421 = vmul.f32 %v52, 0.10936069
  %v422 = vmul.f32 %v53, 0.10936069
  %v423 = vmul.f32 %v54, 0.10936069
  %v424 = vmul.f32 %v55, 0.10936069
  %v425 = vadd.f32 %v389, %v251
  %v426 = vadd.f32 %v390, %v252
  %v427 = vadd.f32 %v391, %v253
  %v428 = vadd.f32 %v392, %v254
  %v429 = vadd.f32 %v393, %v255
  %v430 = vadd.f32 %v394, %v256
  %v431 = vadd.f32 %v395, %v257
  %v432 = vadd.f32 %v396, %v258
  %v433 = vadd.f32 %v397, %v259
  %v434 = vadd.f32 %v398, %v260
  %v435 = vadd.f32 %v399, %v261
  %v436 = vadd.f32 %v400, %v262
  %v437 = vadd.f32 %v401, %v413
  %v438 = vadd.f32 %v402, %v414
  %v439 = vadd.f32 %v403, %v415
  %v440 = vadd.f32 %v404, %v416
  %v441 = vadd.f32 %v405, %v417
  %v442 = vadd.f32 %v406, %v418
  %v443 = vadd.f32 %v407, %v419
  %v444 = vadd.f32 %v408, %v420
  %v445 = vadd.f32 %v409, %v421
  %v446 = vadd.f32 %v410, %v422
  %v447 = vadd.f32 %v411, %v423
  %v448 = vadd.f32 %v412, %v424
  %v449 = vmul.f32 %v41, 0.036000773
  %v450 = vmul.f32 %v42, 0.036000773
  %v451 = vmul.f32 %v43, 0.036000773
  %v452 = vmul.f32 %v44, 0.036000773
  %v453 = vmul.f32 %v45, 0.036000773
  %v454 = vmul.f32 %v46, 0.036000773
  %v455 = vmul.f32 %v47, 0.036000773
  %v456 = vmul.f32 %v48, 0.036000773
  %v457 = vmul.f32 %v49, 0.036000773
  %v458 = vmul.f32 %v50, 0.036000773
  %v459 = vmul.f32 %v51, 0.036000773
  %v460 = vmul.f32 %v52, 0.036000773
  %v461 = vmul.f32 %v53, 0.036000773
  %v462 = vmul.f32 %v54, 0.036000773
  %v463 = vmul.f32 %v55, 0.036000773
  %v464 = vmul.f32 %v56, 0.036000773
  %v465 = vmul.f32 %v57, 0.036000773
  %v466 = vmul.f32 %v58, 0.036000773
  %v467 = vadd.f32 %v425, %v209
  %v468 = vadd.f32 %v426, %v210
  %v469 = vadd.f32 %v427, %v211
  %v470 = vadd.f32 %v428, %v212
  %v471 = vadd.f32 %v429, %v213
  %v472 = vadd.f32 %v430, %v214
  %v473 = vadd.f32 %v431, %v449
  %v474 = vadd.f32 %v432, %v450
  %v475 = vadd.f32 %v433, %v451
  %v476 = vadd.f32 %v434, %v452
  %v477 = vadd.f32 %v435, %v453
  %v478 = vadd.f32 %v436, %v454
  %v479 = vadd.f32 %v437, %v455
  %v480 = vadd.f32 %v438, %v456
  %v481 = vadd.f32 %v439, %v457
  %v482 = vadd.f32 %v440, %v458
  %v483 = vadd.f32 %v441, %v459
  %v484 = vadd.f32 %v442, %v460
  %v485 = vadd.f32 %v443, %v461
  %v486 = vadd.f32 %v444, %v462
  %v487 = vadd.f32 %v445, %v463
  %v488 = vadd.f32 %v446, %v464
  %v489 = vadd.f32 %v447, %v465
  %v490 = vadd.f32 %v448, %v466
  %v491 = vmul.f32 %v38, 0.007598758
  %v492 = vmul.f32 %v39, 0.007598758
  %v493 = vmul.f32 %v40, 0.007598758
  %v494 = vmul.f32 %v41, 0.007598758
  %v495 = vmul.f32 %v42, 0.007598758
  %v496 = vmul.f32 %v43, 0.007598758
  %v497 = vmul.f32 %v44, 0.007598758
  %v498 = vmul.f32 %v45, 0.007598758
  %v499 = vmul.f32 %v46, 0.007598758
  %v500 = vmul.f32 %v47, 0.007598758
  %v501 = vmul.f32 %v48, 0.007598758
  %v502 = vmul.f32 %v49, 0.007598758
  %v503 = vmul.f32 %v50, 0.007598758
  %v504 = vmul.f32 %v51, 0.007598758
  %v505 = vmul.f32 %v52, 0.007598758
  %v506 = vmul.f32 %v53, 0.007598758
  %v507 = vmul.f32 %v54, 0.007598758
  %v508 = vmul.f32 %v55, 0.007598758
  %v509 = vmul.f32 %v56, 0.007598758
  %v510 = vmul.f32 %v57, 0.007598758
  %v511 = vmul.f32 %v58, 0.007598758
  %v512 = vmul.f32 %v59, 0.007598758
  %v513 = vmul.f32 %v60, 0.007598758
  %v514 = vmul.f32 %v61, 0.007598758
  %v515 = vadd.f32 %v467, %v491
  %v516 = vadd.f32 %v468, %v492
  %v517 = vadd.f32 %v469, %v493
  %v518 = vadd.f32 %v470, %v494
  %v519 = vadd.f32 %v471, %v495
  %v520 = vadd.f32 %v472, %v496
  %v521 = vadd.f32 %v473, %v497
  %v522 = vadd.f32 %v474, %v498
  %v523 = vadd.f32 %v475, %v499
  %v524 = vadd.f32 %v476, %v500
  %v525 = vadd.f32 %v477, %v501
  %v526 = vadd.f32 %v478, %v502
  %v527 = vadd.f32 %v479, %v503
  %v528 = vadd.f32 %v480, %v504
  %v529 = vadd.f32 %v481, %v505
  %v530 = vadd.f32 %v482, %v506
  %v531 = vadd.f32 %v483, %v507
  %v532 = vadd.f32 %v484, %v508
  %v533 = vadd.f32 %v485, %v509
  %v534 = vadd.f32 %v486, %v510
  %v535 = vadd.f32 %v487, %v511
  %v536 = vadd.f32 %v488, %v512
  %v537 = vadd.f32 %v489, %v513
  %v538 = vadd.f32 %v490, %v514
  %v539 = vmul.f32 %v41, 0.0010283801
  %v540 = vmul.f32 %v42, 0.0010283801
  %v541 = vmul.f32 %v43, 0.0010283801
  %v542 = vmul.f32 %v44, 0.0010283801
  %v543 = vmul.f32 %v45, 0.0010283801
  %v544 = vmul.f32 %v46, 0.0010283801
  %v545 = vmul.f32 %v47, 0.0010283801
  %v546 = vmul.f32 %v48, 0.0010283801
  %v547 = vmul.f32 %v49, 0.0010283801
  %v548 = vmul.f32 %v50, 0.0010283801
  %v549 = vmul.f32 %v51, 0.0010283801
  %v550 = vmul.f32 %v52, 0.0010283801
  %v551 = vmul.f32 %v53, 0.0010283801
  %v552 = vmul.f32 %v54, 0.0010283801
  %v553 = vmul.f32 %v55, 0.0010283801
  %v554 = vmul.f32 %v56, 0.0010283801
  %v555 = vmul.f32 %v57, 0.0010283801
  %v556 = vmul.f32 %v58, 0.0010283801
  %v557 = vmul.f32 %v59, 0.0010283801
  %v558 = vmul.f32 %v60, 0.0010283801
  %v559 = vmul.f32 %v61, 0.0010283801
  %v560 = vmul.f32 %v62, 0.0010283801
  %v561 = vmul.f32 %v63, 0.0010283801
  %v562 = vmul.f32 %v64, 0.0010283801
  %v563 = vadd.f32 %v515, %v539
  %v564 = vadd.f32 %v516, %v540
  %v565 = vadd.f32 %v517, %v541
  %v566 = vadd.f32 %v518, %v542
  %v567 = vadd.f32 %v519, %v543
  %v568 = vadd.f32 %v520, %v544
  %v569 = vadd.f32 %v521, %v545
  %v570 = vadd.f32 %v522, %v546
  %v571 = vadd.f32 %v523, %v547
  %v572 = vadd.f32 %v524, %v548
  %v573 = vadd.f32 %v525, %v549
  %v574 = vadd.f32 %v526, %v550
  %v575 = vadd.f32 %v527, %v551
  %v576 = vadd.f32 %v528, %v552
  %v577 = vadd.f32 %v529, %v553
  %v578 = vadd.f32 %v530, %v554
  %v579 = vadd.f32 %v531, %v555
  %v580 = vadd.f32 %v532, %v556
  %v581 = vadd.f32 %v533, %v557
  %v582 = vadd.f32 %v534, %v558
  %v583 = vadd.f32 %v535, %v559
  %v584 = vadd.f32 %v536, %v560
  %v585 = vadd.f32 %v537, %v561
  %v586 = vadd.f32 %v538, %v562
  %v587 = vmul.f32 %v563, 0.0010283801
  %v588 = vmul.f32 %v566, 0.0010283801
  %v589 = vmul.f32 %v569, 0.0010283801
  %v590 = vmul.f32 %v572, 0.0010283801
  %v591 = vmul.f32 %v575, 0.0010283801
  %v592 = vmul.f32 %v578, 0.0010283801
  %v593 = vmul.f32 %v581, 0.0010283801
  %v594 = vmul.f32 %v584, 0.0010283801
  %v595 = vmul.f32 %v563, 0.007598758
  %v596 = vmul.f32 %v564, 0.007598758
  %v597 = vmul.f32 %v566, 0.007598758
  %v598 = vmul.f32 %v567, 0.007598758
  %v599 = vmul.f32 %v569, 0.007598758
  %v600 = vmul.f32 %v570, 0.007598758
  %v601 = vmul.f32 %v572, 0.007598758
  %v602 = vmul.f32 %v573, 0.007598758
  %v603 = vmul.f32 %v575, 0.007598758
  %v604 = vmul.f32 %v576, 0.007598758
  %v605 = vmul.f32 %v578, 0.007598758
  %v606 = vmul.f32 %v579, 0.007598758
  %v607 = vmul.f32 %v581, 0.007598758
  %v608 = vmul.f32 %v582, 0.007598758
  %v609 = vmul.f32 %v584, 0.007598758
  %v610 = vmul.f32 %v585, 0.007598758
  %vm627 = vcmask 1046528
  %v628 = vrot.slane %v595, 1
  %v629 = vrot.slane %v596, 1
  %v630 = vsel %vm627, %v628, %v629
  %v631 = vrot.slane %v597, 1
  %v632 = vrot.slane %v598, 1
  %v633 = vsel %vm627, %v631, %v632
  %v634 = vrot.slane %v599, 1
  %v635 = vrot.slane %v600, 1
  %v636 = vsel %vm627, %v634, %v635
  %v637 = vrot.slane %v601, 1
  %v638 = vrot.slane %v602, 1
  %v639 = vsel %vm627, %v637, %v638
  %v640 = vrot.slane %v603, 1
  %v641 = vrot.slane %v604, 1
  %v642 = vsel %vm627, %v640, %v641
  %v643 = vrot.slane %v605, 1
  %v644 = vrot.slane %v606, 1
  %v645 = vsel %vm627, %v643, %v644
  %v646 = vrot.slane %v607, 1
  %v647 = vrot.slane %v608, 1
  %v648 = vsel %vm627, %v646, %v647
  %v649 = vrot.slane %v609, 1
  %v650 = vrot.slane %v610, 1
  %v651 = vsel %vm627, %v649, %v650
  %v660 = vadd.f32 %v587, %v630
  %v661 = vadd.f32 %v588, %v633
  %v662 = vadd.f32 %v589, %v636
  %v663 = vadd.f32 %v590, %v639
  %v664 = vadd.f32 %v591, %v642
  %v665 = vadd.f32 %v592, %v645
  %v666 = vadd.f32 %v593, %v648
  %v667 = vadd.f32 %v594, %v651
  %v668 = vmul.f32 %v563, 0.036000773
  %v669 = vmul.f32 %v564, 0.036000773
  %v670 = vmul.f32 %v566, 0.036000773
  %v671 = vmul.f32 %v567, 0.036000773
  %v672 = vmul.f32 %v569, 0.036000773
  %v673 = vmul.f32 %v570, 0.036000773
  %v674 = vmul.f32 %v572, 0.036000773
  %v675 = vmul.f32 %v573, 0.036000773
  %v676 = vmul.f32 %v575, 0.036000773
  %v677 = vmul.f32 %v576, 0.036000773
  %v678 = vmul.f32 %v578, 0.036000773
  %v679 = vmul.f32 %v579, 0.036000773
  %v680 = vmul.f32 %v581, 0.036000773
  %v681 = vmul.f32 %v582, 0.036000773
  %v682 = vmul.f32 %v584, 0.036000773
  %v683 = vmul.f32 %v585, 0.036000773
  %vm700 = vcmask 1045504
  %v701 = vrot.slane %v668, 2
  %v702 = vrot.slane %v669, 2
  %v703 = vsel %vm700, %v701, %v702
  %v704 = vrot.slane %v670, 2
  %v705 = vrot.slane %v671, 2
  %v706 = vsel %vm700, %v704, %v705
  %v707 = vrot.slane %v672, 2
  %v708 = vrot.slane %v673, 2
  %v709 = vsel %vm700, %v707, %v708
  %v710 = vrot.slane %v674, 2
  %v711 = vrot.slane %v675, 2
  %v712 = vsel %vm700, %v710, %v711
  %v713 = vrot.slane %v676, 2
  %v714 = vrot.slane %v677, 2
  %v715 = vsel %vm700, %v713, %v714
  %v716 = vrot.slane %v678, 2
  %v717 = vrot.slane %v679, 2
  %v718 = vsel %vm700, %v716, %v717
  %v719 = vrot.slane %v680, 2
  %v720 = vrot.slane %v681, 2
  %v721 = vsel %vm700, %v719, %v720
  %v722 = vrot.slane %v682, 2
  %v723 = vrot.slane %v683, 2
  %v724 = vsel %vm700, %v722, %v723
  %v733 = vadd.f32 %v660, %v703
  %v734 = vadd.f32 %v661, %v706
  %v735 = vadd.f32 %v662, %v709
  %v736 = vadd.f32 %v663, %v712
  %v737 = vadd.f32 %v664, %v715
  %v738 = vadd.f32 %v665, %v718
  %v739 = vadd.f32 %v666, %v721
  %v740 = vadd.f32 %v667, %v724
  %v741 = vmul.f32 %v563, 0.10936069
  %v742 = vmul.f32 %v564, 0.10936069
  %v743 = vmul.f32 %v566, 0.10936069
  %v744 = vmul.f32 %v567, 0.10936069
  %v745 = vmul.f32 %v569, 0.10936069
  %v746 = vmul.f32 %v570, 0.10936069
  %v747 = vmul.f32 %v572, 0.10936069
  %v748 = vmul.f32 %v573, 0.10936069
  %v749 = vmul.f32 %v575, 0.10936069
  %v750 = vmul.f32 %v576, 0.10936069
  %v751 = vmul.f32 %v578, 0.10936069
  %v752 = vmul.f32 %v579, 0.10936069
  %v753 = vmul.f32 %v581, 0.10936069
  %v754 = vmul.f32 %v582, 0.10936069
  %v755 = vmul.f32 %v584, 0.10936069
  %v756 = vmul.f32 %v585, 0.10936069
  %vm773 = vcmask 1044480
  %v774 = vrot.slane %v741, 3
  %v775 = vrot.slane %v742, 3
  %v776 = vsel %vm773, %v774, %v775
  %v777 = vrot.slane %v743, 3
  %v778 = vrot.slane %v744, 3
  %v779 = vsel %vm773, %v777, %v778
  %v780 = vrot.slane %v745, 3
  %v781 = vrot.slane %v746, 3
  %v782 = vsel %vm773, %v780, %v781
  %v783 = vrot.slane %v747, 3
  %v784 = vrot.slane %v748, 3
  %v785 = vsel %vm773, %v783, %v784
  %v786 = vrot.slane %v749, 3
  %v787 = vrot.slane %v750, 3
  %v788 = vsel %vm773, %v786, %v787
  %v789 = vrot.slane %v751, 3
  %v790 = vrot.slane %v752, 3
  %v791 = vsel %vm773, %v789, %v790
  %v792 = vrot.slane %v753, 3
  %v793 = vrot.slane %v754, 3
  %v794 = vsel %vm773, %v792, %v793
  %v795 = vrot.slane %v755, 3
  %v796 = vrot.slane %v756, 3
  %v797 = vsel %vm773, %v795, %v796
  %v806 = vadd.f32 %v733, %v776
  %v807 = vadd.f32 %v734, %v779
  %v808 = vadd.f32 %v735, %v782
  %v809 = vadd.f32 %v736, %v785
  %v810 = vadd.f32 %v737, %v788
  %v811 = vadd.f32 %v738, %v791
  %v812 = vadd.f32 %v739, %v794
  %v813 = vadd.f32 %v740, %v797
  %v814 = vmul.f32 %v563, 0.21300554
  %v815 = vmul.f32 %v564, 0.21300554
  %v816 = vmul.f32 %v566, 0.21300554
  %v817 = vmul.f32 %v567, 0.21300554
  %v818 = vmul.f32 %v569, 0.21300554
  %v819 = vmul.f32 %v570, 0.21300554
  %v820 = vmul.f32 %v572, 0.21300554
  %v821 = vmul.f32 %v573, 0.21300554
  %v822 = vmul.f32 %v575, 0.21300554
  %v823 = vmul.f32 %v576, 0.21300554
  %v824 = vmul.f32 %v578, 0.21300554
  %v825 = vmul.f32 %v579, 0.21300554
  %v826 = vmul.f32 %v581, 0.21300554
  %v827 = vmul.f32 %v582, 0.21300554
  %v828 = vmul.f32 %v584, 0.21300554
  %v829 = vmul.f32 %v585, 0.21300554
  %vm846 = vcmask 1043456
  %v847 = vrot.slane %v814, 4
  %v848 = vrot.slane %v815, 4
  %v849 = vsel %vm846, %v847, %v848
  %v850 = vrot.slane %v816, 4
  %v851 = vrot.slane %v817, 4
  %v852 = vsel %vm846, %v850, %v851
  %v853 = vrot.slane %v818, 4
  %v854 = vrot.slane %v819, 4
  %v855 = vsel %vm846, %v853, %v854
  %v856 = vrot.slane %v820, 4
  %v857 = vrot.slane %v821, 4
  %v858 = vsel %vm846, %v856, %v857
  %v859 = vrot.slane %v822, 4
  %v860 = vrot.slane %v823, 4
  %v861 = vsel %vm846, %v859, %v860
  %v862 = vrot.slane %v824, 4
  %v863 = vrot.slane %v825, 4
  %v864 = vsel %vm846, %v862, %v863
  %v865 = vrot.slane %v826, 4
  %v866 = vrot.slane %v827, 4
  %v867 = vsel %vm846, %v865, %v866
  %v868 = vrot.slane %v828, 4
  %v869 = vrot.slane %v829, 4
  %v870 = vsel %vm846, %v868, %v869
  %v879 = vadd.f32 %v806, %v849
  %v880 = vadd.f32 %v807, %v852
  %v881 = vadd.f32 %v808, %v855
  %v882 = vadd.f32 %v809, %v858
  %v883 = vadd.f32 %v810, %v861
  %v884 = vadd.f32 %v811, %v864
  %v885 = vadd.f32 %v812, %v867
  %v886 = vadd.f32 %v813, %v870
  %v887 = vmul.f32 %v563, 0.26601171
  %v888 = vmul.f32 %v564, 0.26601171
  %v889 = vmul.f32 %v566, 0.26601171
  %v890 = vmul.f32 %v567, 0.26601171
  %v891 = vmul.f32 %v569, 0.26601171
  %v892 = vmul.f32 %v570, 0.26601171
  %v893 = vmul.f32 %v572, 0.26601171
  %v894 = vmul.f32 %v573, 0.26601171
  %v895 = vmul.f32 %v575, 0.26601171
  %v896 = vmul.f32 %v576, 0.26601171
  %v897 = vmul.f32 %v578, 0.26601171
  %v898 = vmul.f32 %v579, 0.26601171
  %v899 = vmul.f32 %v581, 0.26601171
  %v900 = vmul.f32 %v582, 0.26601171
  %v901 = vmul.f32 %v584, 0.26601171
  %v902 = vmul.f32 %v585, 0.26601171
  %vm919 = vcmask 1042432
  %v920 = vrot.slane %v887, 5
  %v921 = vrot.slane %v888, 5
  %v922 = vsel %vm919, %v920, %v921
  %v923 = vrot.slane %v889, 5
  %v924 = vrot.slane %v890, 5
  %v925 = vsel %vm919, %v923, %v924
  %v926 = vrot.slane %v891, 5
  %v927 = vrot.slane %v892, 5
  %v928 = vsel %vm919, %v926, %v927
  %v929 = vrot.slane %v893, 5
  %v930 = vrot.slane %v894, 5
  %v931 = vsel %vm919, %v929, %v930
  %v932 = vrot.slane %v895, 5
  %v933 = vrot.slane %v896, 5
  %v934 = vsel %vm919, %v932, %v933
  %v935 = vrot.slane %v897, 5
  %v936 = vrot.slane %v898, 5
  %v937 = vsel %vm919, %v935, %v936
  %v938 = vrot.slane %v899, 5
  %v939 = vrot.slane %v900, 5
  %v940 = vsel %vm919, %v938, %v939
  %v941 = vrot.slane %v901, 5
  %v942 = vrot.slane %v902, 5
  %v943 = vsel %vm919, %v941, %v942
  %v952 = vadd.f32 %v879, %v922
  %v953 = vadd.f32 %v880, %v925
  %v954 = vadd.f32 %v881, %v928
  %v955 = vadd.f32 %v882, %v931
  %v956 = vadd.f32 %v883, %v934
  %v957 = vadd.f32 %v884, %v937
  %v958 = vadd.f32 %v885, %v940
  %v959 = vadd.f32 %v886, %v943
  %vm960 = vcmask 1041408
  %v961 = vrot.slane %v814, 6
  %v962 = vrot.slane %v815, 6
  %v963 = vsel %vm960, %v961, %v962
  %v964 = vrot.slane %v816, 6
  %v965 = vrot.slane %v817, 6
  %v966 = vsel %vm960, %v964, %v965
  %v967 = vrot.slane %v818, 6
  %v968 = vrot.slane %v819, 6
  %v969 = vsel %vm960, %v967, %v968
  %v970 = vrot.slane %v820, 6
  %v971 = vrot.slane %v821, 6
  %v972 = vsel %vm960, %v970, %v971
  %v973 = vrot.slane %v822, 6
  %v974 = vrot.slane %v823, 6
  %v975 = vsel %vm960, %v973, %v974
  %v976 = vrot.slane %v824, 6
  %v977 = vrot.slane %v825, 6
  %v978 = vsel %vm960, %v976, %v977
  %v979 = vrot.slane %v826, 6
  %v980 = vrot.slane %v827, 6
  %v981 = vsel %vm960, %v979, %v980
  %v982 = vrot.slane %v828, 6
  %v983 = vrot.slane %v829, 6
  %v984 = vsel %vm960, %v982, %v983
  %v993 = vadd.f32 %v952, %v963
  %v994 = vadd.f32 %v953, %v966
  %v995 = vadd.f32 %v954, %v969
  %v996 = vadd.f32 %v955, %v972
  %v997 = vadd.f32 %v956, %v975
  %v998 = vadd.f32 %v957, %v978
  %v999 = vadd.f32 %v958, %v981
  %v1000 = vadd.f32 %v959, %v984
  %vm1001 = vcmask 1040384
  %v1002 = vrot.slane %v741, 7
  %v1003 = vrot.slane %v742, 7
  %v1004 = vsel %vm1001, %v1002, %v1003
  %v1005 = vrot.slane %v743, 7
  %v1006 = vrot.slane %v744, 7
  %v1007 = vsel %vm1001, %v1005, %v1006
  %v1008 = vrot.slane %v745, 7
  %v1009 = vrot.slane %v746, 7
  %v1010 = vsel %vm1001, %v1008, %v1009
  %v1011 = vrot.slane %v747, 7
  %v1012 = vrot.slane %v748, 7
  %v1013 = vsel %vm1001, %v1011, %v1012
  %v1014 = vrot.slane %v749, 7
  %v1015 = vrot.slane %v750, 7
  %v1016 = vsel %vm1001, %v1014, %v1015
  %v1017 = vrot.slane %v751, 7
  %v1018 = vrot.slane %v752, 7
  %v1019 = vsel %vm1001, %v1017, %v1018
  %v1020 = vrot.slane %v753, 7
  %v1021 = vrot.slane %v754, 7
  %v1022 = vsel %vm1001, %v1020, %v1021
  %v1023 = vrot.slane %v755, 7
  %v1024 = vrot.slane %v756, 7
  %v1025 = vsel %vm1001, %v1023, %v1024
  %v1034 = vadd.f32 %v993, %v1004
  %v1035 = vadd.f32 %v994, %v1007
  %v1036 = vadd.f32 %v995, %v1010
  %v1037 = vadd.f32 %v996, %v1013
  %v1038 = vadd.f32 %v997, %v1016
  %v1039 = vadd.f32 %v998, %v1019
  %v1040 = vadd.f32 %v999, %v1022
  %v1041 = vadd.f32 %v1000, %v1025
  %v1042 = vadd.f32 %v1034, %v669
  %v1043 = vadd.f32 %v1035, %v671
  %v1044 = vadd.f32 %v1036, %v673
  %v1045 = vadd.f32 %v1037, %v675
  %v1046 = vadd.f32 %v1038, %v677
  %v1047 = vadd.f32 %v1039, %v679
  %v1048 = vadd.f32 %v1040, %v681
  %v1049 = vadd.f32 %v1041, %v683
  %v1050 = vmul.f32 %v565, 0.007598758
  %v1051 = vmul.f32 %v568, 0.007598758
  %v1052 = vmul.f32 %v571, 0.007598758
  %v1053 = vmul.f32 %v574, 0.007598758
  %v1054 = vmul.f32 %v577, 0.007598758
  %v1055 = vmul.f32 %v580, 0.007598758
  %v1056 = vmul.f32 %v583, 0.007598758
  %v1057 = vmul.f32 %v586, 0.007598758
  %v1066 = vrot.slane %v1050, 1
  %v1067 = vsel %vm627, %v629, %v1066
  %v1068 = vrot.slane %v1051, 1
  %v1069 = vsel %vm627, %v632, %v1068
  %v1070 = vrot.slane %v1052, 1
  %v1071 = vsel %vm627, %v635, %v1070
  %v1072 = vrot.slane %v1053, 1
  %v1073 = vsel %vm627, %v638, %v1072
  %v1074 = vrot.slane %v1054, 1
  %v1075 = vsel %vm627, %v641, %v1074
  %v1076 = vrot.slane %v1055, 1
  %v1077 = vsel %vm627, %v644, %v1076
  %v1078 = vrot.slane %v1056, 1
  %v1079 = vsel %vm627, %v647, %v1078
  %v1080 = vrot.slane %v1057, 1
  %v1081 = vsel %vm627, %v650, %v1080
  %v1090 = vadd.f32 %v1042, %v1067
  %v1091 = vadd.f32 %v1043, %v1069
  %v1092 = vadd.f32 %v1044, %v1071
  %v1093 = vadd.f32 %v1045, %v1073
  %v1094 = vadd.f32 %v1046, %v1075
  %v1095 = vadd.f32 %v1047, %v1077
  %v1096 = vadd.f32 %v1048, %v1079
  %v1097 = vadd.f32 %v1049, %v1081
  %v1098 = vmul.f32 %v564, 0.0010283801
  %v1099 = vmul.f32 %v565, 0.0010283801
  %v1100 = vmul.f32 %v567, 0.0010283801
  %v1101 = vmul.f32 %v568, 0.0010283801
  %v1102 = vmul.f32 %v570, 0.0010283801
  %v1103 = vmul.f32 %v571, 0.0010283801
  %v1104 = vmul.f32 %v573, 0.0010283801
  %v1105 = vmul.f32 %v574, 0.0010283801
  %v1106 = vmul.f32 %v576, 0.0010283801
  %v1107 = vmul.f32 %v577, 0.0010283801
  %v1108 = vmul.f32 %v579, 0.0010283801
  %v1109 = vmul.f32 %v580, 0.0010283801
  %v1110 = vmul.f32 %v582, 0.0010283801
  %v1111 = vmul.f32 %v583, 0.0010283801
  %v1112 = vmul.f32 %v585, 0.0010283801
  %v1113 = vmul.f32 %v586, 0.0010283801
  %v1130 = vrot.slane %v1098, 2
  %v1131 = vrot.slane %v1099, 2
  %v1132 = vsel %vm700, %v1130, %v1131
  %v1133 = vrot.slane %v1100, 2
  %v1134 = vrot.slane %v1101, 2
  %v1135 = vsel %vm700, %v1133, %v1134
  %v1136 = vrot.slane %v1102, 2
  %v1137 = vrot.slane %v1103, 2
  %v1138 = vsel %vm700, %v1136, %v1137
  %v1139 = vrot.slane %v1104, 2
  %v1140 = vrot.slane %v1105, 2
  %v1141 = vsel %vm700, %v1139, %v1140
  %v1142 = vrot.slane %v1106, 2
  %v1143 = vrot.slane %v1107, 2
  %v1144 = vsel %vm700, %v1142, %v1143
  %v1145 = vrot.slane %v1108, 2
  %v1146 = vrot.slane %v1109, 2
  %v1147 = vsel %vm700, %v1145, %v1146
  %v1148 = vrot.slane %v1110, 2
  %v1149 = vrot.slane %v1111, 2
  %v1150 = vsel %vm700, %v1148, %v1149
  %v1151 = vrot.slane %v1112, 2
  %v1152 = vrot.slane %v1113, 2
  %v1153 = vsel %vm700, %v1151, %v1152
  %v1162 = vadd.f32 %v1090, %v1132
  %v1163 = vadd.f32 %v1091, %v1135
  %v1164 = vadd.f32 %v1092, %v1138
  %v1165 = vadd.f32 %v1093, %v1141
  %v1166 = vadd.f32 %v1094, %v1144
  %v1167 = vadd.f32 %v1095, %v1147
  %v1168 = vadd.f32 %v1096, %v1150
  %v1169 = vadd.f32 %v1097, %v1153
  %v1170 = vmul.f32 %v65, 0.0010283801
  %v1171 = vmul.f32 %v66, 0.0010283801
  %v1172 = vmul.f32 %v67, 0.0010283801
  %v1173 = vmul.f32 %v68, 0.0010283801
  %v1174 = vmul.f32 %v69, 0.0010283801
  %v1175 = vmul.f32 %v70, 0.0010283801
  %v1176 = vmul.f32 %v71, 0.0010283801
  %v1177 = vmul.f32 %v72, 0.0010283801
  %v1178 = vmul.f32 %v73, 0.0010283801
  %v1179 = vmul.f32 %v74, 0.0010283801
  %v1180 = vmul.f32 %v75, 0.0010283801
  %v1181 = vmul.f32 %v76, 0.0010283801
  %v1182 = vmul.f32 %v77, 0.0010283801
  %v1183 = vmul.f32 %v78, 0.0010283801
  %v1184 = vmul.f32 %v79, 0.0010283801
  %v1185 = vmul.f32 %v80, 0.0010283801
  %v1186 = vmul.f32 %v81, 0.0010283801
  %v1187 = vmul.f32 %v82, 0.0010283801
  %v1188 = vmul.f32 %v83, 0.0010283801
  %v1189 = vmul.f32 %v84, 0.0010283801
  %v1190 = vmul.f32 %v85, 0.0010283801
  %v1191 = vmul.f32 %v86, 0.0010283801
  %v1192 = vmul.f32 %v87, 0.0010283801
  %v1193 = vmul.f32 %v88, 0.0010283801
  %v1194 = vmul.f32 %v68, 0.007598758
  %v1195 = vmul.f32 %v69, 0.007598758
  %v1196 = vmul.f32 %v70, 0.007598758
  %v1197 = vmul.f32 %v71, 0.007598758
  %v1198 = vmul.f32 %v72, 0.007598758
  %v1199 = vmul.f32 %v73, 0.007598758
  %v1200 = vmul.f32 %v74, 0.007598758
  %v1201 = vmul.f32 %v75, 0.007598758
  %v1202 = vmul.f32 %v76, 0.007598758
  %v1203 = vmul.f32 %v77, 0.007598758
  %v1204 = vmul.f32 %v78, 0.007598758
  %v1205 = vmul.f32 %v79, 0.007598758
  %v1206 = vmul.f32 %v80, 0.007598758
  %v1207 = vmul.f32 %v81, 0.007598758
  %v1208 = vmul.f32 %v82, 0.007598758
  %v1209 = vmul.f32 %v83, 0.007598758
  %v1210 = vmul.f32 %v84, 0.007598758
  %v1211 = vmul.f32 %v85, 0.007598758
  %v1212 = vmul.f32 %v86, 0.007598758
  %v1213 = vmul.f32 %v87, 0.007598758
  %v1214 = vmul.f32 %v88, 0.007598758
  %v1215 = vmul.f32 %v89, 0.007598758
  %v1216 = vmul.f32 %v90, 0.007598758
  %v1217 = vmul.f32 %v91, 0.007598758
  %v1218 = vadd.f32 %v1170, %v1194
  %v1219 = vadd.f32 %v1171, %v1195
  %v1220 = vadd.f32 %v1172, %v1196
  %v1221 = vadd.f32 %v1173, %v1197
  %v1222 = vadd.f32 %v1174, %v1198
  %v1223 = vadd.f32 %v1175, %v1199
  %v1224 = vadd.f32 %v1176, %v1200
  %v1225 = vadd.f32 %v1177, %v1201
  %v1226 = vadd.f32 %v1178, %v1202
  %v1227 = vadd.f32 %v1179, %v1203
  %v1228 = vadd.f32 %v1180, %v1204
  %v1229 = vadd.f32 %v1181, %v1205
  %v1230 = vadd.f32 %v1182, %v1206
  %v1231 = vadd.f32 %v1183, %v1207
  %v1232 = vadd.f32 %v1184, %v1208
  %v1233 = vadd.f32 %v1185, %v1209
  %v1234 = vadd.f32 %v1186, %v1210
  %v1235 = vadd.f32 %v1187, %v1211
  %v1236 = vadd.f32 %v1188, %v1212
  %v1237 = vadd.f32 %v1189, %v1213
  %v1238 = vadd.f32 %v1190, %v1214
  %v1239 = vadd.f32 %v1191, %v1215
  %v1240 = vadd.f32 %v1192, %v1216
  %v1241 = vadd.f32 %v1193, %v1217
  %v1242 = vmul.f32 %v71, 0.036000773
  %v1243 = vmul.f32 %v72, 0.036000773
  %v1244 = vmul.f32 %v73, 0.036000773
  %v1245 = vmul.f32 %v74, 0.036000773
  %v1246 = vmul.f32 %v75, 0.036000773
  %v1247 = vmul.f32 %v76, 0.036000773
  %v1248 = vmul.f32 %v77, 0.036000773
  %v1249 = vmul.f32 %v78, 0.036000773
  %v1250 = vmul.f32 %v79, 0.036000773
  %v1251 = vmul.f32 %v80, 0.036000773
  %v1252 = vmul.f32 %v81, 0.036000773
  %v1253 = vmul.f32 %v82, 0.036000773
  %v1254 = vmul.f32 %v83, 0.036000773
  %v1255 = vmul.f32 %v84, 0.036000773
  %v1256 = vmul.f32 %v85, 0.036000773
  %v1257 = vmul.f32 %v86, 0.036000773
  %v1258 = vmul.f32 %v87, 0.036000773
  %v1259 = vmul.f32 %v88, 0.036000773
  %v1260 = vmul.f32 %v89, 0.036000773
  %v1261 = vmul.f32 %v90, 0.036000773
  %v1262 = vmul.f32 %v91, 0.036000773
  %v1263 = vmul.f32 %v92, 0.036000773
  %v1264 = vmul.f32 %v93, 0.036000773
  %v1265 = vmul.f32 %v94, 0.036000773
  %v1266 = vadd.f32 %v1218, %v1242
  %v1267 = vadd.f32 %v1219, %v1243
  %v1268 = vadd.f32 %v1220, %v1244
  %v1269 = vadd.f32 %v1221, %v1245
  %v1270 = vadd.f32 %v1222, %v1246
  %v1271 = vadd.f32 %v1223, %v1247
  %v1272 = vadd.f32 %v1224, %v1248
  %v1273 = vadd.f32 %v1225, %v1249
  %v1274 = vadd.f32 %v1226, %v1250
  %v1275 = vadd.f32 %v1227, %v1251
  %v1276 = vadd.f32 %v1228, %v1252
  %v1277 = vadd.f32 %v1229, %v1253
  %v1278 = vadd.f32 %v1230, %v1254
  %v1279 = vadd.f32 %v1231, %v1255
  %v1280 = vadd.f32 %v1232, %v1256
  %v1281 = vadd.f32 %v1233, %v1257
  %v1282 = vadd.f32 %v1234, %v1258
  %v1283 = vadd.f32 %v1235, %v1259
  %v1284 = vadd.f32 %v1236, %v1260
  %v1285 = vadd.f32 %v1237, %v1261
  %v1286 = vadd.f32 %v1238, %v1262
  %v1287 = vadd.f32 %v1239, %v1263
  %v1288 = vadd.f32 %v1240, %v1264
  %v1289 = vadd.f32 %v1241, %v1265
  %v1290 = vmul.f32 %v74, 0.10936069
  %v1291 = vmul.f32 %v75, 0.10936069
  %v1292 = vmul.f32 %v76, 0.10936069
  %v1293 = vmul.f32 %v77, 0.10936069
  %v1294 = vmul.f32 %v78, 0.10936069
  %v1295 = vmul.f32 %v79, 0.10936069
  %v1296 = vmul.f32 %v80, 0.10936069
  %v1297 = vmul.f32 %v81, 0.10936069
  %v1298 = vmul.f32 %v82, 0.10936069
  %v1299 = vmul.f32 %v83, 0.10936069
  %v1300 = vmul.f32 %v84, 0.10936069
  %v1301 = vmul.f32 %v85, 0.10936069
  %v1302 = vmul.f32 %v86, 0.10936069
  %v1303 = vmul.f32 %v87, 0.10936069
  %v1304 = vmul.f32 %v88, 0.10936069
  %v1305 = vmul.f32 %v89, 0.10936069
  %v1306 = vmul.f32 %v90, 0.10936069
  %v1307 = vmul.f32 %v91, 0.10936069
  %v1308 = vmul.f32 %v92, 0.10936069
  %v1309 = vmul.f32 %v93, 0.10936069
  %v1310 = vmul.f32 %v94, 0.10936069
  %v1311 = vmul.f32 %v95, 0.10936069
  %v1312 = vmul.f32 %v96, 0.10936069
  %v1313 = vmul.f32 %v97, 0.10936069
  %v1314 = vadd.f32 %v1266, %v1290
  %v1315 = vadd.f32 %v1267, %v1291
  %v1316 = vadd.f32 %v1268, %v1292
  %v1317 = vadd.f32 %v1269, %v1293
  %v1318 = vadd.f32 %v1270, %v1294
  %v1319 = vadd.f32 %v1271, %v1295
  %v1320 = vadd.f32 %v1272, %v1296
  %v1321 = vadd.f32 %v1273, %v1297
  %v1322 = vadd.f32 %v1274, %v1298
  %v1323 = vadd.f32 %v1275, %v1299
  %v1324 = vadd.f32 %v1276, %v1300
  %v1325 = vadd.f32 %v1277, %v1301
  %v1326 = vadd.f32 %v1278, %v1302
  %v1327 = vadd.f32 %v1279, %v1303
  %v1328 = vadd.f32 %v1280, %v1304
  %v1329 = vadd.f32 %v1281, %v1305
  %v1330 = vadd.f32 %v1282, %v1306
  %v1331 = vadd.f32 %v1283, %v1307
  %v1332 = vadd.f32 %v1284, %v1308
  %v1333 = vadd.f32 %v1285, %v1309
  %v1334 = vadd.f32 %v1286, %v1310
  %v1335 = vadd.f32 %v1287, %v1311
  %v1336 = vadd.f32 %v1288, %v1312
  %v1337 = vadd.f32 %v1289, %v1313
  %v1338 = vmul.f32 %v77, 0.21300554
  %v1339 = vmul.f32 %v78, 0.21300554
  %v1340 = vmul.f32 %v79, 0.21300554
  %v1341 = vmul.f32 %v80, 0.21300554
  %v1342 = vmul.f32 %v81, 0.21300554
  %v1343 = vmul.f32 %v82, 0.21300554
  %v1344 = vmul.f32 %v83, 0.21300554
  %v1345 = vmul.f32 %v84, 0.21300554
  %v1346 = vmul.f32 %v85, 0.21300554
  %v1347 = vmul.f32 %v86, 0.21300554
  %v1348 = vmul.f32 %v87, 0.21300554
  %v1349 = vmul.f32 %v88, 0.21300554
  %v1350 = vmul.f32 %v89, 0.21300554
  %v1351 = vmul.f32 %v90, 0.21300554
  %v1352 = vmul.f32 %v91, 0.21300554
  %v1353 = vmul.f32 %v92, 0.21300554
  %v1354 = vmul.f32 %v93, 0.21300554
  %v1355 = vmul.f32 %v94, 0.21300554
  %v1356 = vmul.f32 %v95, 0.21300554
  %v1357 = vmul.f32 %v96, 0.21300554
  %v1358 = vmul.f32 %v97, 0.21300554
  %v1359 = vmul.f32 %v98, 0.21300554
  %v1360 = vmul.f32 %v99, 0.21300554
  %v1361 = vmul.f32 %v100, 0.21300554
  %v1362 = vadd.f32 %v1314, %v1338
  %v1363 = vadd.f32 %v1315, %v1339
  %v1364 = vadd.f32 %v1316, %v1340
  %v1365 = vadd.f32 %v1317, %v1341
  %v1366 = vadd.f32 %v1318, %v1342
  %v1367 = vadd.f32 %v1319, %v1343
  %v1368 = vadd.f32 %v1320, %v1344
  %v1369 = vadd.f32 %v1321, %v1345
  %v1370 = vadd.f32 %v1322, %v1346
  %v1371 = vadd.f32 %v1323, %v1347
  %v1372 = vadd.f32 %v1324, %v1348
  %v1373 = vadd.f32 %v1325, %v1349
  %v1374 = vadd.f32 %v1326, %v1350
  %v1375 = vadd.f32 %v1327, %v1351
  %v1376 = vadd.f32 %v1328, %v1352
  %v1377 = vadd.f32 %v1329, %v1353
  %v1378 = vadd.f32 %v1330, %v1354
  %v1379 = vadd.f32 %v1331, %v1355
  %v1380 = vadd.f32 %v1332, %v1356
  %v1381 = vadd.f32 %v1333, %v1357
  %v1382 = vadd.f32 %v1334, %v1358
  %v1383 = vadd.f32 %v1335, %v1359
  %v1384 = vadd.f32 %v1336, %v1360
  %v1385 = vadd.f32 %v1337, %v1361
  %v1386 = vmul.f32 %v80, 0.26601171
  %v1387 = vmul.f32 %v81, 0.26601171
  %v1388 = vmul.f32 %v82, 0.26601171
  %v1389 = vmul.f32 %v83, 0.26601171
  %v1390 = vmul.f32 %v84, 0.26601171
  %v1391 = vmul.f32 %v85, 0.26601171
  %v1392 = vmul.f32 %v86, 0.26601171
  %v1393 = vmul.f32 %v87, 0.26601171
  %v1394 = vmul.f32 %v88, 0.26601171
  %v1395 = vmul.f32 %v89, 0.26601171
  %v1396 = vmul.f32 %v90, 0.26601171
  %v1397 = vmul.f32 %v91, 0.26601171
  %v1398 = vmul.f32 %v92, 0.26601171
  %v1399 = vmul.f32 %v93, 0.26601171
  %v1400 = vmul.f32 %v94, 0.26601171
  %v1401 = vmul.f32 %v95, 0.26601171
  %v1402 = vmul.f32 %v96, 0.26601171
  %v1403 = vmul.f32 %v97, 0.26601171
  %v1404 = vmul.f32 %v98, 0.26601171
  %v1405 = vmul.f32 %v99, 0.26601171
  %v1406 = vmul.f32 %v100, 0.26601171
  %v1407 = vmul.f32 %v101, 0.26601171
  %v1408 = vmul.f32 %v102, 0.26601171
  %v1409 = vmul.f32 %v103, 0.26601171
  %v1410 = vadd.f32 %v1362, %v1386
  %v1411 = vadd.f32 %v1363, %v1387
  %v1412 = vadd.f32 %v1364, %v1388
  %v1413 = vadd.f32 %v1365, %v1389
  %v1414 = vadd.f32 %v1366, %v1390
  %v1415 = vadd.f32 %v1367, %v1391
  %v1416 = vadd.f32 %v1368, %v1392
  %v1417 = vadd.f32 %v1369, %v1393
  %v1418 = vadd.f32 %v1370, %v1394
  %v1419 = vadd.f32 %v1371, %v1395
  %v1420 = vadd.f32 %v1372, %v1396
  %v1421 = vadd.f32 %v1373, %v1397
  %v1422 = vadd.f32 %v1374, %v1398
  %v1423 = vadd.f32 %v1375, %v1399
  %v1424 = vadd.f32 %v1376, %v1400
  %v1425 = vadd.f32 %v1377, %v1401
  %v1426 = vadd.f32 %v1378, %v1402
  %v1427 = vadd.f32 %v1379, %v1403
  %v1428 = vadd.f32 %v1380, %v1404
  %v1429 = vadd.f32 %v1381, %v1405
  %v1430 = vadd.f32 %v1382, %v1406
  %v1431 = vadd.f32 %v1383, %v1407
  %v1432 = vadd.f32 %v1384, %v1408
  %v1433 = vadd.f32 %v1385, %v1409
  %v1434 = vmul.f32 %v101, 0.21300554
  %v1435 = vmul.f32 %v102, 0.21300554
  %v1436 = vmul.f32 %v103, 0.21300554
  %v1437 = vmul.f32 %v104, 0.21300554
  %v1438 = vmul.f32 %v105, 0.21300554
  %v1439 = vmul.f32 %v106, 0.21300554
  %v1440 = vadd.f32 %v1410, %v1344
  %v1441 = vadd.f32 %v1411, %v1345
  %v1442 = vadd.f32 %v1412, %v1346
  %v1443 = vadd.f32 %v1413, %v1347
  %v1444 = vadd.f32 %v1414, %v1348
  %v1445 = vadd.f32 %v1415, %v1349
  %v1446 = vadd.f32 %v1416, %v1350
  %v1447 = vadd.f32 %v1417, %v1351
  %v1448 = vadd.f32 %v1418, %v1352
  %v1449 = vadd.f32 %v1419, %v1353
  %v1450 = vadd.f32 %v1420, %v1354
  %v1451 = vadd.f32 %v1421, %v1355
  %v1452 = vadd.f32 %v1422, %v1356
  %v1453 = vadd.f32 %v1423, %v1357
  %v1454 = vadd.f32 %v1424, %v1358
  %v1455 = vadd.f32 %v1425, %v1359
  %v1456 = vadd.f32 %v1426, %v1360
  %v1457 = vadd.f32 %v1427, %v1361
  %v1458 = vadd.f32 %v1428, %v1434
  %v1459 = vadd.f32 %v1429, %v1435
  %v1460 = vadd.f32 %v1430, %v1436
  %v1461 = vadd.f32 %v1431, %v1437
  %v1462 = vadd.f32 %v1432, %v1438
  %v1463 = vadd.f32 %v1433, %v1439
  %v1464 = vmul.f32 %v98, 0.10936069
  %v1465 = vmul.f32 %v99, 0.10936069
  %v1466 = vmul.f32 %v100, 0.10936069
  %v1467 = vmul.f32 %v101, 0.10936069
  %v1468 = vmul.f32 %v102, 0.10936069
  %v1469 = vmul.f32 %v103, 0.10936069
  %v1470 = vmul.f32 %v104, 0.10936069
  %v1471 = vmul.f32 %v105, 0.10936069
  %v1472 = vmul.f32 %v106, 0.10936069
  %v1473 = vmul.f32 %v107, 0.10936069
  %v1474 = vmul.f32 %v108, 0.10936069
  %v1475 = vmul.f32 %v109, 0.10936069
  %v1476 = vadd.f32 %v1440, %v1302
  %v1477 = vadd.f32 %v1441, %v1303
  %v1478 = vadd.f32 %v1442, %v1304
  %v1479 = vadd.f32 %v1443, %v1305
  %v1480 = vadd.f32 %v1444, %v1306
  %v1481 = vadd.f32 %v1445, %v1307
  %v1482 = vadd.f32 %v1446, %v1308
  %v1483 = vadd.f32 %v1447, %v1309
  %v1484 = vadd.f32 %v1448, %v1310
  %v1485 = vadd.f32 %v1449, %v1311
  %v1486 = vadd.f32 %v1450, %v1312
  %v1487 = vadd.f32 %v1451, %v1313
  %v1488 = vadd.f32 %v1452, %v1464
  %v1489 = vadd.f32 %v1453, %v1465
  %v1490 = vadd.f32 %v1454, %v1466
  %v1491 = vadd.f32 %v1455, %v1467
  %v1492 = vadd.f32 %v1456, %v1468
  %v1493 = vadd.f32 %v1457, %v1469
  %v1494 = vadd.f32 %v1458, %v1470
  %v1495 = vadd.f32 %v1459, %v1471
  %v1496 = vadd.f32 %v1460, %v1472
  %v1497 = vadd.f32 %v1461, %v1473
  %v1498 = vadd.f32 %v1462, %v1474
  %v1499 = vadd.f32 %v1463, %v1475
  %v1500 = vmul.f32 %v95, 0.036000773
  %v1501 = vmul.f32 %v96, 0.036000773
  %v1502 = vmul.f32 %v97, 0.036000773
  %v1503 = vmul.f32 %v98, 0.036000773
  %v1504 = vmul.f32 %v99, 0.036000773
  %v1505 = vmul.f32 %v100, 0.036000773
  %v1506 = vmul.f32 %v101, 0.036000773
  %v1507 = vmul.f32 %v102, 0.036000773
  %v1508 = vmul.f32 %v103, 0.036000773
  %v1509 = vmul.f32 %v104, 0.036000773
  %v1510 = vmul.f32 %v105, 0.036000773
  %v1511 = vmul.f32 %v106, 0.036000773
  %v1512 = vmul.f32 %v107, 0.036000773
  %v1513 = vmul.f32 %v108, 0.036000773
  %v1514 = vmul.f32 %v109, 0.036000773
  %v1515 = vmul.f32 %v110, 0.036000773
  %v1516 = vmul.f32 %v111, 0.036000773
  %v1517 = vmul.f32 %v112, 0.036000773
  %v1518 = vadd.f32 %v1476, %v1260
  %v1519 = vadd.f32 %v1477, %v1261
  %v1520 = vadd.f32 %v1478, %v1262
  %v1521 = vadd.f32 %v1479, %v1263
  %v1522 = vadd.f32 %v1480, %v1264
  %v1523 = vadd.f32 %v1481, %v1265
  %v1524 = vadd.f32 %v1482, %v1500
  %v1525 = vadd.f32 %v1483, %v1501
  %v1526 = vadd.f32 %v1484, %v1502
  %v1527 = vadd.f32 %v1485, %v1503
  %v1528 = vadd.f32 %v1486, %v1504
  %v1529 = vadd.f32 %v1487, %v1505
  %v1530 = vadd.f32 %v1488, %v1506
  %v1531 = vadd.f32 %v1489, %v1507
  %v1532 = vadd.f32 %v1490, %v1508
  %v1533 = vadd.f32 %v1491, %v1509
  %v1534 = vadd.f32 %v1492, %v1510
  %v1535 = vadd.f32 %v1493, %v1511
  %v1536 = vadd.f32 %v1494, %v1512
  %v1537 = vadd.f32 %v1495, %v1513
  %v1538 = vadd.f32 %v1496, %v1514
  %v1539 = vadd.f32 %v1497, %v1515
  %v1540 = vadd.f32 %v1498, %v1516
  %v1541 = vadd.f32 %v1499, %v1517
  %v1542 = vmul.f32 %v92, 0.007598758
  %v1543 = vmul.f32 %v93, 0.007598758
  %v1544 = vmul.f32 %v94, 0.007598758
  %v1545 = vmul.f32 %v95, 0.007598758
  %v1546 = vmul.f32 %v96, 0.007598758
  %v1547 = vmul.f32 %v97, 0.007598758
  %v1548 = vmul.f32 %v98, 0.007598758
  %v1549 = vmul.f32 %v99, 0.007598758
  %v1550 = vmul.f32 %v100, 0.007598758
  %v1551 = vmul.f32 %v101, 0.007598758
  %v1552 = vmul.f32 %v102, 0.007598758
  %v1553 = vmul.f32 %v103, 0.007598758
  %v1554 = vmul.f32 %v104, 0.007598758
  %v1555 = vmul.f32 %v105, 0.007598758
  %v1556 = vmul.f32 %v106, 0.007598758
  %v1557 = vmul.f32 %v107, 0.007598758
  %v1558 = vmul.f32 %v108, 0.007598758
  %v1559 = vmul.f32 %v109, 0.007598758
  %v1560 = vmul.f32 %v110, 0.007598758
  %v1561 = vmul.f32 %v111, 0.007598758
  %v1562 = vmul.f32 %v112, 0.007598758
  %v1563 = vmul.f32 %v113, 0.007598758
  %v1564 = vmul.f32 %v114, 0.007598758
  %v1565 = vmul.f32 %v115, 0.007598758
  %v1566 = vadd.f32 %v1518, %v1542
  %v1567 = vadd.f32 %v1519, %v1543
  %v1568 = vadd.f32 %v1520, %v1544
  %v1569 = vadd.f32 %v1521, %v1545
  %v1570 = vadd.f32 %v1522, %v1546
  %v1571 = vadd.f32 %v1523, %v1547
  %v1572 = vadd.f32 %v1524, %v1548
  %v1573 = vadd.f32 %v1525, %v1549
  %v1574 = vadd.f32 %v1526, %v1550
  %v1575 = vadd.f32 %v1527, %v1551
  %v1576 = vadd.f32 %v1528, %v1552
  %v1577 = vadd.f32 %v1529, %v1553
  %v1578 = vadd.f32 %v1530, %v1554
  %v1579 = vadd.f32 %v1531, %v1555
  %v1580 = vadd.f32 %v1532, %v1556
  %v1581 = vadd.f32 %v1533, %v1557
  %v1582 = vadd.f32 %v1534, %v1558
  %v1583 = vadd.f32 %v1535, %v1559
  %v1584 = vadd.f32 %v1536, %v1560
  %v1585 = vadd.f32 %v1537, %v1561
  %v1586 = vadd.f32 %v1538, %v1562
  %v1587 = vadd.f32 %v1539, %v1563
  %v1588 = vadd.f32 %v1540, %v1564
  %v1589 = vadd.f32 %v1541, %v1565
  %v1590 = vmul.f32 %v95, 0.0010283801
  %v1591 = vmul.f32 %v96, 0.0010283801
  %v1592 = vmul.f32 %v97, 0.0010283801
  %v1593 = vmul.f32 %v98, 0.0010283801
  %v1594 = vmul.f32 %v99, 0.0010283801
  %v1595 = vmul.f32 %v100, 0.0010283801
  %v1596 = vmul.f32 %v101, 0.0010283801
  %v1597 = vmul.f32 %v102, 0.0010283801
  %v1598 = vmul.f32 %v103, 0.0010283801
  %v1599 = vmul.f32 %v104, 0.0010283801
  %v1600 = vmul.f32 %v105, 0.0010283801
  %v1601 = vmul.f32 %v106, 0.0010283801
  %v1602 = vmul.f32 %v107, 0.0010283801
  %v1603 = vmul.f32 %v108, 0.0010283801
  %v1604 = vmul.f32 %v109, 0.0010283801
  %v1605 = vmul.f32 %v110, 0.0010283801
  %v1606 = vmul.f32 %v111, 0.0010283801
  %v1607 = vmul.f32 %v112, 0.0010283801
  %v1608 = vmul.f32 %v113, 0.0010283801
  %v1609 = vmul.f32 %v114, 0.0010283801
  %v1610 = vmul.f32 %v115, 0.0010283801
  %v1611 = vmul.f32 %v116, 0.0010283801
  %v1612 = vmul.f32 %v117, 0.0010283801
  %v1613 = vmul.f32 %v118, 0.0010283801
  %v1614 = vadd.f32 %v1566, %v1590
  %v1615 = vadd.f32 %v1567, %v1591
  %v1616 = vadd.f32 %v1568, %v1592
  %v1617 = vadd.f32 %v1569, %v1593
  %v1618 = vadd.f32 %v1570, %v1594
  %v1619 = vadd.f32 %v1571, %v1595
  %v1620 = vadd.f32 %v1572, %v1596
  %v1621 = vadd.f32 %v1573, %v1597
  %v1622 = vadd.f32 %v1574, %v1598
  %v1623 = vadd.f32 %v1575, %v1599
  %v1624 = vadd.f32 %v1576, %v1600
  %v1625 = vadd.f32 %v1577, %v1601
  %v1626 = vadd.f32 %v1578, %v1602
  %v1627 = vadd.f32 %v1579, %v1603
  %v1628 = vadd.f32 %v1580, %v1604
  %v1629 = vadd.f32 %v1581, %v1605
  %v1630 = vadd.f32 %v1582, %v1606
  %v1631 = vadd.f32 %v1583, %v1607
  %v1632 = vadd.f32 %v1584, %v1608
  %v1633 = vadd.f32 %v1585, %v1609
  %v1634 = vadd.f32 %v1586, %v1610
  %v1635 = vadd.f32 %v1587, %v1611
  %v1636 = vadd.f32 %v1588, %v1612
  %v1637 = vadd.f32 %v1589, %v1613
  %v1638 = vmul.f32 %v1614, 0.0010283801
  %v1639 = vmul.f32 %v1617, 0.0010283801
  %v1640 = vmul.f32 %v1620, 0.0010283801
  %v1641 = vmul.f32 %v1623, 0.0010283801
  %v1642 = vmul.f32 %v1626, 0.0010283801
  %v1643 = vmul.f32 %v1629, 0.0010283801
  %v1644 = vmul.f32 %v1632, 0.0010283801
  %v1645 = vmul.f32 %v1635, 0.0010283801
  %v1646 = vmul.f32 %v1614, 0.007598758
  %v1647 = vmul.f32 %v1615, 0.007598758
  %v1648 = vmul.f32 %v1617, 0.007598758
  %v1649 = vmul.f32 %v1618, 0.007598758
  %v1650 = vmul.f32 %v1620, 0.007598758
  %v1651 = vmul.f32 %v1621, 0.007598758
  %v1652 = vmul.f32 %v1623, 0.007598758
  %v1653 = vmul.f32 %v1624, 0.007598758
  %v1654 = vmul.f32 %v1626, 0.007598758
  %v1655 = vmul.f32 %v1627, 0.007598758
  %v1656 = vmul.f32 %v1629, 0.007598758
  %v1657 = vmul.f32 %v1630, 0.007598758
  %v1658 = vmul.f32 %v1632, 0.007598758
  %v1659 = vmul.f32 %v1633, 0.007598758
  %v1660 = vmul.f32 %v1635, 0.007598758
  %v1661 = vmul.f32 %v1636, 0.007598758
  %v1678 = vrot.slane %v1646, 1
  %v1679 = vrot.slane %v1647, 1
  %v1680 = vsel %vm627, %v1678, %v1679
  %v1681 = vrot.slane %v1648, 1
  %v1682 = vrot.slane %v1649, 1
  %v1683 = vsel %vm627, %v1681, %v1682
  %v1684 = vrot.slane %v1650, 1
  %v1685 = vrot.slane %v1651, 1
  %v1686 = vsel %vm627, %v1684, %v1685
  %v1687 = vrot.slane %v1652, 1
  %v1688 = vrot.slane %v1653, 1
  %v1689 = vsel %vm627, %v1687, %v1688
  %v1690 = vrot.slane %v1654, 1
  %v1691 = vrot.slane %v1655, 1
  %v1692 = vsel %vm627, %v1690, %v1691
  %v1693 = vrot.slane %v1656, 1
  %v1694 = vrot.slane %v1657, 1
  %v1695 = vsel %vm627, %v1693, %v1694
  %v1696 = vrot.slane %v1658, 1
  %v1697 = vrot.slane %v1659, 1
  %v1698 = vsel %vm627, %v1696, %v1697
  %v1699 = vrot.slane %v1660, 1
  %v1700 = vrot.slane %v1661, 1
  %v1701 = vsel %vm627, %v1699, %v1700
  %v1710 = vadd.f32 %v1638, %v1680
  %v1711 = vadd.f32 %v1639, %v1683
  %v1712 = vadd.f32 %v1640, %v1686
  %v1713 = vadd.f32 %v1641, %v1689
  %v1714 = vadd.f32 %v1642, %v1692
  %v1715 = vadd.f32 %v1643, %v1695
  %v1716 = vadd.f32 %v1644, %v1698
  %v1717 = vadd.f32 %v1645, %v1701
  %v1718 = vmul.f32 %v1614, 0.036000773
  %v1719 = vmul.f32 %v1615, 0.036000773
  %v1720 = vmul.f32 %v1617, 0.036000773
  %v1721 = vmul.f32 %v1618, 0.036000773
  %v1722 = vmul.f32 %v1620, 0.036000773
  %v1723 = vmul.f32 %v1621, 0.036000773
  %v1724 = vmul.f32 %v1623, 0.036000773
  %v1725 = vmul.f32 %v1624, 0.036000773
  %v1726 = vmul.f32 %v1626, 0.036000773
  %v1727 = vmul.f32 %v1627, 0.036000773
  %v1728 = vmul.f32 %v1629, 0.036000773
  %v1729 = vmul.f32 %v1630, 0.036000773
  %v1730 = vmul.f32 %v1632, 0.036000773
  %v1731 = vmul.f32 %v1633, 0.036000773
  %v1732 = vmul.f32 %v1635, 0.036000773
  %v1733 = vmul.f32 %v1636, 0.036000773
  %v1750 = vrot.slane %v1718, 2
  %v1751 = vrot.slane %v1719, 2
  %v1752 = vsel %vm700, %v1750, %v1751
  %v1753 = vrot.slane %v1720, 2
  %v1754 = vrot.slane %v1721, 2
  %v1755 = vsel %vm700, %v1753, %v1754
  %v1756 = vrot.slane %v1722, 2
  %v1757 = vrot.slane %v1723, 2
  %v1758 = vsel %vm700, %v1756, %v1757
  %v1759 = vrot.slane %v1724, 2
  %v1760 = vrot.slane %v1725, 2
  %v1761 = vsel %vm700, %v1759, %v1760
  %v1762 = vrot.slane %v1726, 2
  %v1763 = vrot.slane %v1727, 2
  %v1764 = vsel %vm700, %v1762, %v1763
  %v1765 = vrot.slane %v1728, 2
  %v1766 = vrot.slane %v1729, 2
  %v1767 = vsel %vm700, %v1765, %v1766
  %v1768 = vrot.slane %v1730, 2
  %v1769 = vrot.slane %v1731, 2
  %v1770 = vsel %vm700, %v1768, %v1769
  %v1771 = vrot.slane %v1732, 2
  %v1772 = vrot.slane %v1733, 2
  %v1773 = vsel %vm700, %v1771, %v1772
  %v1782 = vadd.f32 %v1710, %v1752
  %v1783 = vadd.f32 %v1711, %v1755
  %v1784 = vadd.f32 %v1712, %v1758
  %v1785 = vadd.f32 %v1713, %v1761
  %v1786 = vadd.f32 %v1714, %v1764
  %v1787 = vadd.f32 %v1715, %v1767
  %v1788 = vadd.f32 %v1716, %v1770
  %v1789 = vadd.f32 %v1717, %v1773
  %v1790 = vmul.f32 %v1614, 0.10936069
  %v1791 = vmul.f32 %v1615, 0.10936069
  %v1792 = vmul.f32 %v1617, 0.10936069
  %v1793 = vmul.f32 %v1618, 0.10936069
  %v1794 = vmul.f32 %v1620, 0.10936069
  %v1795 = vmul.f32 %v1621, 0.10936069
  %v1796 = vmul.f32 %v1623, 0.10936069
  %v1797 = vmul.f32 %v1624, 0.10936069
  %v1798 = vmul.f32 %v1626, 0.10936069
  %v1799 = vmul.f32 %v1627, 0.10936069
  %v1800 = vmul.f32 %v1629, 0.10936069
  %v1801 = vmul.f32 %v1630, 0.10936069
  %v1802 = vmul.f32 %v1632, 0.10936069
  %v1803 = vmul.f32 %v1633, 0.10936069
  %v1804 = vmul.f32 %v1635, 0.10936069
  %v1805 = vmul.f32 %v1636, 0.10936069
  %v1822 = vrot.slane %v1790, 3
  %v1823 = vrot.slane %v1791, 3
  %v1824 = vsel %vm773, %v1822, %v1823
  %v1825 = vrot.slane %v1792, 3
  %v1826 = vrot.slane %v1793, 3
  %v1827 = vsel %vm773, %v1825, %v1826
  %v1828 = vrot.slane %v1794, 3
  %v1829 = vrot.slane %v1795, 3
  %v1830 = vsel %vm773, %v1828, %v1829
  %v1831 = vrot.slane %v1796, 3
  %v1832 = vrot.slane %v1797, 3
  %v1833 = vsel %vm773, %v1831, %v1832
  %v1834 = vrot.slane %v1798, 3
  %v1835 = vrot.slane %v1799, 3
  %v1836 = vsel %vm773, %v1834, %v1835
  %v1837 = vrot.slane %v1800, 3
  %v1838 = vrot.slane %v1801, 3
  %v1839 = vsel %vm773, %v1837, %v1838
  %v1840 = vrot.slane %v1802, 3
  %v1841 = vrot.slane %v1803, 3
  %v1842 = vsel %vm773, %v1840, %v1841
  %v1843 = vrot.slane %v1804, 3
  %v1844 = vrot.slane %v1805, 3
  %v1845 = vsel %vm773, %v1843, %v1844
  %v1854 = vadd.f32 %v1782, %v1824
  %v1855 = vadd.f32 %v1783, %v1827
  %v1856 = vadd.f32 %v1784, %v1830
  %v1857 = vadd.f32 %v1785, %v1833
  %v1858 = vadd.f32 %v1786, %v1836
  %v1859 = vadd.f32 %v1787, %v1839
  %v1860 = vadd.f32 %v1788, %v1842
  %v1861 = vadd.f32 %v1789, %v1845
  %v1862 = vmul.f32 %v1614, 0.21300554
  %v1863 = vmul.f32 %v1615, 0.21300554
  %v1864 = vmul.f32 %v1617, 0.21300554
  %v1865 = vmul.f32 %v1618, 0.21300554
  %v1866 = vmul.f32 %v1620, 0.21300554
  %v1867 = vmul.f32 %v1621, 0.21300554
  %v1868 = vmul.f32 %v1623, 0.21300554
  %v1869 = vmul.f32 %v1624, 0.21300554
  %v1870 = vmul.f32 %v1626, 0.21300554
  %v1871 = vmul.f32 %v1627, 0.21300554
  %v1872 = vmul.f32 %v1629, 0.21300554
  %v1873 = vmul.f32 %v1630, 0.21300554
  %v1874 = vmul.f32 %v1632, 0.21300554
  %v1875 = vmul.f32 %v1633, 0.21300554
  %v1876 = vmul.f32 %v1635, 0.21300554
  %v1877 = vmul.f32 %v1636, 0.21300554
  %v1894 = vrot.slane %v1862, 4
  %v1895 = vrot.slane %v1863, 4
  %v1896 = vsel %vm846, %v1894, %v1895
  %v1897 = vrot.slane %v1864, 4
  %v1898 = vrot.slane %v1865, 4
  %v1899 = vsel %vm846, %v1897, %v1898
  %v1900 = vrot.slane %v1866, 4
  %v1901 = vrot.slane %v1867, 4
  %v1902 = vsel %vm846, %v1900, %v1901
  %v1903 = vrot.slane %v1868, 4
  %v1904 = vrot.slane %v1869, 4
  %v1905 = vsel %vm846, %v1903, %v1904
  %v1906 = vrot.slane %v1870, 4
  %v1907 = vrot.slane %v1871, 4
  %v1908 = vsel %vm846, %v1906, %v1907
  %v1909 = vrot.slane %v1872, 4
  %v1910 = vrot.slane %v1873, 4
  %v1911 = vsel %vm846, %v1909, %v1910
  %v1912 = vrot.slane %v1874, 4
  %v1913 = vrot.slane %v1875, 4
  %v1914 = vsel %vm846, %v1912, %v1913
  %v1915 = vrot.slane %v1876, 4
  %v1916 = vrot.slane %v1877, 4
  %v1917 = vsel %vm846, %v1915, %v1916
  %v1926 = vadd.f32 %v1854, %v1896
  %v1927 = vadd.f32 %v1855, %v1899
  %v1928 = vadd.f32 %v1856, %v1902
  %v1929 = vadd.f32 %v1857, %v1905
  %v1930 = vadd.f32 %v1858, %v1908
  %v1931 = vadd.f32 %v1859, %v1911
  %v1932 = vadd.f32 %v1860, %v1914
  %v1933 = vadd.f32 %v1861, %v1917
  %v1934 = vmul.f32 %v1614, 0.26601171
  %v1935 = vmul.f32 %v1615, 0.26601171
  %v1936 = vmul.f32 %v1617, 0.26601171
  %v1937 = vmul.f32 %v1618, 0.26601171
  %v1938 = vmul.f32 %v1620, 0.26601171
  %v1939 = vmul.f32 %v1621, 0.26601171
  %v1940 = vmul.f32 %v1623, 0.26601171
  %v1941 = vmul.f32 %v1624, 0.26601171
  %v1942 = vmul.f32 %v1626, 0.26601171
  %v1943 = vmul.f32 %v1627, 0.26601171
  %v1944 = vmul.f32 %v1629, 0.26601171
  %v1945 = vmul.f32 %v1630, 0.26601171
  %v1946 = vmul.f32 %v1632, 0.26601171
  %v1947 = vmul.f32 %v1633, 0.26601171
  %v1948 = vmul.f32 %v1635, 0.26601171
  %v1949 = vmul.f32 %v1636, 0.26601171
  %v1966 = vrot.slane %v1934, 5
  %v1967 = vrot.slane %v1935, 5
  %v1968 = vsel %vm919, %v1966, %v1967
  %v1969 = vrot.slane %v1936, 5
  %v1970 = vrot.slane %v1937, 5
  %v1971 = vsel %vm919, %v1969, %v1970
  %v1972 = vrot.slane %v1938, 5
  %v1973 = vrot.slane %v1939, 5
  %v1974 = vsel %vm919, %v1972, %v1973
  %v1975 = vrot.slane %v1940, 5
  %v1976 = vrot.slane %v1941, 5
  %v1977 = vsel %vm919, %v1975, %v1976
  %v1978 = vrot.slane %v1942, 5
  %v1979 = vrot.slane %v1943, 5
  %v1980 = vsel %vm919, %v1978, %v1979
  %v1981 = vrot.slane %v1944, 5
  %v1982 = vrot.slane %v1945, 5
  %v1983 = vsel %vm919, %v1981, %v1982
  %v1984 = vrot.slane %v1946, 5
  %v1985 = vrot.slane %v1947, 5
  %v1986 = vsel %vm919, %v1984, %v1985
  %v1987 = vrot.slane %v1948, 5
  %v1988 = vrot.slane %v1949, 5
  %v1989 = vsel %vm919, %v1987, %v1988
  %v1998 = vadd.f32 %v1926, %v1968
  %v1999 = vadd.f32 %v1927, %v1971
  %v2000 = vadd.f32 %v1928, %v1974
  %v2001 = vadd.f32 %v1929, %v1977
  %v2002 = vadd.f32 %v1930, %v1980
  %v2003 = vadd.f32 %v1931, %v1983
  %v2004 = vadd.f32 %v1932, %v1986
  %v2005 = vadd.f32 %v1933, %v1989
  %v2006 = vrot.slane %v1862, 6
  %v2007 = vrot.slane %v1863, 6
  %v2008 = vsel %vm960, %v2006, %v2007
  %v2009 = vrot.slane %v1864, 6
  %v2010 = vrot.slane %v1865, 6
  %v2011 = vsel %vm960, %v2009, %v2010
  %v2012 = vrot.slane %v1866, 6
  %v2013 = vrot.slane %v1867, 6
  %v2014 = vsel %vm960, %v2012, %v2013
  %v2015 = vrot.slane %v1868, 6
  %v2016 = vrot.slane %v1869, 6
  %v2017 = vsel %vm960, %v2015, %v2016
  %v2018 = vrot.slane %v1870, 6
  %v2019 = vrot.slane %v1871, 6
  %v2020 = vsel %vm960, %v2018, %v2019
  %v2021 = vrot.slane %v1872, 6
  %v2022 = vrot.slane %v1873, 6
  %v2023 = vsel %vm960, %v2021, %v2022
  %v2024 = vrot.slane %v1874, 6
  %v2025 = vrot.slane %v1875, 6
  %v2026 = vsel %vm960, %v2024, %v2025
  %v2027 = vrot.slane %v1876, 6
  %v2028 = vrot.slane %v1877, 6
  %v2029 = vsel %vm960, %v2027, %v2028
  %v2038 = vadd.f32 %v1998, %v2008
  %v2039 = vadd.f32 %v1999, %v2011
  %v2040 = vadd.f32 %v2000, %v2014
  %v2041 = vadd.f32 %v2001, %v2017
  %v2042 = vadd.f32 %v2002, %v2020
  %v2043 = vadd.f32 %v2003, %v2023
  %v2044 = vadd.f32 %v2004, %v2026
  %v2045 = vadd.f32 %v2005, %v2029
  %v2046 = vrot.slane %v1790, 7
  %v2047 = vrot.slane %v1791, 7
  %v2048 = vsel %vm1001, %v2046, %v2047
  %v2049 = vrot.slane %v1792, 7
  %v2050 = vrot.slane %v1793, 7
  %v2051 = vsel %vm1001, %v2049, %v2050
  %v2052 = vrot.slane %v1794, 7
  %v2053 = vrot.slane %v1795, 7
  %v2054 = vsel %vm1001, %v2052, %v2053
  %v2055 = vrot.slane %v1796, 7
  %v2056 = vrot.slane %v1797, 7
  %v2057 = vsel %vm1001, %v2055, %v2056
  %v2058 = vrot.slane %v1798, 7
  %v2059 = vrot.slane %v1799, 7
  %v2060 = vsel %vm1001, %v2058, %v2059
  %v2061 = vrot.slane %v1800, 7
  %v2062 = vrot.slane %v1801, 7
  %v2063 = vsel %vm1001, %v2061, %v2062
  %v2064 = vrot.slane %v1802, 7
  %v2065 = vrot.slane %v1803, 7
  %v2066 = vsel %vm1001, %v2064, %v2065
  %v2067 = vrot.slane %v1804, 7
  %v2068 = vrot.slane %v1805, 7
  %v2069 = vsel %vm1001, %v2067, %v2068
  %v2078 = vadd.f32 %v2038, %v2048
  %v2079 = vadd.f32 %v2039, %v2051
  %v2080 = vadd.f32 %v2040, %v2054
  %v2081 = vadd.f32 %v2041, %v2057
  %v2082 = vadd.f32 %v2042, %v2060
  %v2083 = vadd.f32 %v2043, %v2063
  %v2084 = vadd.f32 %v2044, %v2066
  %v2085 = vadd.f32 %v2045, %v2069
  %v2086 = vadd.f32 %v2078, %v1719
  %v2087 = vadd.f32 %v2079, %v1721
  %v2088 = vadd.f32 %v2080, %v1723
  %v2089 = vadd.f32 %v2081, %v1725
  %v2090 = vadd.f32 %v2082, %v1727
  %v2091 = vadd.f32 %v2083, %v1729
  %v2092 = vadd.f32 %v2084, %v1731
  %v2093 = vadd.f32 %v2085, %v1733
  %v2094 = vmul.f32 %v1616, 0.007598758
  %v2095 = vmul.f32 %v1619, 0.007598758
  %v2096 = vmul.f32 %v1622, 0.007598758
  %v2097 = vmul.f32 %v1625, 0.007598758
  %v2098 = vmul.f32 %v1628, 0.007598758
  %v2099 = vmul.f32 %v1631, 0.007598758
  %v2100 = vmul.f32 %v1634, 0.007598758
  %v2101 = vmul.f32 %v1637, 0.007598758
  %v2110 = vrot.slane %v2094, 1
  %v2111 = vsel %vm627, %v1679, %v2110
  %v2112 = vrot.slane %v2095, 1
  %v2113 = vsel %vm627, %v1682, %v2112
  %v2114 = vrot.slane %v2096, 1
  %v2115 = vsel %vm627, %v1685, %v2114
  %v2116 = vrot.slane %v2097, 1
  %v2117 = vsel %vm627, %v1688, %v2116
  %v2118 = vrot.slane %v2098, 1
  %v2119 = vsel %vm627, %v1691, %v2118
  %v2120 = vrot.slane %v2099, 1
  %v2121 = vsel %vm627, %v1694, %v2120
  %v2122 = vrot.slane %v2100, 1
  %v2123 = vsel %vm627, %v1697, %v2122
  %v2124 = vrot.slane %v2101, 1
  %v2125 = vsel %vm627, %v1700, %v2124
  %v2134 = vadd.f32 %v2086, %v2111
  %v2135 = vadd.f32 %v2087, %v2113
  %v2136 = vadd.f32 %v2088, %v2115
  %v2137 = vadd.f32 %v2089, %v2117
  %v2138 = vadd.f32 %v2090, %v2119
  %v2139 = vadd.f32 %v2091, %v2121
  %v2140 = vadd.f32 %v2092, %v2123
  %v2141 = vadd.f32 %v2093, %v2125
  %v2142 = vmul.f32 %v1615, 0.0010283801
  %v2143 = vmul.f32 %v1616, 0.0010283801
  %v2144 = vmul.f32 %v1618, 0.0010283801
  %v2145 = vmul.f32 %v1619, 0.0010283801
  %v2146 = vmul.f32 %v1621, 0.0010283801
  %v2147 = vmul.f32 %v1622, 0.0010283801
  %v2148 = vmul.f32 %v1624, 0.0010283801
  %v2149 = vmul.f32 %v1625, 0.0010283801
  %v2150 = vmul.f32 %v1627, 0.0010283801
  %v2151 = vmul.f32 %v1628, 0.0010283801
  %v2152 = vmul.f32 %v1630, 0.0010283801
  %v2153 = vmul.f32 %v1631, 0.0010283801
  %v2154 = vmul.f32 %v1633, 0.0010283801
  %v2155 = vmul.f32 %v1634, 0.0010283801
  %v2156 = vmul.f32 %v1636, 0.0010283801
  %v2157 = vmul.f32 %v1637, 0.0010283801
  %v2174 = vrot.slane %v2142, 2
  %v2175 = vrot.slane %v2143, 2
  %v2176 = vsel %vm700, %v2174, %v2175
  %v2177 = vrot.slane %v2144, 2
  %v2178 = vrot.slane %v2145, 2
  %v2179 = vsel %vm700, %v2177, %v2178
  %v2180 = vrot.slane %v2146, 2
  %v2181 = vrot.slane %v2147, 2
  %v2182 = vsel %vm700, %v2180, %v2181
  %v2183 = vrot.slane %v2148, 2
  %v2184 = vrot.slane %v2149, 2
  %v2185 = vsel %vm700, %v2183, %v2184
  %v2186 = vrot.slane %v2150, 2
  %v2187 = vrot.slane %v2151, 2
  %v2188 = vsel %vm700, %v2186, %v2187
  %v2189 = vrot.slane %v2152, 2
  %v2190 = vrot.slane %v2153, 2
  %v2191 = vsel %vm700, %v2189, %v2190
  %v2192 = vrot.slane %v2154, 2
  %v2193 = vrot.slane %v2155, 2
  %v2194 = vsel %vm700, %v2192, %v2193
  %v2195 = vrot.slane %v2156, 2
  %v2196 = vrot.slane %v2157, 2
  %v2197 = vsel %vm700, %v2195, %v2196
  %v2206 = vadd.f32 %v2134, %v2176
  %v2207 = vadd.f32 %v2135, %v2179
  %v2208 = vadd.f32 %v2136, %v2182
  %v2209 = vadd.f32 %v2137, %v2185
  %v2210 = vadd.f32 %v2138, %v2188
  %v2211 = vadd.f32 %v2139, %v2191
  %v2212 = vadd.f32 %v2140, %v2194
  %v2213 = vadd.f32 %v2141, %v2197
  %v2214 = vmul.f32 %v11, %v11
  %v2215 = vmul.f32 %v12, %v12
  %v2216 = vmul.f32 %v13, %v13
  %v2217 = vmul.f32 %v14, %v14
  %v2218 = vmul.f32 %v15, %v15
  %v2219 = vmul.f32 %v16, %v16
  %v2220 = vmul.f32 %v17, %v17
  %v2221 = vmul.f32 %v18, %v18
  %v2222 = vmul.f32 %v19, %v19
  %v2223 = vmul.f32 %v20, %v20
  %v2224 = vmul.f32 %v21, %v21
  %v2225 = vmul.f32 %v22, %v22
  %v2226 = vmul.f32 %v23, %v23
  %v2227 = vmul.f32 %v24, %v24
  %v2228 = vmul.f32 %v25, %v25
  %v2229 = vmul.f32 %v26, %v26
  %v2230 = vmul.f32 %v27, %v27
  %v2231 = vmul.f32 %v28, %v28
  %v2232 = vmul.f32 %v29, %v29
  %v2233 = vmul.f32 %v30, %v30
  %v2234 = vmul.f32 %v31, %v31
  %v2235 = vmul.f32 %v32, %v32
  %v2236 = vmul.f32 %v33, %v33
  %v2237 = vmul.f32 %v34, %v34
  %v2238 = vmul.f32 %v35, %v35
  %v2239 = vmul.f32 %v36, %v36
  %v2240 = vmul.f32 %v37, %v37
  %v2241 = vmul.f32 %v38, %v38
  %v2242 = vmul.f32 %v39, %v39
  %v2243 = vmul.f32 %v40, %v40
  %v2244 = vmul.f32 %v41, %v41
  %v2245 = vmul.f32 %v42, %v42
  %v2246 = vmul.f32 %v43, %v43
  %v2247 = vmul.f32 %v44, %v44
  %v2248 = vmul.f32 %v45, %v45
  %v2249 = vmul.f32 %v46, %v46
  %v2250 = vmul.f32 %v47, %v47
  %v2251 = vmul.f32 %v48, %v48
  %v2252 = vmul.f32 %v49, %v49
  %v2253 = vmul.f32 %v50, %v50
  %v2254 = vmul.f32 %v51, %v51
  %v2255 = vmul.f32 %v52, %v52
  %v2256 = vmul.f32 %v53, %v53
  %v2257 = vmul.f32 %v54, %v54
  %v2258 = vmul.f32 %v55, %v55
  %v2259 = vmul.f32 %v56, %v56
  %v2260 = vmul.f32 %v57, %v57
  %v2261 = vmul.f32 %v58, %v58
  %v2262 = vmul.f32 %v59, %v59
  %v2263 = vmul.f32 %v60, %v60
  %v2264 = vmul.f32 %v61, %v61
  %v2265 = vmul.f32 %v62, %v62
  %v2266 = vmul.f32 %v63, %v63
  %v2267 = vmul.f32 %v64, %v64
  %v2268 = vmul.f32 %v2214, 0.0010283801
  %v2269 = vmul.f32 %v2215, 0.0010283801
  %v2270 = vmul.f32 %v2216, 0.0010283801
  %v2271 = vmul.f32 %v2217, 0.0010283801
  %v2272 = vmul.f32 %v2218, 0.0010283801
  %v2273 = vmul.f32 %v2219, 0.0010283801
  %v2274 = vmul.f32 %v2220, 0.0010283801
  %v2275 = vmul.f32 %v2221, 0.0010283801
  %v2276 = vmul.f32 %v2222, 0.0010283801
  %v2277 = vmul.f32 %v2223, 0.0010283801
  %v2278 = vmul.f32 %v2224, 0.0010283801
  %v2279 = vmul.f32 %v2225, 0.0010283801
  %v2280 = vmul.f32 %v2226, 0.0010283801
  %v2281 = vmul.f32 %v2227, 0.0010283801
  %v2282 = vmul.f32 %v2228, 0.0010283801
  %v2283 = vmul.f32 %v2229, 0.0010283801
  %v2284 = vmul.f32 %v2230, 0.0010283801
  %v2285 = vmul.f32 %v2231, 0.0010283801
  %v2286 = vmul.f32 %v2232, 0.0010283801
  %v2287 = vmul.f32 %v2233, 0.0010283801
  %v2288 = vmul.f32 %v2234, 0.0010283801
  %v2289 = vmul.f32 %v2235, 0.0010283801
  %v2290 = vmul.f32 %v2236, 0.0010283801
  %v2291 = vmul.f32 %v2237, 0.0010283801
  %v2292 = vmul.f32 %v2217, 0.007598758
  %v2293 = vmul.f32 %v2218, 0.007598758
  %v2294 = vmul.f32 %v2219, 0.007598758
  %v2295 = vmul.f32 %v2220, 0.007598758
  %v2296 = vmul.f32 %v2221, 0.007598758
  %v2297 = vmul.f32 %v2222, 0.007598758
  %v2298 = vmul.f32 %v2223, 0.007598758
  %v2299 = vmul.f32 %v2224, 0.007598758
  %v2300 = vmul.f32 %v2225, 0.007598758
  %v2301 = vmul.f32 %v2226, 0.007598758
  %v2302 = vmul.f32 %v2227, 0.007598758
  %v2303 = vmul.f32 %v2228, 0.007598758
  %v2304 = vmul.f32 %v2229, 0.007598758
  %v2305 = vmul.f32 %v2230, 0.007598758
  %v2306 = vmul.f32 %v2231, 0.007598758
  %v2307 = vmul.f32 %v2232, 0.007598758
  %v2308 = vmul.f32 %v2233, 0.007598758
  %v2309 = vmul.f32 %v2234, 0.007598758
  %v2310 = vmul.f32 %v2235, 0.007598758
  %v2311 = vmul.f32 %v2236, 0.007598758
  %v2312 = vmul.f32 %v2237, 0.007598758
  %v2313 = vmul.f32 %v2238, 0.007598758
  %v2314 = vmul.f32 %v2239, 0.007598758
  %v2315 = vmul.f32 %v2240, 0.007598758
  %v2316 = vadd.f32 %v2268, %v2292
  %v2317 = vadd.f32 %v2269, %v2293
  %v2318 = vadd.f32 %v2270, %v2294
  %v2319 = vadd.f32 %v2271, %v2295
  %v2320 = vadd.f32 %v2272, %v2296
  %v2321 = vadd.f32 %v2273, %v2297
  %v2322 = vadd.f32 %v2274, %v2298
  %v2323 = vadd.f32 %v2275, %v2299
  %v2324 = vadd.f32 %v2276, %v2300
  %v2325 = vadd.f32 %v2277, %v2301
  %v2326 = vadd.f32 %v2278, %v2302
  %v2327 = vadd.f32 %v2279, %v2303
  %v2328 = vadd.f32 %v2280, %v2304
  %v2329 = vadd.f32 %v2281, %v2305
  %v2330 = vadd.f32 %v2282, %v2306
  %v2331 = vadd.f32 %v2283, %v2307
  %v2332 = vadd.f32 %v2284, %v2308
  %v2333 = vadd.f32 %v2285, %v2309
  %v2334 = vadd.f32 %v2286, %v2310
  %v2335 = vadd.f32 %v2287, %v2311
  %v2336 = vadd.f32 %v2288, %v2312
  %v2337 = vadd.f32 %v2289, %v2313
  %v2338 = vadd.f32 %v2290, %v2314
  %v2339 = vadd.f32 %v2291, %v2315
  %v2340 = vmul.f32 %v2220, 0.036000773
  %v2341 = vmul.f32 %v2221, 0.036000773
  %v2342 = vmul.f32 %v2222, 0.036000773
  %v2343 = vmul.f32 %v2223, 0.036000773
  %v2344 = vmul.f32 %v2224, 0.036000773
  %v2345 = vmul.f32 %v2225, 0.036000773
  %v2346 = vmul.f32 %v2226, 0.036000773
  %v2347 = vmul.f32 %v2227, 0.036000773
  %v2348 = vmul.f32 %v2228, 0.036000773
  %v2349 = vmul.f32 %v2229, 0.036000773
  %v2350 = vmul.f32 %v2230, 0.036000773
  %v2351 = vmul.f32 %v2231, 0.036000773
  %v2352 = vmul.f32 %v2232, 0.036000773
  %v2353 = vmul.f32 %v2233, 0.036000773
  %v2354 = vmul.f32 %v2234, 0.036000773
  %v2355 = vmul.f32 %v2235, 0.036000773
  %v2356 = vmul.f32 %v2236, 0.036000773
  %v2357 = vmul.f32 %v2237, 0.036000773
  %v2358 = vmul.f32 %v2238, 0.036000773
  %v2359 = vmul.f32 %v2239, 0.036000773
  %v2360 = vmul.f32 %v2240, 0.036000773
  %v2361 = vmul.f32 %v2241, 0.036000773
  %v2362 = vmul.f32 %v2242, 0.036000773
  %v2363 = vmul.f32 %v2243, 0.036000773
  %v2364 = vadd.f32 %v2316, %v2340
  %v2365 = vadd.f32 %v2317, %v2341
  %v2366 = vadd.f32 %v2318, %v2342
  %v2367 = vadd.f32 %v2319, %v2343
  %v2368 = vadd.f32 %v2320, %v2344
  %v2369 = vadd.f32 %v2321, %v2345
  %v2370 = vadd.f32 %v2322, %v2346
  %v2371 = vadd.f32 %v2323, %v2347
  %v2372 = vadd.f32 %v2324, %v2348
  %v2373 = vadd.f32 %v2325, %v2349
  %v2374 = vadd.f32 %v2326, %v2350
  %v2375 = vadd.f32 %v2327, %v2351
  %v2376 = vadd.f32 %v2328, %v2352
  %v2377 = vadd.f32 %v2329, %v2353
  %v2378 = vadd.f32 %v2330, %v2354
  %v2379 = vadd.f32 %v2331, %v2355
  %v2380 = vadd.f32 %v2332, %v2356
  %v2381 = vadd.f32 %v2333, %v2357
  %v2382 = vadd.f32 %v2334, %v2358
  %v2383 = vadd.f32 %v2335, %v2359
  %v2384 = vadd.f32 %v2336, %v2360
  %v2385 = vadd.f32 %v2337, %v2361
  %v2386 = vadd.f32 %v2338, %v2362
  %v2387 = vadd.f32 %v2339, %v2363
  %v2388 = vmul.f32 %v2223, 0.10936069
  %v2389 = vmul.f32 %v2224, 0.10936069
  %v2390 = vmul.f32 %v2225, 0.10936069
  %v2391 = vmul.f32 %v2226, 0.10936069
  %v2392 = vmul.f32 %v2227, 0.10936069
  %v2393 = vmul.f32 %v2228, 0.10936069
  %v2394 = vmul.f32 %v2229, 0.10936069
  %v2395 = vmul.f32 %v2230, 0.10936069
  %v2396 = vmul.f32 %v2231, 0.10936069
  %v2397 = vmul.f32 %v2232, 0.10936069
  %v2398 = vmul.f32 %v2233, 0.10936069
  %v2399 = vmul.f32 %v2234, 0.10936069
  %v2400 = vmul.f32 %v2235, 0.10936069
  %v2401 = vmul.f32 %v2236, 0.10936069
  %v2402 = vmul.f32 %v2237, 0.10936069
  %v2403 = vmul.f32 %v2238, 0.10936069
  %v2404 = vmul.f32 %v2239, 0.10936069
  %v2405 = vmul.f32 %v2240, 0.10936069
  %v2406 = vmul.f32 %v2241, 0.10936069
  %v2407 = vmul.f32 %v2242, 0.10936069
  %v2408 = vmul.f32 %v2243, 0.10936069
  %v2409 = vmul.f32 %v2244, 0.10936069
  %v2410 = vmul.f32 %v2245, 0.10936069
  %v2411 = vmul.f32 %v2246, 0.10936069
  %v2412 = vadd.f32 %v2364, %v2388
  %v2413 = vadd.f32 %v2365, %v2389
  %v2414 = vadd.f32 %v2366, %v2390
  %v2415 = vadd.f32 %v2367, %v2391
  %v2416 = vadd.f32 %v2368, %v2392
  %v2417 = vadd.f32 %v2369, %v2393
  %v2418 = vadd.f32 %v2370, %v2394
  %v2419 = vadd.f32 %v2371, %v2395
  %v2420 = vadd.f32 %v2372, %v2396
  %v2421 = vadd.f32 %v2373, %v2397
  %v2422 = vadd.f32 %v2374, %v2398
  %v2423 = vadd.f32 %v2375, %v2399
  %v2424 = vadd.f32 %v2376, %v2400
  %v2425 = vadd.f32 %v2377, %v2401
  %v2426 = vadd.f32 %v2378, %v2402
  %v2427 = vadd.f32 %v2379, %v2403
  %v2428 = vadd.f32 %v2380, %v2404
  %v2429 = vadd.f32 %v2381, %v2405
  %v2430 = vadd.f32 %v2382, %v2406
  %v2431 = vadd.f32 %v2383, %v2407
  %v2432 = vadd.f32 %v2384, %v2408
  %v2433 = vadd.f32 %v2385, %v2409
  %v2434 = vadd.f32 %v2386, %v2410
  %v2435 = vadd.f32 %v2387, %v2411
  %v2436 = vmul.f32 %v2226, 0.21300554
  %v2437 = vmul.f32 %v2227, 0.21300554
  %v2438 = vmul.f32 %v2228, 0.21300554
  %v2439 = vmul.f32 %v2229, 0.21300554
  %v2440 = vmul.f32 %v2230, 0.21300554
  %v2441 = vmul.f32 %v2231, 0.21300554
  %v2442 = vmul.f32 %v2232, 0.21300554
  %v2443 = vmul.f32 %v2233, 0.21300554
  %v2444 = vmul.f32 %v2234, 0.21300554
  %v2445 = vmul.f32 %v2235, 0.21300554
  %v2446 = vmul.f32 %v2236, 0.21300554
  %v2447 = vmul.f32 %v2237, 0.21300554
  %v2448 = vmul.f32 %v2238, 0.21300554
  %v2449 = vmul.f32 %v2239, 0.21300554
  %v2450 = vmul.f32 %v2240, 0.21300554
  %v2451 = vmul.f32 %v2241, 0.21300554
  %v2452 = vmul.f32 %v2242, 0.21300554
  %v2453 = vmul.f32 %v2243, 0.21300554
  %v2454 = vmul.f32 %v2244, 0.21300554
  %v2455 = vmul.f32 %v2245, 0.21300554
  %v2456 = vmul.f32 %v2246, 0.21300554
  %v2457 = vmul.f32 %v2247, 0.21300554
  %v2458 = vmul.f32 %v2248, 0.21300554
  %v2459 = vmul.f32 %v2249, 0.21300554
  %v2460 = vadd.f32 %v2412, %v2436
  %v2461 = vadd.f32 %v2413, %v2437
  %v2462 = vadd.f32 %v2414, %v2438
  %v2463 = vadd.f32 %v2415, %v2439
  %v2464 = vadd.f32 %v2416, %v2440
  %v2465 = vadd.f32 %v2417, %v2441
  %v2466 = vadd.f32 %v2418, %v2442
  %v2467 = vadd.f32 %v2419, %v2443
  %v2468 = vadd.f32 %v2420, %v2444
  %v2469 = vadd.f32 %v2421, %v2445
  %v2470 = vadd.f32 %v2422, %v2446
  %v2471 = vadd.f32 %v2423, %v2447
  %v2472 = vadd.f32 %v2424, %v2448
  %v2473 = vadd.f32 %v2425, %v2449
  %v2474 = vadd.f32 %v2426, %v2450
  %v2475 = vadd.f32 %v2427, %v2451
  %v2476 = vadd.f32 %v2428, %v2452
  %v2477 = vadd.f32 %v2429, %v2453
  %v2478 = vadd.f32 %v2430, %v2454
  %v2479 = vadd.f32 %v2431, %v2455
  %v2480 = vadd.f32 %v2432, %v2456
  %v2481 = vadd.f32 %v2433, %v2457
  %v2482 = vadd.f32 %v2434, %v2458
  %v2483 = vadd.f32 %v2435, %v2459
  %v2484 = vmul.f32 %v2229, 0.26601171
  %v2485 = vmul.f32 %v2230, 0.26601171
  %v2486 = vmul.f32 %v2231, 0.26601171
  %v2487 = vmul.f32 %v2232, 0.26601171
  %v2488 = vmul.f32 %v2233, 0.26601171
  %v2489 = vmul.f32 %v2234, 0.26601171
  %v2490 = vmul.f32 %v2235, 0.26601171
  %v2491 = vmul.f32 %v2236, 0.26601171
  %v2492 = vmul.f32 %v2237, 0.26601171
  %v2493 = vmul.f32 %v2238, 0.26601171
  %v2494 = vmul.f32 %v2239, 0.26601171
  %v2495 = vmul.f32 %v2240, 0.26601171
  %v2496 = vmul.f32 %v2241, 0.26601171
  %v2497 = vmul.f32 %v2242, 0.26601171
  %v2498 = vmul.f32 %v2243, 0.26601171
  %v2499 = vmul.f32 %v2244, 0.26601171
  %v2500 = vmul.f32 %v2245, 0.26601171
  %v2501 = vmul.f32 %v2246, 0.26601171
  %v2502 = vmul.f32 %v2247, 0.26601171
  %v2503 = vmul.f32 %v2248, 0.26601171
  %v2504 = vmul.f32 %v2249, 0.26601171
  %v2505 = vmul.f32 %v2250, 0.26601171
  %v2506 = vmul.f32 %v2251, 0.26601171
  %v2507 = vmul.f32 %v2252, 0.26601171
  %v2508 = vadd.f32 %v2460, %v2484
  %v2509 = vadd.f32 %v2461, %v2485
  %v2510 = vadd.f32 %v2462, %v2486
  %v2511 = vadd.f32 %v2463, %v2487
  %v2512 = vadd.f32 %v2464, %v2488
  %v2513 = vadd.f32 %v2465, %v2489
  %v2514 = vadd.f32 %v2466, %v2490
  %v2515 = vadd.f32 %v2467, %v2491
  %v2516 = vadd.f32 %v2468, %v2492
  %v2517 = vadd.f32 %v2469, %v2493
  %v2518 = vadd.f32 %v2470, %v2494
  %v2519 = vadd.f32 %v2471, %v2495
  %v2520 = vadd.f32 %v2472, %v2496
  %v2521 = vadd.f32 %v2473, %v2497
  %v2522 = vadd.f32 %v2474, %v2498
  %v2523 = vadd.f32 %v2475, %v2499
  %v2524 = vadd.f32 %v2476, %v2500
  %v2525 = vadd.f32 %v2477, %v2501
  %v2526 = vadd.f32 %v2478, %v2502
  %v2527 = vadd.f32 %v2479, %v2503
  %v2528 = vadd.f32 %v2480, %v2504
  %v2529 = vadd.f32 %v2481, %v2505
  %v2530 = vadd.f32 %v2482, %v2506
  %v2531 = vadd.f32 %v2483, %v2507
  %v2532 = vmul.f32 %v2250, 0.21300554
  %v2533 = vmul.f32 %v2251, 0.21300554
  %v2534 = vmul.f32 %v2252, 0.21300554
  %v2535 = vmul.f32 %v2253, 0.21300554
  %v2536 = vmul.f32 %v2254, 0.21300554
  %v2537 = vmul.f32 %v2255, 0.21300554
  %v2538 = vadd.f32 %v2508, %v2442
  %v2539 = vadd.f32 %v2509, %v2443
  %v2540 = vadd.f32 %v2510, %v2444
  %v2541 = vadd.f32 %v2511, %v2445
  %v2542 = vadd.f32 %v2512, %v2446
  %v2543 = vadd.f32 %v2513, %v2447
  %v2544 = vadd.f32 %v2514, %v2448
  %v2545 = vadd.f32 %v2515, %v2449
  %v2546 = vadd.f32 %v2516, %v2450
  %v2547 = vadd.f32 %v2517, %v2451
  %v2548 = vadd.f32 %v2518, %v2452
  %v2549 = vadd.f32 %v2519, %v2453
  %v2550 = vadd.f32 %v2520, %v2454
  %v2551 = vadd.f32 %v2521, %v2455
  %v2552 = vadd.f32 %v2522, %v2456
  %v2553 = vadd.f32 %v2523, %v2457
  %v2554 = vadd.f32 %v2524, %v2458
  %v2555 = vadd.f32 %v2525, %v2459
  %v2556 = vadd.f32 %v2526, %v2532
  %v2557 = vadd.f32 %v2527, %v2533
  %v2558 = vadd.f32 %v2528, %v2534
  %v2559 = vadd.f32 %v2529, %v2535
  %v2560 = vadd.f32 %v2530, %v2536
  %v2561 = vadd.f32 %v2531, %v2537
  %v2562 = vmul.f32 %v2247, 0.10936069
  %v2563 = vmul.f32 %v2248, 0.10936069
  %v2564 = vmul.f32 %v2249, 0.10936069
  %v2565 = vmul.f32 %v2250, 0.10936069
  %v2566 = vmul.f32 %v2251, 0.10936069
  %v2567 = vmul.f32 %v2252, 0.10936069
  %v2568 = vmul.f32 %v2253, 0.10936069
  %v2569 = vmul.f32 %v2254, 0.10936069
  %v2570 = vmul.f32 %v2255, 0.10936069
  %v2571 = vmul.f32 %v2256, 0.10936069
  %v2572 = vmul.f32 %v2257, 0.10936069
  %v2573 = vmul.f32 %v2258, 0.10936069
  %v2574 = vadd.f32 %v2538, %v2400
  %v2575 = vadd.f32 %v2539, %v2401
  %v2576 = vadd.f32 %v2540, %v2402
  %v2577 = vadd.f32 %v2541, %v2403
  %v2578 = vadd.f32 %v2542, %v2404
  %v2579 = vadd.f32 %v2543, %v2405
  %v2580 = vadd.f32 %v2544, %v2406
  %v2581 = vadd.f32 %v2545, %v2407
  %v2582 = vadd.f32 %v2546, %v2408
  %v2583 = vadd.f32 %v2547, %v2409
  %v2584 = vadd.f32 %v2548, %v2410
  %v2585 = vadd.f32 %v2549, %v2411
  %v2586 = vadd.f32 %v2550, %v2562
  %v2587 = vadd.f32 %v2551, %v2563
  %v2588 = vadd.f32 %v2552, %v2564
  %v2589 = vadd.f32 %v2553, %v2565
  %v2590 = vadd.f32 %v2554, %v2566
  %v2591 = vadd.f32 %v2555, %v2567
  %v2592 = vadd.f32 %v2556, %v2568
  %v2593 = vadd.f32 %v2557, %v2569
  %v2594 = vadd.f32 %v2558, %v2570
  %v2595 = vadd.f32 %v2559, %v2571
  %v2596 = vadd.f32 %v2560, %v2572
  %v2597 = vadd.f32 %v2561, %v2573
  %v2598 = vmul.f32 %v2244, 0.036000773
  %v2599 = vmul.f32 %v2245, 0.036000773
  %v2600 = vmul.f32 %v2246, 0.036000773
  %v2601 = vmul.f32 %v2247, 0.036000773
  %v2602 = vmul.f32 %v2248, 0.036000773
  %v2603 = vmul.f32 %v2249, 0.036000773
  %v2604 = vmul.f32 %v2250, 0.036000773
  %v2605 = vmul.f32 %v2251, 0.036000773
  %v2606 = vmul.f32 %v2252, 0.036000773
  %v2607 = vmul.f32 %v2253, 0.036000773
  %v2608 = vmul.f32 %v2254, 0.036000773
  %v2609 = vmul.f32 %v2255, 0.036000773
  %v2610 = vmul.f32 %v2256, 0.036000773
  %v2611 = vmul.f32 %v2257, 0.036000773
  %v2612 = vmul.f32 %v2258, 0.036000773
  %v2613 = vmul.f32 %v2259, 0.036000773
  %v2614 = vmul.f32 %v2260, 0.036000773
  %v2615 = vmul.f32 %v2261, 0.036000773
  %v2616 = vadd.f32 %v2574, %v2358
  %v2617 = vadd.f32 %v2575, %v2359
  %v2618 = vadd.f32 %v2576, %v2360
  %v2619 = vadd.f32 %v2577, %v2361
  %v2620 = vadd.f32 %v2578, %v2362
  %v2621 = vadd.f32 %v2579, %v2363
  %v2622 = vadd.f32 %v2580, %v2598
  %v2623 = vadd.f32 %v2581, %v2599
  %v2624 = vadd.f32 %v2582, %v2600
  %v2625 = vadd.f32 %v2583, %v2601
  %v2626 = vadd.f32 %v2584, %v2602
  %v2627 = vadd.f32 %v2585, %v2603
  %v2628 = vadd.f32 %v2586, %v2604
  %v2629 = vadd.f32 %v2587, %v2605
  %v2630 = vadd.f32 %v2588, %v2606
  %v2631 = vadd.f32 %v2589, %v2607
  %v2632 = vadd.f32 %v2590, %v2608
  %v2633 = vadd.f32 %v2591, %v2609
  %v2634 = vadd.f32 %v2592, %v2610
  %v2635 = vadd.f32 %v2593, %v2611
  %v2636 = vadd.f32 %v2594, %v2612
  %v2637 = vadd.f32 %v2595, %v2613
  %v2638 = vadd.f32 %v2596, %v2614
  %v2639 = vadd.f32 %v2597, %v2615
  %v2640 = vmul.f32 %v2241, 0.007598758
  %v2641 = vmul.f32 %v2242, 0.007598758
  %v2642 = vmul.f32 %v2243, 0.007598758
  %v2643 = vmul.f32 %v2244, 0.007598758
  %v2644 = vmul.f32 %v2245, 0.007598758
  %v2645 = vmul.f32 %v2246, 0.007598758
  %v2646 = vmul.f32 %v2247, 0.007598758
  %v2647 = vmul.f32 %v2248, 0.007598758
  %v2648 = vmul.f32 %v2249, 0.007598758
  %v2649 = vmul.f32 %v2250, 0.007598758
  %v2650 = vmul.f32 %v2251, 0.007598758
  %v2651 = vmul.f32 %v2252, 0.007598758
  %v2652 = vmul.f32 %v2253, 0.007598758
  %v2653 = vmul.f32 %v2254, 0.007598758
  %v2654 = vmul.f32 %v2255, 0.007598758
  %v2655 = vmul.f32 %v2256, 0.007598758
  %v2656 = vmul.f32 %v2257, 0.007598758
  %v2657 = vmul.f32 %v2258, 0.007598758
  %v2658 = vmul.f32 %v2259, 0.007598758
  %v2659 = vmul.f32 %v2260, 0.007598758
  %v2660 = vmul.f32 %v2261, 0.007598758
  %v2661 = vmul.f32 %v2262, 0.007598758
  %v2662 = vmul.f32 %v2263, 0.007598758
  %v2663 = vmul.f32 %v2264, 0.007598758
  %v2664 = vadd.f32 %v2616, %v2640
  %v2665 = vadd.f32 %v2617, %v2641
  %v2666 = vadd.f32 %v2618, %v2642
  %v2667 = vadd.f32 %v2619, %v2643
  %v2668 = vadd.f32 %v2620, %v2644
  %v2669 = vadd.f32 %v2621, %v2645
  %v2670 = vadd.f32 %v2622, %v2646
  %v2671 = vadd.f32 %v2623, %v2647
  %v2672 = vadd.f32 %v2624, %v2648
  %v2673 = vadd.f32 %v2625, %v2649
  %v2674 = vadd.f32 %v2626, %v2650
  %v2675 = vadd.f32 %v2627, %v2651
  %v2676 = vadd.f32 %v2628, %v2652
  %v2677 = vadd.f32 %v2629, %v2653
  %v2678 = vadd.f32 %v2630, %v2654
  %v2679 = vadd.f32 %v2631, %v2655
  %v2680 = vadd.f32 %v2632, %v2656
  %v2681 = vadd.f32 %v2633, %v2657
  %v2682 = vadd.f32 %v2634, %v2658
  %v2683 = vadd.f32 %v2635, %v2659
  %v2684 = vadd.f32 %v2636, %v2660
  %v2685 = vadd.f32 %v2637, %v2661
  %v2686 = vadd.f32 %v2638, %v2662
  %v2687 = vadd.f32 %v2639, %v2663
  %v2688 = vmul.f32 %v2244, 0.0010283801
  %v2689 = vmul.f32 %v2245, 0.0010283801
  %v2690 = vmul.f32 %v2246, 0.0010283801
  %v2691 = vmul.f32 %v2247, 0.0010283801
  %v2692 = vmul.f32 %v2248, 0.0010283801
  %v2693 = vmul.f32 %v2249, 0.0010283801
  %v2694 = vmul.f32 %v2250, 0.0010283801
  %v2695 = vmul.f32 %v2251, 0.0010283801
  %v2696 = vmul.f32 %v2252, 0.0010283801
  %v2697 = vmul.f32 %v2253, 0.0010283801
  %v2698 = vmul.f32 %v2254, 0.0010283801
  %v2699 = vmul.f32 %v2255, 0.0010283801
  %v2700 = vmul.f32 %v2256, 0.0010283801
  %v2701 = vmul.f32 %v2257, 0.0010283801
  %v2702 = vmul.f32 %v2258, 0.0010283801
  %v2703 = vmul.f32 %v2259, 0.0010283801
  %v2704 = vmul.f32 %v2260, 0.0010283801
  %v2705 = vmul.f32 %v2261, 0.0010283801
  %v2706 = vmul.f32 %v2262, 0.0010283801
  %v2707 = vmul.f32 %v2263, 0.0010283801
  %v2708 = vmul.f32 %v2264, 0.0010283801
  %v2709 = vmul.f32 %v2265, 0.0010283801
  %v2710 = vmul.f32 %v2266, 0.0010283801
  %v2711 = vmul.f32 %v2267, 0.0010283801
  %v2712 = vadd.f32 %v2664, %v2688
  %v2713 = vadd.f32 %v2665, %v2689
  %v2714 = vadd.f32 %v2666, %v2690
  %v2715 = vadd.f32 %v2667, %v2691
  %v2716 = vadd.f32 %v2668, %v2692
  %v2717 = vadd.f32 %v2669, %v2693
  %v2718 = vadd.f32 %v2670, %v2694
  %v2719 = vadd.f32 %v2671, %v2695
  %v2720 = vadd.f32 %v2672, %v2696
  %v2721 = vadd.f32 %v2673, %v2697
  %v2722 = vadd.f32 %v2674, %v2698
  %v2723 = vadd.f32 %v2675, %v2699
  %v2724 = vadd.f32 %v2676, %v2700
  %v2725 = vadd.f32 %v2677, %v2701
  %v2726 = vadd.f32 %v2678, %v2702
  %v2727 = vadd.f32 %v2679, %v2703
  %v2728 = vadd.f32 %v2680, %v2704
  %v2729 = vadd.f32 %v2681, %v2705
  %v2730 = vadd.f32 %v2682, %v2706
  %v2731 = vadd.f32 %v2683, %v2707
  %v2732 = vadd.f32 %v2684, %v2708
  %v2733 = vadd.f32 %v2685, %v2709
  %v2734 = vadd.f32 %v2686, %v2710
  %v2735 = vadd.f32 %v2687, %v2711
  %v2736 = vmul.f32 %v2712, 0.0010283801
  %v2737 = vmul.f32 %v2715, 0.0010283801
  %v2738 = vmul.f32 %v2718, 0.0010283801
  %v2739 = vmul.f32 %v2721, 0.0010283801
  %v2740 = vmul.f32 %v2724, 0.0010283801
  %v2741 = vmul.f32 %v2727, 0.0010283801
  %v2742 = vmul.f32 %v2730, 0.0010283801
  %v2743 = vmul.f32 %v2733, 0.0010283801
  %v2744 = vmul.f32 %v2712, 0.007598758
  %v2745 = vmul.f32 %v2713, 0.007598758
  %v2746 = vmul.f32 %v2715, 0.007598758
  %v2747 = vmul.f32 %v2716, 0.007598758
  %v2748 = vmul.f32 %v2718, 0.007598758
  %v2749 = vmul.f32 %v2719, 0.007598758
  %v2750 = vmul.f32 %v2721, 0.007598758
  %v2751 = vmul.f32 %v2722, 0.007598758
  %v2752 = vmul.f32 %v2724, 0.007598758
  %v2753 = vmul.f32 %v2725, 0.007598758
  %v2754 = vmul.f32 %v2727, 0.007598758
  %v2755 = vmul.f32 %v2728, 0.007598758
  %v2756 = vmul.f32 %v2730, 0.007598758
  %v2757 = vmul.f32 %v2731, 0.007598758
  %v2758 = vmul.f32 %v2733, 0.007598758
  %v2759 = vmul.f32 %v2734, 0.007598758
  %v2776 = vrot.slane %v2744, 1
  %v2777 = vrot.slane %v2745, 1
  %v2778 = vsel %vm627, %v2776, %v2777
  %v2779 = vrot.slane %v2746, 1
  %v2780 = vrot.slane %v2747, 1
  %v2781 = vsel %vm627, %v2779, %v2780
  %v2782 = vrot.slane %v2748, 1
  %v2783 = vrot.slane %v2749, 1
  %v2784 = vsel %vm627, %v2782, %v2783
  %v2785 = vrot.slane %v2750, 1
  %v2786 = vrot.slane %v2751, 1
  %v2787 = vsel %vm627, %v2785, %v2786
  %v2788 = vrot.slane %v2752, 1
  %v2789 = vrot.slane %v2753, 1
  %v2790 = vsel %vm627, %v2788, %v2789
  %v2791 = vrot.slane %v2754, 1
  %v2792 = vrot.slane %v2755, 1
  %v2793 = vsel %vm627, %v2791, %v2792
  %v2794 = vrot.slane %v2756, 1
  %v2795 = vrot.slane %v2757, 1
  %v2796 = vsel %vm627, %v2794, %v2795
  %v2797 = vrot.slane %v2758, 1
  %v2798 = vrot.slane %v2759, 1
  %v2799 = vsel %vm627, %v2797, %v2798
  %v2808 = vadd.f32 %v2736, %v2778
  %v2809 = vadd.f32 %v2737, %v2781
  %v2810 = vadd.f32 %v2738, %v2784
  %v2811 = vadd.f32 %v2739, %v2787
  %v2812 = vadd.f32 %v2740, %v2790
  %v2813 = vadd.f32 %v2741, %v2793
  %v2814 = vadd.f32 %v2742, %v2796
  %v2815 = vadd.f32 %v2743, %v2799
  %v2816 = vmul.f32 %v2712, 0.036000773
  %v2817 = vmul.f32 %v2713, 0.036000773
  %v2818 = vmul.f32 %v2715, 0.036000773
  %v2819 = vmul.f32 %v2716, 0.036000773
  %v2820 = vmul.f32 %v2718, 0.036000773
  %v2821 = vmul.f32 %v2719, 0.036000773
  %v2822 = vmul.f32 %v2721, 0.036000773
  %v2823 = vmul.f32 %v2722, 0.036000773
  %v2824 = vmul.f32 %v2724, 0.036000773
  %v2825 = vmul.f32 %v2725, 0.036000773
  %v2826 = vmul.f32 %v2727, 0.036000773
  %v2827 = vmul.f32 %v2728, 0.036000773
  %v2828 = vmul.f32 %v2730, 0.036000773
  %v2829 = vmul.f32 %v2731, 0.036000773
  %v2830 = vmul.f32 %v2733, 0.036000773
  %v2831 = vmul.f32 %v2734, 0.036000773
  %v2848 = vrot.slane %v2816, 2
  %v2849 = vrot.slane %v2817, 2
  %v2850 = vsel %vm700, %v2848, %v2849
  %v2851 = vrot.slane %v2818, 2
  %v2852 = vrot.slane %v2819, 2
  %v2853 = vsel %vm700, %v2851, %v2852
  %v2854 = vrot.slane %v2820, 2
  %v2855 = vrot.slane %v2821, 2
  %v2856 = vsel %vm700, %v2854, %v2855
  %v2857 = vrot.slane %v2822, 2
  %v2858 = vrot.slane %v2823, 2
  %v2859 = vsel %vm700, %v2857, %v2858
  %v2860 = vrot.slane %v2824, 2
  %v2861 = vrot.slane %v2825, 2
  %v2862 = vsel %vm700, %v2860, %v2861
  %v2863 = vrot.slane %v2826, 2
  %v2864 = vrot.slane %v2827, 2
  %v2865 = vsel %vm700, %v2863, %v2864
  %v2866 = vrot.slane %v2828, 2
  %v2867 = vrot.slane %v2829, 2
  %v2868 = vsel %vm700, %v2866, %v2867
  %v2869 = vrot.slane %v2830, 2
  %v2870 = vrot.slane %v2831, 2
  %v2871 = vsel %vm700, %v2869, %v2870
  %v2880 = vadd.f32 %v2808, %v2850
  %v2881 = vadd.f32 %v2809, %v2853
  %v2882 = vadd.f32 %v2810, %v2856
  %v2883 = vadd.f32 %v2811, %v2859
  %v2884 = vadd.f32 %v2812, %v2862
  %v2885 = vadd.f32 %v2813, %v2865
  %v2886 = vadd.f32 %v2814, %v2868
  %v2887 = vadd.f32 %v2815, %v2871
  %v2888 = vmul.f32 %v2712, 0.10936069
  %v2889 = vmul.f32 %v2713, 0.10936069
  %v2890 = vmul.f32 %v2715, 0.10936069
  %v2891 = vmul.f32 %v2716, 0.10936069
  %v2892 = vmul.f32 %v2718, 0.10936069
  %v2893 = vmul.f32 %v2719, 0.10936069
  %v2894 = vmul.f32 %v2721, 0.10936069
  %v2895 = vmul.f32 %v2722, 0.10936069
  %v2896 = vmul.f32 %v2724, 0.10936069
  %v2897 = vmul.f32 %v2725, 0.10936069
  %v2898 = vmul.f32 %v2727, 0.10936069
  %v2899 = vmul.f32 %v2728, 0.10936069
  %v2900 = vmul.f32 %v2730, 0.10936069
  %v2901 = vmul.f32 %v2731, 0.10936069
  %v2902 = vmul.f32 %v2733, 0.10936069
  %v2903 = vmul.f32 %v2734, 0.10936069
  %v2920 = vrot.slane %v2888, 3
  %v2921 = vrot.slane %v2889, 3
  %v2922 = vsel %vm773, %v2920, %v2921
  %v2923 = vrot.slane %v2890, 3
  %v2924 = vrot.slane %v2891, 3
  %v2925 = vsel %vm773, %v2923, %v2924
  %v2926 = vrot.slane %v2892, 3
  %v2927 = vrot.slane %v2893, 3
  %v2928 = vsel %vm773, %v2926, %v2927
  %v2929 = vrot.slane %v2894, 3
  %v2930 = vrot.slane %v2895, 3
  %v2931 = vsel %vm773, %v2929, %v2930
  %v2932 = vrot.slane %v2896, 3
  %v2933 = vrot.slane %v2897, 3
  %v2934 = vsel %vm773, %v2932, %v2933
  %v2935 = vrot.slane %v2898, 3
  %v2936 = vrot.slane %v2899, 3
  %v2937 = vsel %vm773, %v2935, %v2936
  %v2938 = vrot.slane %v2900, 3
  %v2939 = vrot.slane %v2901, 3
  %v2940 = vsel %vm773, %v2938, %v2939
  %v2941 = vrot.slane %v2902, 3
  %v2942 = vrot.slane %v2903, 3
  %v2943 = vsel %vm773, %v2941, %v2942
  %v2952 = vadd.f32 %v2880, %v2922
  %v2953 = vadd.f32 %v2881, %v2925
  %v2954 = vadd.f32 %v2882, %v2928
  %v2955 = vadd.f32 %v2883, %v2931
  %v2956 = vadd.f32 %v2884, %v2934
  %v2957 = vadd.f32 %v2885, %v2937
  %v2958 = vadd.f32 %v2886, %v2940
  %v2959 = vadd.f32 %v2887, %v2943
  %v2960 = vmul.f32 %v2712, 0.21300554
  %v2961 = vmul.f32 %v2713, 0.21300554
  %v2962 = vmul.f32 %v2715, 0.21300554
  %v2963 = vmul.f32 %v2716, 0.21300554
  %v2964 = vmul.f32 %v2718, 0.21300554
  %v2965 = vmul.f32 %v2719, 0.21300554
  %v2966 = vmul.f32 %v2721, 0.21300554
  %v2967 = vmul.f32 %v2722, 0.21300554
  %v2968 = vmul.f32 %v2724, 0.21300554
  %v2969 = vmul.f32 %v2725, 0.21300554
  %v2970 = vmul.f32 %v2727, 0.21300554
  %v2971 = vmul.f32 %v2728, 0.21300554
  %v2972 = vmul.f32 %v2730, 0.21300554
  %v2973 = vmul.f32 %v2731, 0.21300554
  %v2974 = vmul.f32 %v2733, 0.21300554
  %v2975 = vmul.f32 %v2734, 0.21300554
  %v2992 = vrot.slane %v2960, 4
  %v2993 = vrot.slane %v2961, 4
  %v2994 = vsel %vm846, %v2992, %v2993
  %v2995 = vrot.slane %v2962, 4
  %v2996 = vrot.slane %v2963, 4
  %v2997 = vsel %vm846, %v2995, %v2996
  %v2998 = vrot.slane %v2964, 4
  %v2999 = vrot.slane %v2965, 4
  %v3000 = vsel %vm846, %v2998, %v2999
  %v3001 = vrot.slane %v2966, 4
  %v3002 = vrot.slane %v2967, 4
  %v3003 = vsel %vm846, %v3001, %v3002
  %v3004 = vrot.slane %v2968, 4
  %v3005 = vrot.slane %v2969, 4
  %v3006 = vsel %vm846, %v3004, %v3005
  %v3007 = vrot.slane %v2970, 4
  %v3008 = vrot.slane %v2971, 4
  %v3009 = vsel %vm846, %v3007, %v3008
  %v3010 = vrot.slane %v2972, 4
  %v3011 = vrot.slane %v2973, 4
  %v3012 = vsel %vm846, %v3010, %v3011
  %v3013 = vrot.slane %v2974, 4
  %v3014 = vrot.slane %v2975, 4
  %v3015 = vsel %vm846, %v3013, %v3014
  %v3024 = vadd.f32 %v2952, %v2994
  %v3025 = vadd.f32 %v2953, %v2997
  %v3026 = vadd.f32 %v2954, %v3000
  %v3027 = vadd.f32 %v2955, %v3003
  %v3028 = vadd.f32 %v2956, %v3006
  %v3029 = vadd.f32 %v2957, %v3009
  %v3030 = vadd.f32 %v2958, %v3012
  %v3031 = vadd.f32 %v2959, %v3015
  %v3032 = vmul.f32 %v2712, 0.26601171
  %v3033 = vmul.f32 %v2713, 0.26601171
  %v3034 = vmul.f32 %v2715, 0.26601171
  %v3035 = vmul.f32 %v2716, 0.26601171
  %v3036 = vmul.f32 %v2718, 0.26601171
  %v3037 = vmul.f32 %v2719, 0.26601171
  %v3038 = vmul.f32 %v2721, 0.26601171
  %v3039 = vmul.f32 %v2722, 0.26601171
  %v3040 = vmul.f32 %v2724, 0.26601171
  %v3041 = vmul.f32 %v2725, 0.26601171
  %v3042 = vmul.f32 %v2727, 0.26601171
  %v3043 = vmul.f32 %v2728, 0.26601171
  %v3044 = vmul.f32 %v2730, 0.26601171
  %v3045 = vmul.f32 %v2731, 0.26601171
  %v3046 = vmul.f32 %v2733, 0.26601171
  %v3047 = vmul.f32 %v2734, 0.26601171
  %v3064 = vrot.slane %v3032, 5
  %v3065 = vrot.slane %v3033, 5
  %v3066 = vsel %vm919, %v3064, %v3065
  %v3067 = vrot.slane %v3034, 5
  %v3068 = vrot.slane %v3035, 5
  %v3069 = vsel %vm919, %v3067, %v3068
  %v3070 = vrot.slane %v3036, 5
  %v3071 = vrot.slane %v3037, 5
  %v3072 = vsel %vm919, %v3070, %v3071
  %v3073 = vrot.slane %v3038, 5
  %v3074 = vrot.slane %v3039, 5
  %v3075 = vsel %vm919, %v3073, %v3074
  %v3076 = vrot.slane %v3040, 5
  %v3077 = vrot.slane %v3041, 5
  %v3078 = vsel %vm919, %v3076, %v3077
  %v3079 = vrot.slane %v3042, 5
  %v3080 = vrot.slane %v3043, 5
  %v3081 = vsel %vm919, %v3079, %v3080
  %v3082 = vrot.slane %v3044, 5
  %v3083 = vrot.slane %v3045, 5
  %v3084 = vsel %vm919, %v3082, %v3083
  %v3085 = vrot.slane %v3046, 5
  %v3086 = vrot.slane %v3047, 5
  %v3087 = vsel %vm919, %v3085, %v3086
  %v3096 = vadd.f32 %v3024, %v3066
  %v3097 = vadd.f32 %v3025, %v3069
  %v3098 = vadd.f32 %v3026, %v3072
  %v3099 = vadd.f32 %v3027, %v3075
  %v3100 = vadd.f32 %v3028, %v3078
  %v3101 = vadd.f32 %v3029, %v3081
  %v3102 = vadd.f32 %v3030, %v3084
  %v3103 = vadd.f32 %v3031, %v3087
  %v3104 = vrot.slane %v2960, 6
  %v3105 = vrot.slane %v2961, 6
  %v3106 = vsel %vm960, %v3104, %v3105
  %v3107 = vrot.slane %v2962, 6
  %v3108 = vrot.slane %v2963, 6
  %v3109 = vsel %vm960, %v3107, %v3108
  %v3110 = vrot.slane %v2964, 6
  %v3111 = vrot.slane %v2965, 6
  %v3112 = vsel %vm960, %v3110, %v3111
  %v3113 = vrot.slane %v2966, 6
  %v3114 = vrot.slane %v2967, 6
  %v3115 = vsel %vm960, %v3113, %v3114
  %v3116 = vrot.slane %v2968, 6
  %v3117 = vrot.slane %v2969, 6
  %v3118 = vsel %vm960, %v3116, %v3117
  %v3119 = vrot.slane %v2970, 6
  %v3120 = vrot.slane %v2971, 6
  %v3121 = vsel %vm960, %v3119, %v3120
  %v3122 = vrot.slane %v2972, 6
  %v3123 = vrot.slane %v2973, 6
  %v3124 = vsel %vm960, %v3122, %v3123
  %v3125 = vrot.slane %v2974, 6
  %v3126 = vrot.slane %v2975, 6
  %v3127 = vsel %vm960, %v3125, %v3126
  %v3136 = vadd.f32 %v3096, %v3106
  %v3137 = vadd.f32 %v3097, %v3109
  %v3138 = vadd.f32 %v3098, %v3112
  %v3139 = vadd.f32 %v3099, %v3115
  %v3140 = vadd.f32 %v3100, %v3118
  %v3141 = vadd.f32 %v3101, %v3121
  %v3142 = vadd.f32 %v3102, %v3124
  %v3143 = vadd.f32 %v3103, %v3127
  %v3144 = vrot.slane %v2888, 7
  %v3145 = vrot.slane %v2889, 7
  %v3146 = vsel %vm1001, %v3144, %v3145
  %v3147 = vrot.slane %v2890, 7
  %v3148 = vrot.slane %v2891, 7
  %v3149 = vsel %vm1001, %v3147, %v3148
  %v3150 = vrot.slane %v2892, 7
  %v3151 = vrot.slane %v2893, 7
  %v3152 = vsel %vm1001, %v3150, %v3151
  %v3153 = vrot.slane %v2894, 7
  %v3154 = vrot.slane %v2895, 7
  %v3155 = vsel %vm1001, %v3153, %v3154
  %v3156 = vrot.slane %v2896, 7
  %v3157 = vrot.slane %v2897, 7
  %v3158 = vsel %vm1001, %v3156, %v3157
  %v3159 = vrot.slane %v2898, 7
  %v3160 = vrot.slane %v2899, 7
  %v3161 = vsel %vm1001, %v3159, %v3160
  %v3162 = vrot.slane %v2900, 7
  %v3163 = vrot.slane %v2901, 7
  %v3164 = vsel %vm1001, %v3162, %v3163
  %v3165 = vrot.slane %v2902, 7
  %v3166 = vrot.slane %v2903, 7
  %v3167 = vsel %vm1001, %v3165, %v3166
  %v3176 = vadd.f32 %v3136, %v3146
  %v3177 = vadd.f32 %v3137, %v3149
  %v3178 = vadd.f32 %v3138, %v3152
  %v3179 = vadd.f32 %v3139, %v3155
  %v3180 = vadd.f32 %v3140, %v3158
  %v3181 = vadd.f32 %v3141, %v3161
  %v3182 = vadd.f32 %v3142, %v3164
  %v3183 = vadd.f32 %v3143, %v3167
  %v3184 = vadd.f32 %v3176, %v2817
  %v3185 = vadd.f32 %v3177, %v2819
  %v3186 = vadd.f32 %v3178, %v2821
  %v3187 = vadd.f32 %v3179, %v2823
  %v3188 = vadd.f32 %v3180, %v2825
  %v3189 = vadd.f32 %v3181, %v2827
  %v3190 = vadd.f32 %v3182, %v2829
  %v3191 = vadd.f32 %v3183, %v2831
  %v3192 = vmul.f32 %v2714, 0.007598758
  %v3193 = vmul.f32 %v2717, 0.007598758
  %v3194 = vmul.f32 %v2720, 0.007598758
  %v3195 = vmul.f32 %v2723, 0.007598758
  %v3196 = vmul.f32 %v2726, 0.007598758
  %v3197 = vmul.f32 %v2729, 0.007598758
  %v3198 = vmul.f32 %v2732, 0.007598758
  %v3199 = vmul.f32 %v2735, 0.007598758
  %v3208 = vrot.slane %v3192, 1
  %v3209 = vsel %vm627, %v2777, %v3208
  %v3210 = vrot.slane %v3193, 1
  %v3211 = vsel %vm627, %v2780, %v3210
  %v3212 = vrot.slane %v3194, 1
  %v3213 = vsel %vm627, %v2783, %v3212
  %v3214 = vrot.slane %v3195, 1
  %v3215 = vsel %vm627, %v2786, %v3214
  %v3216 = vrot.slane %v3196, 1
  %v3217 = vsel %vm627, %v2789, %v3216
  %v3218 = vrot.slane %v3197, 1
  %v3219 = vsel %vm627, %v2792, %v3218
  %v3220 = vrot.slane %v3198, 1
  %v3221 = vsel %vm627, %v2795, %v3220
  %v3222 = vrot.slane %v3199, 1
  %v3223 = vsel %vm627, %v2798, %v3222
  %v3232 = vadd.f32 %v3184, %v3209
  %v3233 = vadd.f32 %v3185, %v3211
  %v3234 = vadd.f32 %v3186, %v3213
  %v3235 = vadd.f32 %v3187, %v3215
  %v3236 = vadd.f32 %v3188, %v3217
  %v3237 = vadd.f32 %v3189, %v3219
  %v3238 = vadd.f32 %v3190, %v3221
  %v3239 = vadd.f32 %v3191, %v3223
  %v3240 = vmul.f32 %v2713, 0.0010283801
  %v3241 = vmul.f32 %v2714, 0.0010283801
  %v3242 = vmul.f32 %v2716, 0.0010283801
  %v3243 = vmul.f32 %v2717, 0.0010283801
  %v3244 = vmul.f32 %v2719, 0.0010283801
  %v3245 = vmul.f32 %v2720, 0.0010283801
  %v3246 = vmul.f32 %v2722, 0.0010283801
  %v3247 = vmul.f32 %v2723, 0.0010283801
  %v3248 = vmul.f32 %v2725, 0.0010283801
  %v3249 = vmul.f32 %v2726, 0.0010283801
  %v3250 = vmul.f32 %v2728, 0.0010283801
  %v3251 = vmul.f32 %v2729, 0.0010283801
  %v3252 = vmul.f32 %v2731, 0.0010283801
  %v3253 = vmul.f32 %v2732, 0.0010283801
  %v3254 = vmul.f32 %v2734, 0.0010283801
  %v3255 = vmul.f32 %v2735, 0.0010283801
  %v3272 = vrot.slane %v3240, 2
  %v3273 = vrot.slane %v3241, 2
  %v3274 = vsel %vm700, %v3272, %v3273
  %v3275 = vrot.slane %v3242, 2
  %v3276 = vrot.slane %v3243, 2
  %v3277 = vsel %vm700, %v3275, %v3276
  %v3278 = vrot.slane %v3244, 2
  %v3279 = vrot.slane %v3245, 2
  %v3280 = vsel %vm700, %v3278, %v3279
  %v3281 = vrot.slane %v3246, 2
  %v3282 = vrot.slane %v3247, 2
  %v3283 = vsel %vm700, %v3281, %v3282
  %v3284 = vrot.slane %v3248, 2
  %v3285 = vrot.slane %v3249, 2
  %v3286 = vsel %vm700, %v3284, %v3285
  %v3287 = vrot.slane %v3250, 2
  %v3288 = vrot.slane %v3251, 2
  %v3289 = vsel %vm700, %v3287, %v3288
  %v3290 = vrot.slane %v3252, 2
  %v3291 = vrot.slane %v3253, 2
  %v3292 = vsel %vm700, %v3290, %v3291
  %v3293 = vrot.slane %v3254, 2
  %v3294 = vrot.slane %v3255, 2
  %v3295 = vsel %vm700, %v3293, %v3294
  %v3304 = vadd.f32 %v3232, %v3274
  %v3305 = vadd.f32 %v3233, %v3277
  %v3306 = vadd.f32 %v3234, %v3280
  %v3307 = vadd.f32 %v3235, %v3283
  %v3308 = vadd.f32 %v3236, %v3286
  %v3309 = vadd.f32 %v3237, %v3289
  %v3310 = vadd.f32 %v3238, %v3292
  %v3311 = vadd.f32 %v3239, %v3295
  %v3312 = vmul.f32 %v65, %v65
  %v3313 = vmul.f32 %v66, %v66
  %v3314 = vmul.f32 %v67, %v67
  %v3315 = vmul.f32 %v68, %v68
  %v3316 = vmul.f32 %v69, %v69
  %v3317 = vmul.f32 %v70, %v70
  %v3318 = vmul.f32 %v71, %v71
  %v3319 = vmul.f32 %v72, %v72
  %v3320 = vmul.f32 %v73, %v73
  %v3321 = vmul.f32 %v74, %v74
  %v3322 = vmul.f32 %v75, %v75
  %v3323 = vmul.f32 %v76, %v76
  %v3324 = vmul.f32 %v77, %v77
  %v3325 = vmul.f32 %v78, %v78
  %v3326 = vmul.f32 %v79, %v79
  %v3327 = vmul.f32 %v80, %v80
  %v3328 = vmul.f32 %v81, %v81
  %v3329 = vmul.f32 %v82, %v82
  %v3330 = vmul.f32 %v83, %v83
  %v3331 = vmul.f32 %v84, %v84
  %v3332 = vmul.f32 %v85, %v85
  %v3333 = vmul.f32 %v86, %v86
  %v3334 = vmul.f32 %v87, %v87
  %v3335 = vmul.f32 %v88, %v88
  %v3336 = vmul.f32 %v89, %v89
  %v3337 = vmul.f32 %v90, %v90
  %v3338 = vmul.f32 %v91, %v91
  %v3339 = vmul.f32 %v92, %v92
  %v3340 = vmul.f32 %v93, %v93
  %v3341 = vmul.f32 %v94, %v94
  %v3342 = vmul.f32 %v95, %v95
  %v3343 = vmul.f32 %v96, %v96
  %v3344 = vmul.f32 %v97, %v97
  %v3345 = vmul.f32 %v98, %v98
  %v3346 = vmul.f32 %v99, %v99
  %v3347 = vmul.f32 %v100, %v100
  %v3348 = vmul.f32 %v101, %v101
  %v3349 = vmul.f32 %v102, %v102
  %v3350 = vmul.f32 %v103, %v103
  %v3351 = vmul.f32 %v104, %v104
  %v3352 = vmul.f32 %v105, %v105
  %v3353 = vmul.f32 %v106, %v106
  %v3354 = vmul.f32 %v107, %v107
  %v3355 = vmul.f32 %v108, %v108
  %v3356 = vmul.f32 %v109, %v109
  %v3357 = vmul.f32 %v110, %v110
  %v3358 = vmul.f32 %v111, %v111
  %v3359 = vmul.f32 %v112, %v112
  %v3360 = vmul.f32 %v113, %v113
  %v3361 = vmul.f32 %v114, %v114
  %v3362 = vmul.f32 %v115, %v115
  %v3363 = vmul.f32 %v116, %v116
  %v3364 = vmul.f32 %v117, %v117
  %v3365 = vmul.f32 %v118, %v118
  %v3366 = vmul.f32 %v3312, 0.0010283801
  %v3367 = vmul.f32 %v3313, 0.0010283801
  %v3368 = vmul.f32 %v3314, 0.0010283801
  %v3369 = vmul.f32 %v3315, 0.0010283801
  %v3370 = vmul.f32 %v3316, 0.0010283801
  %v3371 = vmul.f32 %v3317, 0.0010283801
  %v3372 = vmul.f32 %v3318, 0.0010283801
  %v3373 = vmul.f32 %v3319, 0.0010283801
  %v3374 = vmul.f32 %v3320, 0.0010283801
  %v3375 = vmul.f32 %v3321, 0.0010283801
  %v3376 = vmul.f32 %v3322, 0.0010283801
  %v3377 = vmul.f32 %v3323, 0.0010283801
  %v3378 = vmul.f32 %v3324, 0.0010283801
  %v3379 = vmul.f32 %v3325, 0.0010283801
  %v3380 = vmul.f32 %v3326, 0.0010283801
  %v3381 = vmul.f32 %v3327, 0.0010283801
  %v3382 = vmul.f32 %v3328, 0.0010283801
  %v3383 = vmul.f32 %v3329, 0.0010283801
  %v3384 = vmul.f32 %v3330, 0.0010283801
  %v3385 = vmul.f32 %v3331, 0.0010283801
  %v3386 = vmul.f32 %v3332, 0.0010283801
  %v3387 = vmul.f32 %v3333, 0.0010283801
  %v3388 = vmul.f32 %v3334, 0.0010283801
  %v3389 = vmul.f32 %v3335, 0.0010283801
  %v3390 = vmul.f32 %v3315, 0.007598758
  %v3391 = vmul.f32 %v3316, 0.007598758
  %v3392 = vmul.f32 %v3317, 0.007598758
  %v3393 = vmul.f32 %v3318, 0.007598758
  %v3394 = vmul.f32 %v3319, 0.007598758
  %v3395 = vmul.f32 %v3320, 0.007598758
  %v3396 = vmul.f32 %v3321, 0.007598758
  %v3397 = vmul.f32 %v3322, 0.007598758
  %v3398 = vmul.f32 %v3323, 0.007598758
  %v3399 = vmul.f32 %v3324, 0.007598758
  %v3400 = vmul.f32 %v3325, 0.007598758
  %v3401 = vmul.f32 %v3326, 0.007598758
  %v3402 = vmul.f32 %v3327, 0.007598758
  %v3403 = vmul.f32 %v3328, 0.007598758
  %v3404 = vmul.f32 %v3329, 0.007598758
  %v3405 = vmul.f32 %v3330, 0.007598758
  %v3406 = vmul.f32 %v3331, 0.007598758
  %v3407 = vmul.f32 %v3332, 0.007598758
  %v3408 = vmul.f32 %v3333, 0.007598758
  %v3409 = vmul.f32 %v3334, 0.007598758
  %v3410 = vmul.f32 %v3335, 0.007598758
  %v3411 = vmul.f32 %v3336, 0.007598758
  %v3412 = vmul.f32 %v3337, 0.007598758
  %v3413 = vmul.f32 %v3338, 0.007598758
  %v3414 = vadd.f32 %v3366, %v3390
  %v3415 = vadd.f32 %v3367, %v3391
  %v3416 = vadd.f32 %v3368, %v3392
  %v3417 = vadd.f32 %v3369, %v3393
  %v3418 = vadd.f32 %v3370, %v3394
  %v3419 = vadd.f32 %v3371, %v3395
  %v3420 = vadd.f32 %v3372, %v3396
  %v3421 = vadd.f32 %v3373, %v3397
  %v3422 = vadd.f32 %v3374, %v3398
  %v3423 = vadd.f32 %v3375, %v3399
  %v3424 = vadd.f32 %v3376, %v3400
  %v3425 = vadd.f32 %v3377, %v3401
  %v3426 = vadd.f32 %v3378, %v3402
  %v3427 = vadd.f32 %v3379, %v3403
  %v3428 = vadd.f32 %v3380, %v3404
  %v3429 = vadd.f32 %v3381, %v3405
  %v3430 = vadd.f32 %v3382, %v3406
  %v3431 = vadd.f32 %v3383, %v3407
  %v3432 = vadd.f32 %v3384, %v3408
  %v3433 = vadd.f32 %v3385, %v3409
  %v3434 = vadd.f32 %v3386, %v3410
  %v3435 = vadd.f32 %v3387, %v3411
  %v3436 = vadd.f32 %v3388, %v3412
  %v3437 = vadd.f32 %v3389, %v3413
  %v3438 = vmul.f32 %v3318, 0.036000773
  %v3439 = vmul.f32 %v3319, 0.036000773
  %v3440 = vmul.f32 %v3320, 0.036000773
  %v3441 = vmul.f32 %v3321, 0.036000773
  %v3442 = vmul.f32 %v3322, 0.036000773
  %v3443 = vmul.f32 %v3323, 0.036000773
  %v3444 = vmul.f32 %v3324, 0.036000773
  %v3445 = vmul.f32 %v3325, 0.036000773
  %v3446 = vmul.f32 %v3326, 0.036000773
  %v3447 = vmul.f32 %v3327, 0.036000773
  %v3448 = vmul.f32 %v3328, 0.036000773
  %v3449 = vmul.f32 %v3329, 0.036000773
  %v3450 = vmul.f32 %v3330, 0.036000773
  %v3451 = vmul.f32 %v3331, 0.036000773
  %v3452 = vmul.f32 %v3332, 0.036000773
  %v3453 = vmul.f32 %v3333, 0.036000773
  %v3454 = vmul.f32 %v3334, 0.036000773
  %v3455 = vmul.f32 %v3335, 0.036000773
  %v3456 = vmul.f32 %v3336, 0.036000773
  %v3457 = vmul.f32 %v3337, 0.036000773
  %v3458 = vmul.f32 %v3338, 0.036000773
  %v3459 = vmul.f32 %v3339, 0.036000773
  %v3460 = vmul.f32 %v3340, 0.036000773
  %v3461 = vmul.f32 %v3341, 0.036000773
  %v3462 = vadd.f32 %v3414, %v3438
  %v3463 = vadd.f32 %v3415, %v3439
  %v3464 = vadd.f32 %v3416, %v3440
  %v3465 = vadd.f32 %v3417, %v3441
  %v3466 = vadd.f32 %v3418, %v3442
  %v3467 = vadd.f32 %v3419, %v3443
  %v3468 = vadd.f32 %v3420, %v3444
  %v3469 = vadd.f32 %v3421, %v3445
  %v3470 = vadd.f32 %v3422, %v3446
  %v3471 = vadd.f32 %v3423, %v3447
  %v3472 = vadd.f32 %v3424, %v3448
  %v3473 = vadd.f32 %v3425, %v3449
  %v3474 = vadd.f32 %v3426, %v3450
  %v3475 = vadd.f32 %v3427, %v3451
  %v3476 = vadd.f32 %v3428, %v3452
  %v3477 = vadd.f32 %v3429, %v3453
  %v3478 = vadd.f32 %v3430, %v3454
  %v3479 = vadd.f32 %v3431, %v3455
  %v3480 = vadd.f32 %v3432, %v3456
  %v3481 = vadd.f32 %v3433, %v3457
  %v3482 = vadd.f32 %v3434, %v3458
  %v3483 = vadd.f32 %v3435, %v3459
  %v3484 = vadd.f32 %v3436, %v3460
  %v3485 = vadd.f32 %v3437, %v3461
  %v3486 = vmul.f32 %v3321, 0.10936069
  %v3487 = vmul.f32 %v3322, 0.10936069
  %v3488 = vmul.f32 %v3323, 0.10936069
  %v3489 = vmul.f32 %v3324, 0.10936069
  %v3490 = vmul.f32 %v3325, 0.10936069
  %v3491 = vmul.f32 %v3326, 0.10936069
  %v3492 = vmul.f32 %v3327, 0.10936069
  %v3493 = vmul.f32 %v3328, 0.10936069
  %v3494 = vmul.f32 %v3329, 0.10936069
  %v3495 = vmul.f32 %v3330, 0.10936069
  %v3496 = vmul.f32 %v3331, 0.10936069
  %v3497 = vmul.f32 %v3332, 0.10936069
  %v3498 = vmul.f32 %v3333, 0.10936069
  %v3499 = vmul.f32 %v3334, 0.10936069
  %v3500 = vmul.f32 %v3335, 0.10936069
  %v3501 = vmul.f32 %v3336, 0.10936069
  %v3502 = vmul.f32 %v3337, 0.10936069
  %v3503 = vmul.f32 %v3338, 0.10936069
  %v3504 = vmul.f32 %v3339, 0.10936069
  %v3505 = vmul.f32 %v3340, 0.10936069
  %v3506 = vmul.f32 %v3341, 0.10936069
  %v3507 = vmul.f32 %v3342, 0.10936069
  %v3508 = vmul.f32 %v3343, 0.10936069
  %v3509 = vmul.f32 %v3344, 0.10936069
  %v3510 = vadd.f32 %v3462, %v3486
  %v3511 = vadd.f32 %v3463, %v3487
  %v3512 = vadd.f32 %v3464, %v3488
  %v3513 = vadd.f32 %v3465, %v3489
  %v3514 = vadd.f32 %v3466, %v3490
  %v3515 = vadd.f32 %v3467, %v3491
  %v3516 = vadd.f32 %v3468, %v3492
  %v3517 = vadd.f32 %v3469, %v3493
  %v3518 = vadd.f32 %v3470, %v3494
  %v3519 = vadd.f32 %v3471, %v3495
  %v3520 = vadd.f32 %v3472, %v3496
  %v3521 = vadd.f32 %v3473, %v3497
  %v3522 = vadd.f32 %v3474, %v3498
  %v3523 = vadd.f32 %v3475, %v3499
  %v3524 = vadd.f32 %v3476, %v3500
  %v3525 = vadd.f32 %v3477, %v3501
  %v3526 = vadd.f32 %v3478, %v3502
  %v3527 = vadd.f32 %v3479, %v3503
  %v3528 = vadd.f32 %v3480, %v3504
  %v3529 = vadd.f32 %v3481, %v3505
  %v3530 = vadd.f32 %v3482, %v3506
  %v3531 = vadd.f32 %v3483, %v3507
  %v3532 = vadd.f32 %v3484, %v3508
  %v3533 = vadd.f32 %v3485, %v3509
  %v3534 = vmul.f32 %v3324, 0.21300554
  %v3535 = vmul.f32 %v3325, 0.21300554
  %v3536 = vmul.f32 %v3326, 0.21300554
  %v3537 = vmul.f32 %v3327, 0.21300554
  %v3538 = vmul.f32 %v3328, 0.21300554
  %v3539 = vmul.f32 %v3329, 0.21300554
  %v3540 = vmul.f32 %v3330, 0.21300554
  %v3541 = vmul.f32 %v3331, 0.21300554
  %v3542 = vmul.f32 %v3332, 0.21300554
  %v3543 = vmul.f32 %v3333, 0.21300554
  %v3544 = vmul.f32 %v3334, 0.21300554
  %v3545 = vmul.f32 %v3335, 0.21300554
  %v3546 = vmul.f32 %v3336, 0.21300554
  %v3547 = vmul.f32 %v3337, 0.21300554
  %v3548 = vmul.f32 %v3338, 0.21300554
  %v3549 = vmul.f32 %v3339, 0.21300554
  %v3550 = vmul.f32 %v3340, 0.21300554
  %v3551 = vmul.f32 %v3341, 0.21300554
  %v3552 = vmul.f32 %v3342, 0.21300554
  %v3553 = vmul.f32 %v3343, 0.21300554
  %v3554 = vmul.f32 %v3344, 0.21300554
  %v3555 = vmul.f32 %v3345, 0.21300554
  %v3556 = vmul.f32 %v3346, 0.21300554
  %v3557 = vmul.f32 %v3347, 0.21300554
  %v3558 = vadd.f32 %v3510, %v3534
  %v3559 = vadd.f32 %v3511, %v3535
  %v3560 = vadd.f32 %v3512, %v3536
  %v3561 = vadd.f32 %v3513, %v3537
  %v3562 = vadd.f32 %v3514, %v3538
  %v3563 = vadd.f32 %v3515, %v3539
  %v3564 = vadd.f32 %v3516, %v3540
  %v3565 = vadd.f32 %v3517, %v3541
  %v3566 = vadd.f32 %v3518, %v3542
  %v3567 = vadd.f32 %v3519, %v3543
  %v3568 = vadd.f32 %v3520, %v3544
  %v3569 = vadd.f32 %v3521, %v3545
  %v3570 = vadd.f32 %v3522, %v3546
  %v3571 = vadd.f32 %v3523, %v3547
  %v3572 = vadd.f32 %v3524, %v3548
  %v3573 = vadd.f32 %v3525, %v3549
  %v3574 = vadd.f32 %v3526, %v3550
  %v3575 = vadd.f32 %v3527, %v3551
  %v3576 = vadd.f32 %v3528, %v3552
  %v3577 = vadd.f32 %v3529, %v3553
  %v3578 = vadd.f32 %v3530, %v3554
  %v3579 = vadd.f32 %v3531, %v3555
  %v3580 = vadd.f32 %v3532, %v3556
  %v3581 = vadd.f32 %v3533, %v3557
  %v3582 = vmul.f32 %v3327, 0.26601171
  %v3583 = vmul.f32 %v3328, 0.26601171
  %v3584 = vmul.f32 %v3329, 0.26601171
  %v3585 = vmul.f32 %v3330, 0.26601171
  %v3586 = vmul.f32 %v3331, 0.26601171
  %v3587 = vmul.f32 %v3332, 0.26601171
  %v3588 = vmul.f32 %v3333, 0.26601171
  %v3589 = vmul.f32 %v3334, 0.26601171
  %v3590 = vmul.f32 %v3335, 0.26601171
  %v3591 = vmul.f32 %v3336, 0.26601171
  %v3592 = vmul.f32 %v3337, 0.26601171
  %v3593 = vmul.f32 %v3338, 0.26601171
  %v3594 = vmul.f32 %v3339, 0.26601171
  %v3595 = vmul.f32 %v3340, 0.26601171
  %v3596 = vmul.f32 %v3341, 0.26601171
  %v3597 = vmul.f32 %v3342, 0.26601171
  %v3598 = vmul.f32 %v3343, 0.26601171
  %v3599 = vmul.f32 %v3344, 0.26601171
  %v3600 = vmul.f32 %v3345, 0.26601171
  %v3601 = vmul.f32 %v3346, 0.26601171
  %v3602 = vmul.f32 %v3347, 0.26601171
  %v3603 = vmul.f32 %v3348, 0.26601171
  %v3604 = vmul.f32 %v3349, 0.26601171
  %v3605 = vmul.f32 %v3350, 0.26601171
  %v3606 = vadd.f32 %v3558, %v3582
  %v3607 = vadd.f32 %v3559, %v3583
  %v3608 = vadd.f32 %v3560, %v3584
  %v3609 = vadd.f32 %v3561, %v3585
  %v3610 = vadd.f32 %v3562, %v3586
  %v3611 = vadd.f32 %v3563, %v3587
  %v3612 = vadd.f32 %v3564, %v3588
  %v3613 = vadd.f32 %v3565, %v3589
  %v3614 = vadd.f32 %v3566, %v3590
  %v3615 = vadd.f32 %v3567, %v3591
  %v3616 = vadd.f32 %v3568, %v3592
  %v3617 = vadd.f32 %v3569, %v3593
  %v3618 = vadd.f32 %v3570, %v3594
  %v3619 = vadd.f32 %v3571, %v3595
  %v3620 = vadd.f32 %v3572, %v3596
  %v3621 = vadd.f32 %v3573, %v3597
  %v3622 = vadd.f32 %v3574, %v3598
  %v3623 = vadd.f32 %v3575, %v3599
  %v3624 = vadd.f32 %v3576, %v3600
  %v3625 = vadd.f32 %v3577, %v3601
  %v3626 = vadd.f32 %v3578, %v3602
  %v3627 = vadd.f32 %v3579, %v3603
  %v3628 = vadd.f32 %v3580, %v3604
  %v3629 = vadd.f32 %v3581, %v3605
  %v3630 = vmul.f32 %v3348, 0.21300554
  %v3631 = vmul.f32 %v3349, 0.21300554
  %v3632 = vmul.f32 %v3350, 0.21300554
  %v3633 = vmul.f32 %v3351, 0.21300554
  %v3634 = vmul.f32 %v3352, 0.21300554
  %v3635 = vmul.f32 %v3353, 0.21300554
  %v3636 = vadd.f32 %v3606, %v3540
  %v3637 = vadd.f32 %v3607, %v3541
  %v3638 = vadd.f32 %v3608, %v3542
  %v3639 = vadd.f32 %v3609, %v3543
  %v3640 = vadd.f32 %v3610, %v3544
  %v3641 = vadd.f32 %v3611, %v3545
  %v3642 = vadd.f32 %v3612, %v3546
  %v3643 = vadd.f32 %v3613, %v3547
  %v3644 = vadd.f32 %v3614, %v3548
  %v3645 = vadd.f32 %v3615, %v3549
  %v3646 = vadd.f32 %v3616, %v3550
  %v3647 = vadd.f32 %v3617, %v3551
  %v3648 = vadd.f32 %v3618, %v3552
  %v3649 = vadd.f32 %v3619, %v3553
  %v3650 = vadd.f32 %v3620, %v3554
  %v3651 = vadd.f32 %v3621, %v3555
  %v3652 = vadd.f32 %v3622, %v3556
  %v3653 = vadd.f32 %v3623, %v3557
  %v3654 = vadd.f32 %v3624, %v3630
  %v3655 = vadd.f32 %v3625, %v3631
  %v3656 = vadd.f32 %v3626, %v3632
  %v3657 = vadd.f32 %v3627, %v3633
  %v3658 = vadd.f32 %v3628, %v3634
  %v3659 = vadd.f32 %v3629, %v3635
  %v3660 = vmul.f32 %v3345, 0.10936069
  %v3661 = vmul.f32 %v3346, 0.10936069
  %v3662 = vmul.f32 %v3347, 0.10936069
  %v3663 = vmul.f32 %v3348, 0.10936069
  %v3664 = vmul.f32 %v3349, 0.10936069
  %v3665 = vmul.f32 %v3350, 0.10936069
  %v3666 = vmul.f32 %v3351, 0.10936069
  %v3667 = vmul.f32 %v3352, 0.10936069
  %v3668 = vmul.f32 %v3353, 0.10936069
  %v3669 = vmul.f32 %v3354, 0.10936069
  %v3670 = vmul.f32 %v3355, 0.10936069
  %v3671 = vmul.f32 %v3356, 0.10936069
  %v3672 = vadd.f32 %v3636, %v3498
  %v3673 = vadd.f32 %v3637, %v3499
  %v3674 = vadd.f32 %v3638, %v3500
  %v3675 = vadd.f32 %v3639, %v3501
  %v3676 = vadd.f32 %v3640, %v3502
  %v3677 = vadd.f32 %v3641, %v3503
  %v3678 = vadd.f32 %v3642, %v3504
  %v3679 = vadd.f32 %v3643, %v3505
  %v3680 = vadd.f32 %v3644, %v3506
  %v3681 = vadd.f32 %v3645, %v3507
  %v3682 = vadd.f32 %v3646, %v3508
  %v3683 = vadd.f32 %v3647, %v3509
  %v3684 = vadd.f32 %v3648, %v3660
  %v3685 = vadd.f32 %v3649, %v3661
  %v3686 = vadd.f32 %v3650, %v3662
  %v3687 = vadd.f32 %v3651, %v3663
  %v3688 = vadd.f32 %v3652, %v3664
  %v3689 = vadd.f32 %v3653, %v3665
  %v3690 = vadd.f32 %v3654, %v3666
  %v3691 = vadd.f32 %v3655, %v3667
  %v3692 = vadd.f32 %v3656, %v3668
  %v3693 = vadd.f32 %v3657, %v3669
  %v3694 = vadd.f32 %v3658, %v3670
  %v3695 = vadd.f32 %v3659, %v3671
  %v3696 = vmul.f32 %v3342, 0.036000773
  %v3697 = vmul.f32 %v3343, 0.036000773
  %v3698 = vmul.f32 %v3344, 0.036000773
  %v3699 = vmul.f32 %v3345, 0.036000773
  %v3700 = vmul.f32 %v3346, 0.036000773
  %v3701 = vmul.f32 %v3347, 0.036000773
  %v3702 = vmul.f32 %v3348, 0.036000773
  %v3703 = vmul.f32 %v3349, 0.036000773
  %v3704 = vmul.f32 %v3350, 0.036000773
  %v3705 = vmul.f32 %v3351, 0.036000773
  %v3706 = vmul.f32 %v3352, 0.036000773
  %v3707 = vmul.f32 %v3353, 0.036000773
  %v3708 = vmul.f32 %v3354, 0.036000773
  %v3709 = vmul.f32 %v3355, 0.036000773
  %v3710 = vmul.f32 %v3356, 0.036000773
  %v3711 = vmul.f32 %v3357, 0.036000773
  %v3712 = vmul.f32 %v3358, 0.036000773
  %v3713 = vmul.f32 %v3359, 0.036000773
  %v3714 = vadd.f32 %v3672, %v3456
  %v3715 = vadd.f32 %v3673, %v3457
  %v3716 = vadd.f32 %v3674, %v3458
  %v3717 = vadd.f32 %v3675, %v3459
  %v3718 = vadd.f32 %v3676, %v3460
  %v3719 = vadd.f32 %v3677, %v3461
  %v3720 = vadd.f32 %v3678, %v3696
  %v3721 = vadd.f32 %v3679, %v3697
  %v3722 = vadd.f32 %v3680, %v3698
  %v3723 = vadd.f32 %v3681, %v3699
  %v3724 = vadd.f32 %v3682, %v3700
  %v3725 = vadd.f32 %v3683, %v3701
  %v3726 = vadd.f32 %v3684, %v3702
  %v3727 = vadd.f32 %v3685, %v3703
  %v3728 = vadd.f32 %v3686, %v3704
  %v3729 = vadd.f32 %v3687, %v3705
  %v3730 = vadd.f32 %v3688, %v3706
  %v3731 = vadd.f32 %v3689, %v3707
  %v3732 = vadd.f32 %v3690, %v3708
  %v3733 = vadd.f32 %v3691, %v3709
  %v3734 = vadd.f32 %v3692, %v3710
  %v3735 = vadd.f32 %v3693, %v3711
  %v3736 = vadd.f32 %v3694, %v3712
  %v3737 = vadd.f32 %v3695, %v3713
  %v3738 = vmul.f32 %v3339, 0.007598758
  %v3739 = vmul.f32 %v3340, 0.007598758
  %v3740 = vmul.f32 %v3341, 0.007598758
  %v3741 = vmul.f32 %v3342, 0.007598758
  %v3742 = vmul.f32 %v3343, 0.007598758
  %v3743 = vmul.f32 %v3344, 0.007598758
  %v3744 = vmul.f32 %v3345, 0.007598758
  %v3745 = vmul.f32 %v3346, 0.007598758
  %v3746 = vmul.f32 %v3347, 0.007598758
  %v3747 = vmul.f32 %v3348, 0.007598758
  %v3748 = vmul.f32 %v3349, 0.007598758
  %v3749 = vmul.f32 %v3350, 0.007598758
  %v3750 = vmul.f32 %v3351, 0.007598758
  %v3751 = vmul.f32 %v3352, 0.007598758
  %v3752 = vmul.f32 %v3353, 0.007598758
  %v3753 = vmul.f32 %v3354, 0.007598758
  %v3754 = vmul.f32 %v3355, 0.007598758
  %v3755 = vmul.f32 %v3356, 0.007598758
  %v3756 = vmul.f32 %v3357, 0.007598758
  %v3757 = vmul.f32 %v3358, 0.007598758
  %v3758 = vmul.f32 %v3359, 0.007598758
  %v3759 = vmul.f32 %v3360, 0.007598758
  %v3760 = vmul.f32 %v3361, 0.007598758
  %v3761 = vmul.f32 %v3362, 0.007598758
  %v3762 = vadd.f32 %v3714, %v3738
  %v3763 = vadd.f32 %v3715, %v3739
  %v3764 = vadd.f32 %v3716, %v3740
  %v3765 = vadd.f32 %v3717, %v3741
  %v3766 = vadd.f32 %v3718, %v3742
  %v3767 = vadd.f32 %v3719, %v3743
  %v3768 = vadd.f32 %v3720, %v3744
  %v3769 = vadd.f32 %v3721, %v3745
  %v3770 = vadd.f32 %v3722, %v3746
  %v3771 = vadd.f32 %v3723, %v3747
  %v3772 = vadd.f32 %v3724, %v3748
  %v3773 = vadd.f32 %v3725, %v3749
  %v3774 = vadd.f32 %v3726, %v3750
  %v3775 = vadd.f32 %v3727, %v3751
  %v3776 = vadd.f32 %v3728, %v3752
  %v3777 = vadd.f32 %v3729, %v3753
  %v3778 = vadd.f32 %v3730, %v3754
  %v3779 = vadd.f32 %v3731, %v3755
  %v3780 = vadd.f32 %v3732, %v3756
  %v3781 = vadd.f32 %v3733, %v3757
  %v3782 = vadd.f32 %v3734, %v3758
  %v3783 = vadd.f32 %v3735, %v3759
  %v3784 = vadd.f32 %v3736, %v3760
  %v3785 = vadd.f32 %v3737, %v3761
  %v3786 = vmul.f32 %v3342, 0.0010283801
  %v3787 = vmul.f32 %v3343, 0.0010283801
  %v3788 = vmul.f32 %v3344, 0.0010283801
  %v3789 = vmul.f32 %v3345, 0.0010283801
  %v3790 = vmul.f32 %v3346, 0.0010283801
  %v3791 = vmul.f32 %v3347, 0.0010283801
  %v3792 = vmul.f32 %v3348, 0.0010283801
  %v3793 = vmul.f32 %v3349, 0.0010283801
  %v3794 = vmul.f32 %v3350, 0.0010283801
  %v3795 = vmul.f32 %v3351, 0.0010283801
  %v3796 = vmul.f32 %v3352, 0.0010283801
  %v3797 = vmul.f32 %v3353, 0.0010283801
  %v3798 = vmul.f32 %v3354, 0.0010283801
  %v3799 = vmul.f32 %v3355, 0.0010283801
  %v3800 = vmul.f32 %v3356, 0.0010283801
  %v3801 = vmul.f32 %v3357, 0.0010283801
  %v3802 = vmul.f32 %v3358, 0.0010283801
  %v3803 = vmul.f32 %v3359, 0.0010283801
  %v3804 = vmul.f32 %v3360, 0.0010283801
  %v3805 = vmul.f32 %v3361, 0.0010283801
  %v3806 = vmul.f32 %v3362, 0.0010283801
  %v3807 = vmul.f32 %v3363, 0.0010283801
  %v3808 = vmul.f32 %v3364, 0.0010283801
  %v3809 = vmul.f32 %v3365, 0.0010283801
  %v3810 = vadd.f32 %v3762, %v3786
  %v3811 = vadd.f32 %v3763, %v3787
  %v3812 = vadd.f32 %v3764, %v3788
  %v3813 = vadd.f32 %v3765, %v3789
  %v3814 = vadd.f32 %v3766, %v3790
  %v3815 = vadd.f32 %v3767, %v3791
  %v3816 = vadd.f32 %v3768, %v3792
  %v3817 = vadd.f32 %v3769, %v3793
  %v3818 = vadd.f32 %v3770, %v3794
  %v3819 = vadd.f32 %v3771, %v3795
  %v3820 = vadd.f32 %v3772, %v3796
  %v3821 = vadd.f32 %v3773, %v3797
  %v3822 = vadd.f32 %v3774, %v3798
  %v3823 = vadd.f32 %v3775, %v3799
  %v3824 = vadd.f32 %v3776, %v3800
  %v3825 = vadd.f32 %v3777, %v3801
  %v3826 = vadd.f32 %v3778, %v3802
  %v3827 = vadd.f32 %v3779, %v3803
  %v3828 = vadd.f32 %v3780, %v3804
  %v3829 = vadd.f32 %v3781, %v3805
  %v3830 = vadd.f32 %v3782, %v3806
  %v3831 = vadd.f32 %v3783, %v3807
  %v3832 = vadd.f32 %v3784, %v3808
  %v3833 = vadd.f32 %v3785, %v3809
  %v3834 = vmul.f32 %v3810, 0.0010283801
  %v3835 = vmul.f32 %v3813, 0.0010283801
  %v3836 = vmul.f32 %v3816, 0.0010283801
  %v3837 = vmul.f32 %v3819, 0.0010283801
  %v3838 = vmul.f32 %v3822, 0.0010283801
  %v3839 = vmul.f32 %v3825, 0.0010283801
  %v3840 = vmul.f32 %v3828, 0.0010283801
  %v3841 = vmul.f32 %v3831, 0.0010283801
  %v3842 = vmul.f32 %v3810, 0.007598758
  %v3843 = vmul.f32 %v3811, 0.007598758
  %v3844 = vmul.f32 %v3813, 0.007598758
  %v3845 = vmul.f32 %v3814, 0.007598758
  %v3846 = vmul.f32 %v3816, 0.007598758
  %v3847 = vmul.f32 %v3817, 0.007598758
  %v3848 = vmul.f32 %v3819, 0.007598758
  %v3849 = vmul.f32 %v3820, 0.007598758
  %v3850 = vmul.f32 %v3822, 0.007598758
  %v3851 = vmul.f32 %v3823, 0.007598758
  %v3852 = vmul.f32 %v3825, 0.007598758
  %v3853 = vmul.f32 %v3826, 0.007598758
  %v3854 = vmul.f32 %v3828, 0.007598758
  %v3855 = vmul.f32 %v3829, 0.007598758
  %v3856 = vmul.f32 %v3831, 0.007598758
  %v3857 = vmul.f32 %v3832, 0.007598758
  %v3874 = vrot.slane %v3842, 1
  %v3875 = vrot.slane %v3843, 1
  %v3876 = vsel %vm627, %v3874, %v3875
  %v3877 = vrot.slane %v3844, 1
  %v3878 = vrot.slane %v3845, 1
  %v3879 = vsel %vm627, %v3877, %v3878
  %v3880 = vrot.slane %v3846, 1
  %v3881 = vrot.slane %v3847, 1
  %v3882 = vsel %vm627, %v3880, %v3881
  %v3883 = vrot.slane %v3848, 1
  %v3884 = vrot.slane %v3849, 1
  %v3885 = vsel %vm627, %v3883, %v3884
  %v3886 = vrot.slane %v3850, 1
  %v3887 = vrot.slane %v3851, 1
  %v3888 = vsel %vm627, %v3886, %v3887
  %v3889 = vrot.slane %v3852, 1
  %v3890 = vrot.slane %v3853, 1
  %v3891 = vsel %vm627, %v3889, %v3890
  %v3892 = vrot.slane %v3854, 1
  %v3893 = vrot.slane %v3855, 1
  %v3894 = vsel %vm627, %v3892, %v3893
  %v3895 = vrot.slane %v3856, 1
  %v3896 = vrot.slane %v3857, 1
  %v3897 = vsel %vm627, %v3895, %v3896
  %v3906 = vadd.f32 %v3834, %v3876
  %v3907 = vadd.f32 %v3835, %v3879
  %v3908 = vadd.f32 %v3836, %v3882
  %v3909 = vadd.f32 %v3837, %v3885
  %v3910 = vadd.f32 %v3838, %v3888
  %v3911 = vadd.f32 %v3839, %v3891
  %v3912 = vadd.f32 %v3840, %v3894
  %v3913 = vadd.f32 %v3841, %v3897
  %v3914 = vmul.f32 %v3810, 0.036000773
  %v3915 = vmul.f32 %v3811, 0.036000773
  %v3916 = vmul.f32 %v3813, 0.036000773
  %v3917 = vmul.f32 %v3814, 0.036000773
  %v3918 = vmul.f32 %v3816, 0.036000773
  %v3919 = vmul.f32 %v3817, 0.036000773
  %v3920 = vmul.f32 %v3819, 0.036000773
  %v3921 = vmul.f32 %v3820, 0.036000773
  %v3922 = vmul.f32 %v3822, 0.036000773
  %v3923 = vmul.f32 %v3823, 0.036000773
  %v3924 = vmul.f32 %v3825, 0.036000773
  %v3925 = vmul.f32 %v3826, 0.036000773
  %v3926 = vmul.f32 %v3828, 0.036000773
  %v3927 = vmul.f32 %v3829, 0.036000773
  %v3928 = vmul.f32 %v3831, 0.036000773
  %v3929 = vmul.f32 %v3832, 0.036000773
  %v3946 = vrot.slane %v3914, 2
  %v3947 = vrot.slane %v3915, 2
  %v3948 = vsel %vm700, %v3946, %v3947
  %v3949 = vrot.slane %v3916, 2
  %v3950 = vrot.slane %v3917, 2
  %v3951 = vsel %vm700, %v3949, %v3950
  %v3952 = vrot.slane %v3918, 2
  %v3953 = vrot.slane %v3919, 2
  %v3954 = vsel %vm700, %v3952, %v3953
  %v3955 = vrot.slane %v3920, 2
  %v3956 = vrot.slane %v3921, 2
  %v3957 = vsel %vm700, %v3955, %v3956
  %v3958 = vrot.slane %v3922, 2
  %v3959 = vrot.slane %v3923, 2
  %v3960 = vsel %vm700, %v3958, %v3959
  %v3961 = vrot.slane %v3924, 2
  %v3962 = vrot.slane %v3925, 2
  %v3963 = vsel %vm700, %v3961, %v3962
  %v3964 = vrot.slane %v3926, 2
  %v3965 = vrot.slane %v3927, 2
  %v3966 = vsel %vm700, %v3964, %v3965
  %v3967 = vrot.slane %v3928, 2
  %v3968 = vrot.slane %v3929, 2
  %v3969 = vsel %vm700, %v3967, %v3968
  %v3978 = vadd.f32 %v3906, %v3948
  %v3979 = vadd.f32 %v3907, %v3951
  %v3980 = vadd.f32 %v3908, %v3954
  %v3981 = vadd.f32 %v3909, %v3957
  %v3982 = vadd.f32 %v3910, %v3960
  %v3983 = vadd.f32 %v3911, %v3963
  %v3984 = vadd.f32 %v3912, %v3966
  %v3985 = vadd.f32 %v3913, %v3969
  %v3986 = vmul.f32 %v3810, 0.10936069
  %v3987 = vmul.f32 %v3811, 0.10936069
  %v3988 = vmul.f32 %v3813, 0.10936069
  %v3989 = vmul.f32 %v3814, 0.10936069
  %v3990 = vmul.f32 %v3816, 0.10936069
  %v3991 = vmul.f32 %v3817, 0.10936069
  %v3992 = vmul.f32 %v3819, 0.10936069
  %v3993 = vmul.f32 %v3820, 0.10936069
  %v3994 = vmul.f32 %v3822, 0.10936069
  %v3995 = vmul.f32 %v3823, 0.10936069
  %v3996 = vmul.f32 %v3825, 0.10936069
  %v3997 = vmul.f32 %v3826, 0.10936069
  %v3998 = vmul.f32 %v3828, 0.10936069
  %v3999 = vmul.f32 %v3829, 0.10936069
  %v4000 = vmul.f32 %v3831, 0.10936069
  %v4001 = vmul.f32 %v3832, 0.10936069
  %v4018 = vrot.slane %v3986, 3
  %v4019 = vrot.slane %v3987, 3
  %v4020 = vsel %vm773, %v4018, %v4019
  %v4021 = vrot.slane %v3988, 3
  %v4022 = vrot.slane %v3989, 3
  %v4023 = vsel %vm773, %v4021, %v4022
  %v4024 = vrot.slane %v3990, 3
  %v4025 = vrot.slane %v3991, 3
  %v4026 = vsel %vm773, %v4024, %v4025
  %v4027 = vrot.slane %v3992, 3
  %v4028 = vrot.slane %v3993, 3
  %v4029 = vsel %vm773, %v4027, %v4028
  %v4030 = vrot.slane %v3994, 3
  %v4031 = vrot.slane %v3995, 3
  %v4032 = vsel %vm773, %v4030, %v4031
  %v4033 = vrot.slane %v3996, 3
  %v4034 = vrot.slane %v3997, 3
  %v4035 = vsel %vm773, %v4033, %v4034
  %v4036 = vrot.slane %v3998, 3
  %v4037 = vrot.slane %v3999, 3
  %v4038 = vsel %vm773, %v4036, %v4037
  %v4039 = vrot.slane %v4000, 3
  %v4040 = vrot.slane %v4001, 3
  %v4041 = vsel %vm773, %v4039, %v4040
  %v4050 = vadd.f32 %v3978, %v4020
  %v4051 = vadd.f32 %v3979, %v4023
  %v4052 = vadd.f32 %v3980, %v4026
  %v4053 = vadd.f32 %v3981, %v4029
  %v4054 = vadd.f32 %v3982, %v4032
  %v4055 = vadd.f32 %v3983, %v4035
  %v4056 = vadd.f32 %v3984, %v4038
  %v4057 = vadd.f32 %v3985, %v4041
  %v4058 = vmul.f32 %v3810, 0.21300554
  %v4059 = vmul.f32 %v3811, 0.21300554
  %v4060 = vmul.f32 %v3813, 0.21300554
  %v4061 = vmul.f32 %v3814, 0.21300554
  %v4062 = vmul.f32 %v3816, 0.21300554
  %v4063 = vmul.f32 %v3817, 0.21300554
  %v4064 = vmul.f32 %v3819, 0.21300554
  %v4065 = vmul.f32 %v3820, 0.21300554
  %v4066 = vmul.f32 %v3822, 0.21300554
  %v4067 = vmul.f32 %v3823, 0.21300554
  %v4068 = vmul.f32 %v3825, 0.21300554
  %v4069 = vmul.f32 %v3826, 0.21300554
  %v4070 = vmul.f32 %v3828, 0.21300554
  %v4071 = vmul.f32 %v3829, 0.21300554
  %v4072 = vmul.f32 %v3831, 0.21300554
  %v4073 = vmul.f32 %v3832, 0.21300554
  %v4090 = vrot.slane %v4058, 4
  %v4091 = vrot.slane %v4059, 4
  %v4092 = vsel %vm846, %v4090, %v4091
  %v4093 = vrot.slane %v4060, 4
  %v4094 = vrot.slane %v4061, 4
  %v4095 = vsel %vm846, %v4093, %v4094
  %v4096 = vrot.slane %v4062, 4
  %v4097 = vrot.slane %v4063, 4
  %v4098 = vsel %vm846, %v4096, %v4097
  %v4099 = vrot.slane %v4064, 4
  %v4100 = vrot.slane %v4065, 4
  %v4101 = vsel %vm846, %v4099, %v4100
  %v4102 = vrot.slane %v4066, 4
  %v4103 = vrot.slane %v4067, 4
  %v4104 = vsel %vm846, %v4102, %v4103
  %v4105 = vrot.slane %v4068, 4
  %v4106 = vrot.slane %v4069, 4
  %v4107 = vsel %vm846, %v4105, %v4106
  %v4108 = vrot.slane %v4070, 4
  %v4109 = vrot.slane %v4071, 4
  %v4110 = vsel %vm846, %v4108, %v4109
  %v4111 = vrot.slane %v4072, 4
  %v4112 = vrot.slane %v4073, 4
  %v4113 = vsel %vm846, %v4111, %v4112
  %v4122 = vadd.f32 %v4050, %v4092
  %v4123 = vadd.f32 %v4051, %v4095
  %v4124 = vadd.f32 %v4052, %v4098
  %v4125 = vadd.f32 %v4053, %v4101
  %v4126 = vadd.f32 %v4054, %v4104
  %v4127 = vadd.f32 %v4055, %v4107
  %v4128 = vadd.f32 %v4056, %v4110
  %v4129 = vadd.f32 %v4057, %v4113
  %v4130 = vmul.f32 %v3810, 0.26601171
  %v4131 = vmul.f32 %v3811, 0.26601171
  %v4132 = vmul.f32 %v3813, 0.26601171
  %v4133 = vmul.f32 %v3814, 0.26601171
  %v4134 = vmul.f32 %v3816, 0.26601171
  %v4135 = vmul.f32 %v3817, 0.26601171
  %v4136 = vmul.f32 %v3819, 0.26601171
  %v4137 = vmul.f32 %v3820, 0.26601171
  %v4138 = vmul.f32 %v3822, 0.26601171
  %v4139 = vmul.f32 %v3823, 0.26601171
  %v4140 = vmul.f32 %v3825, 0.26601171
  %v4141 = vmul.f32 %v3826, 0.26601171
  %v4142 = vmul.f32 %v3828, 0.26601171
  %v4143 = vmul.f32 %v3829, 0.26601171
  %v4144 = vmul.f32 %v3831, 0.26601171
  %v4145 = vmul.f32 %v3832, 0.26601171
  %v4162 = vrot.slane %v4130, 5
  %v4163 = vrot.slane %v4131, 5
  %v4164 = vsel %vm919, %v4162, %v4163
  %v4165 = vrot.slane %v4132, 5
  %v4166 = vrot.slane %v4133, 5
  %v4167 = vsel %vm919, %v4165, %v4166
  %v4168 = vrot.slane %v4134, 5
  %v4169 = vrot.slane %v4135, 5
  %v4170 = vsel %vm919, %v4168, %v4169
  %v4171 = vrot.slane %v4136, 5
  %v4172 = vrot.slane %v4137, 5
  %v4173 = vsel %vm919, %v4171, %v4172
  %v4174 = vrot.slane %v4138, 5
  %v4175 = vrot.slane %v4139, 5
  %v4176 = vsel %vm919, %v4174, %v4175
  %v4177 = vrot.slane %v4140, 5
  %v4178 = vrot.slane %v4141, 5
  %v4179 = vsel %vm919, %v4177, %v4178
  %v4180 = vrot.slane %v4142, 5
  %v4181 = vrot.slane %v4143, 5
  %v4182 = vsel %vm919, %v4180, %v4181
  %v4183 = vrot.slane %v4144, 5
  %v4184 = vrot.slane %v4145, 5
  %v4185 = vsel %vm919, %v4183, %v4184
  %v4194 = vadd.f32 %v4122, %v4164
  %v4195 = vadd.f32 %v4123, %v4167
  %v4196 = vadd.f32 %v4124, %v4170
  %v4197 = vadd.f32 %v4125, %v4173
  %v4198 = vadd.f32 %v4126, %v4176
  %v4199 = vadd.f32 %v4127, %v4179
  %v4200 = vadd.f32 %v4128, %v4182
  %v4201 = vadd.f32 %v4129, %v4185
  %v4202 = vrot.slane %v4058, 6
  %v4203 = vrot.slane %v4059, 6
  %v4204 = vsel %vm960, %v4202, %v4203
  %v4205 = vrot.slane %v4060, 6
  %v4206 = vrot.slane %v4061, 6
  %v4207 = vsel %vm960, %v4205, %v4206
  %v4208 = vrot.slane %v4062, 6
  %v4209 = vrot.slane %v4063, 6
  %v4210 = vsel %vm960, %v4208, %v4209
  %v4211 = vrot.slane %v4064, 6
  %v4212 = vrot.slane %v4065, 6
  %v4213 = vsel %vm960, %v4211, %v4212
  %v4214 = vrot.slane %v4066, 6
  %v4215 = vrot.slane %v4067, 6
  %v4216 = vsel %vm960, %v4214, %v4215
  %v4217 = vrot.slane %v4068, 6
  %v4218 = vrot.slane %v4069, 6
  %v4219 = vsel %vm960, %v4217, %v4218
  %v4220 = vrot.slane %v4070, 6
  %v4221 = vrot.slane %v4071, 6
  %v4222 = vsel %vm960, %v4220, %v4221
  %v4223 = vrot.slane %v4072, 6
  %v4224 = vrot.slane %v4073, 6
  %v4225 = vsel %vm960, %v4223, %v4224
  %v4234 = vadd.f32 %v4194, %v4204
  %v4235 = vadd.f32 %v4195, %v4207
  %v4236 = vadd.f32 %v4196, %v4210
  %v4237 = vadd.f32 %v4197, %v4213
  %v4238 = vadd.f32 %v4198, %v4216
  %v4239 = vadd.f32 %v4199, %v4219
  %v4240 = vadd.f32 %v4200, %v4222
  %v4241 = vadd.f32 %v4201, %v4225
  %v4242 = vrot.slane %v3986, 7
  %v4243 = vrot.slane %v3987, 7
  %v4244 = vsel %vm1001, %v4242, %v4243
  %v4245 = vrot.slane %v3988, 7
  %v4246 = vrot.slane %v3989, 7
  %v4247 = vsel %vm1001, %v4245, %v4246
  %v4248 = vrot.slane %v3990, 7
  %v4249 = vrot.slane %v3991, 7
  %v4250 = vsel %vm1001, %v4248, %v4249
  %v4251 = vrot.slane %v3992, 7
  %v4252 = vrot.slane %v3993, 7
  %v4253 = vsel %vm1001, %v4251, %v4252
  %v4254 = vrot.slane %v3994, 7
  %v4255 = vrot.slane %v3995, 7
  %v4256 = vsel %vm1001, %v4254, %v4255
  %v4257 = vrot.slane %v3996, 7
  %v4258 = vrot.slane %v3997, 7
  %v4259 = vsel %vm1001, %v4257, %v4258
  %v4260 = vrot.slane %v3998, 7
  %v4261 = vrot.slane %v3999, 7
  %v4262 = vsel %vm1001, %v4260, %v4261
  %v4263 = vrot.slane %v4000, 7
  %v4264 = vrot.slane %v4001, 7
  %v4265 = vsel %vm1001, %v4263, %v4264
  %v4274 = vadd.f32 %v4234, %v4244
  %v4275 = vadd.f32 %v4235, %v4247
  %v4276 = vadd.f32 %v4236, %v4250
  %v4277 = vadd.f32 %v4237, %v4253
  %v4278 = vadd.f32 %v4238, %v4256
  %v4279 = vadd.f32 %v4239, %v4259
  %v4280 = vadd.f32 %v4240, %v4262
  %v4281 = vadd.f32 %v4241, %v4265
  %v4282 = vadd.f32 %v4274, %v3915
  %v4283 = vadd.f32 %v4275, %v3917
  %v4284 = vadd.f32 %v4276, %v3919
  %v4285 = vadd.f32 %v4277, %v3921
  %v4286 = vadd.f32 %v4278, %v3923
  %v4287 = vadd.f32 %v4279, %v3925
  %v4288 = vadd.f32 %v4280, %v3927
  %v4289 = vadd.f32 %v4281, %v3929
  %v4290 = vmul.f32 %v3812, 0.007598758
  %v4291 = vmul.f32 %v3815, 0.007598758
  %v4292 = vmul.f32 %v3818, 0.007598758
  %v4293 = vmul.f32 %v3821, 0.007598758
  %v4294 = vmul.f32 %v3824, 0.007598758
  %v4295 = vmul.f32 %v3827, 0.007598758
  %v4296 = vmul.f32 %v3830, 0.007598758
  %v4297 = vmul.f32 %v3833, 0.007598758
  %v4306 = vrot.slane %v4290, 1
  %v4307 = vsel %vm627, %v3875, %v4306
  %v4308 = vrot.slane %v4291, 1
  %v4309 = vsel %vm627, %v3878, %v4308
  %v4310 = vrot.slane %v4292, 1
  %v4311 = vsel %vm627, %v3881, %v4310
  %v4312 = vrot.slane %v4293, 1
  %v4313 = vsel %vm627, %v3884, %v4312
  %v4314 = vrot.slane %v4294, 1
  %v4315 = vsel %vm627, %v3887, %v4314
  %v4316 = vrot.slane %v4295, 1
  %v4317 = vsel %vm627, %v3890, %v4316
  %v4318 = vrot.slane %v4296, 1
  %v4319 = vsel %vm627, %v3893, %v4318
  %v4320 = vrot.slane %v4297, 1
  %v4321 = vsel %vm627, %v3896, %v4320
  %v4330 = vadd.f32 %v4282, %v4307
  %v4331 = vadd.f32 %v4283, %v4309
  %v4332 = vadd.f32 %v4284, %v4311
  %v4333 = vadd.f32 %v4285, %v4313
  %v4334 = vadd.f32 %v4286, %v4315
  %v4335 = vadd.f32 %v4287, %v4317
  %v4336 = vadd.f32 %v4288, %v4319
  %v4337 = vadd.f32 %v4289, %v4321
  %v4338 = vmul.f32 %v3811, 0.0010283801
  %v4339 = vmul.f32 %v3812, 0.0010283801
  %v4340 = vmul.f32 %v3814, 0.0010283801
  %v4341 = vmul.f32 %v3815, 0.0010283801
  %v4342 = vmul.f32 %v3817, 0.0010283801
  %v4343 = vmul.f32 %v3818, 0.0010283801
  %v4344 = vmul.f32 %v3820, 0.0010283801
  %v4345 = vmul.f32 %v3821, 0.0010283801
  %v4346 = vmul.f32 %v3823, 0.0010283801
  %v4347 = vmul.f32 %v3824, 0.0010283801
  %v4348 = vmul.f32 %v3826, 0.0010283801
  %v4349 = vmul.f32 %v3827, 0.0010283801
  %v4350 = vmul.f32 %v3829, 0.0010283801
  %v4351 = vmul.f32 %v3830, 0.0010283801
  %v4352 = vmul.f32 %v3832, 0.0010283801
  %v4353 = vmul.f32 %v3833, 0.0010283801
  %v4370 = vrot.slane %v4338, 2
  %v4371 = vrot.slane %v4339, 2
  %v4372 = vsel %vm700, %v4370, %v4371
  %v4373 = vrot.slane %v4340, 2
  %v4374 = vrot.slane %v4341, 2
  %v4375 = vsel %vm700, %v4373, %v4374
  %v4376 = vrot.slane %v4342, 2
  %v4377 = vrot.slane %v4343, 2
  %v4378 = vsel %vm700, %v4376, %v4377
  %v4379 = vrot.slane %v4344, 2
  %v4380 = vrot.slane %v4345, 2
  %v4381 = vsel %vm700, %v4379, %v4380
  %v4382 = vrot.slane %v4346, 2
  %v4383 = vrot.slane %v4347, 2
  %v4384 = vsel %vm700, %v4382, %v4383
  %v4385 = vrot.slane %v4348, 2
  %v4386 = vrot.slane %v4349, 2
  %v4387 = vsel %vm700, %v4385, %v4386
  %v4388 = vrot.slane %v4350, 2
  %v4389 = vrot.slane %v4351, 2
  %v4390 = vsel %vm700, %v4388, %v4389
  %v4391 = vrot.slane %v4352, 2
  %v4392 = vrot.slane %v4353, 2
  %v4393 = vsel %vm700, %v4391, %v4392
  %v4402 = vadd.f32 %v4330, %v4372
  %v4403 = vadd.f32 %v4331, %v4375
  %v4404 = vadd.f32 %v4332, %v4378
  %v4405 = vadd.f32 %v4333, %v4381
  %v4406 = vadd.f32 %v4334, %v4384
  %v4407 = vadd.f32 %v4335, %v4387
  %v4408 = vadd.f32 %v4336, %v4390
  %v4409 = vadd.f32 %v4337, %v4393
  %v4410 = vmul.f32 %v11, %v65
  %v4411 = vmul.f32 %v12, %v66
  %v4412 = vmul.f32 %v13, %v67
  %v4413 = vmul.f32 %v14, %v68
  %v4414 = vmul.f32 %v15, %v69
  %v4415 = vmul.f32 %v16, %v70
  %v4416 = vmul.f32 %v17, %v71
  %v4417 = vmul.f32 %v18, %v72
  %v4418 = vmul.f32 %v19, %v73
  %v4419 = vmul.f32 %v20, %v74
  %v4420 = vmul.f32 %v21, %v75
  %v4421 = vmul.f32 %v22, %v76
  %v4422 = vmul.f32 %v23, %v77
  %v4423 = vmul.f32 %v24, %v78
  %v4424 = vmul.f32 %v25, %v79
  %v4425 = vmul.f32 %v26, %v80
  %v4426 = vmul.f32 %v27, %v81
  %v4427 = vmul.f32 %v28, %v82
  %v4428 = vmul.f32 %v29, %v83
  %v4429 = vmul.f32 %v30, %v84
  %v4430 = vmul.f32 %v31, %v85
  %v4431 = vmul.f32 %v32, %v86
  %v4432 = vmul.f32 %v33, %v87
  %v4433 = vmul.f32 %v34, %v88
  %v4434 = vmul.f32 %v35, %v89
  %v4435 = vmul.f32 %v36, %v90
  %v4436 = vmul.f32 %v37, %v91
  %v4437 = vmul.f32 %v38, %v92
  %v4438 = vmul.f32 %v39, %v93
  %v4439 = vmul.f32 %v40, %v94
  %v4440 = vmul.f32 %v41, %v95
  %v4441 = vmul.f32 %v42, %v96
  %v4442 = vmul.f32 %v43, %v97
  %v4443 = vmul.f32 %v44, %v98
  %v4444 = vmul.f32 %v45, %v99
  %v4445 = vmul.f32 %v46, %v100
  %v4446 = vmul.f32 %v47, %v101
  %v4447 = vmul.f32 %v48, %v102
  %v4448 = vmul.f32 %v49, %v103
  %v4449 = vmul.f32 %v50, %v104
  %v4450 = vmul.f32 %v51, %v105
  %v4451 = vmul.f32 %v52, %v106
  %v4452 = vmul.f32 %v53, %v107
  %v4453 = vmul.f32 %v54, %v108
  %v4454 = vmul.f32 %v55, %v109
  %v4455 = vmul.f32 %v56, %v110
  %v4456 = vmul.f32 %v57, %v111
  %v4457 = vmul.f32 %v58, %v112
  %v4458 = vmul.f32 %v59, %v113
  %v4459 = vmul.f32 %v60, %v114
  %v4460 = vmul.f32 %v61, %v115
  %v4461 = vmul.f32 %v62, %v116
  %v4462 = vmul.f32 %v63, %v117
  %v4463 = vmul.f32 %v64, %v118
  %v4464 = vmul.f32 %v4410, 0.0010283801
  %v4465 = vmul.f32 %v4411, 0.0010283801
  %v4466 = vmul.f32 %v4412, 0.0010283801
  %v4467 = vmul.f32 %v4413, 0.0010283801
  %v4468 = vmul.f32 %v4414, 0.0010283801
  %v4469 = vmul.f32 %v4415, 0.0010283801
  %v4470 = vmul.f32 %v4416, 0.0010283801
  %v4471 = vmul.f32 %v4417, 0.0010283801
  %v4472 = vmul.f32 %v4418, 0.0010283801
  %v4473 = vmul.f32 %v4419, 0.0010283801
  %v4474 = vmul.f32 %v4420, 0.0010283801
  %v4475 = vmul.f32 %v4421, 0.0010283801
  %v4476 = vmul.f32 %v4422, 0.0010283801
  %v4477 = vmul.f32 %v4423, 0.0010283801
  %v4478 = vmul.f32 %v4424, 0.0010283801
  %v4479 = vmul.f32 %v4425, 0.0010283801
  %v4480 = vmul.f32 %v4426, 0.0010283801
  %v4481 = vmul.f32 %v4427, 0.0010283801
  %v4482 = vmul.f32 %v4428, 0.0010283801
  %v4483 = vmul.f32 %v4429, 0.0010283801
  %v4484 = vmul.f32 %v4430, 0.0010283801
  %v4485 = vmul.f32 %v4431, 0.0010283801
  %v4486 = vmul.f32 %v4432, 0.0010283801
  %v4487 = vmul.f32 %v4433, 0.0010283801
  %v4488 = vmul.f32 %v4413, 0.007598758
  %v4489 = vmul.f32 %v4414, 0.007598758
  %v4490 = vmul.f32 %v4415, 0.007598758
  %v4491 = vmul.f32 %v4416, 0.007598758
  %v4492 = vmul.f32 %v4417, 0.007598758
  %v4493 = vmul.f32 %v4418, 0.007598758
  %v4494 = vmul.f32 %v4419, 0.007598758
  %v4495 = vmul.f32 %v4420, 0.007598758
  %v4496 = vmul.f32 %v4421, 0.007598758
  %v4497 = vmul.f32 %v4422, 0.007598758
  %v4498 = vmul.f32 %v4423, 0.007598758
  %v4499 = vmul.f32 %v4424, 0.007598758
  %v4500 = vmul.f32 %v4425, 0.007598758
  %v4501 = vmul.f32 %v4426, 0.007598758
  %v4502 = vmul.f32 %v4427, 0.007598758
  %v4503 = vmul.f32 %v4428, 0.007598758
  %v4504 = vmul.f32 %v4429, 0.007598758
  %v4505 = vmul.f32 %v4430, 0.007598758
  %v4506 = vmul.f32 %v4431, 0.007598758
  %v4507 = vmul.f32 %v4432, 0.007598758
  %v4508 = vmul.f32 %v4433, 0.007598758
  %v4509 = vmul.f32 %v4434, 0.007598758
  %v4510 = vmul.f32 %v4435, 0.007598758
  %v4511 = vmul.f32 %v4436, 0.007598758
  %v4512 = vadd.f32 %v4464, %v4488
  %v4513 = vadd.f32 %v4465, %v4489
  %v4514 = vadd.f32 %v4466, %v4490
  %v4515 = vadd.f32 %v4467, %v4491
  %v4516 = vadd.f32 %v4468, %v4492
  %v4517 = vadd.f32 %v4469, %v4493
  %v4518 = vadd.f32 %v4470, %v4494
  %v4519 = vadd.f32 %v4471, %v4495
  %v4520 = vadd.f32 %v4472, %v4496
  %v4521 = vadd.f32 %v4473, %v4497
  %v4522 = vadd.f32 %v4474, %v4498
  %v4523 = vadd.f32 %v4475, %v4499
  %v4524 = vadd.f32 %v4476, %v4500
  %v4525 = vadd.f32 %v4477, %v4501
  %v4526 = vadd.f32 %v4478, %v4502
  %v4527 = vadd.f32 %v4479, %v4503
  %v4528 = vadd.f32 %v4480, %v4504
  %v4529 = vadd.f32 %v4481, %v4505
  %v4530 = vadd.f32 %v4482, %v4506
  %v4531 = vadd.f32 %v4483, %v4507
  %v4532 = vadd.f32 %v4484, %v4508
  %v4533 = vadd.f32 %v4485, %v4509
  %v4534 = vadd.f32 %v4486, %v4510
  %v4535 = vadd.f32 %v4487, %v4511
  %v4536 = vmul.f32 %v4416, 0.036000773
  %v4537 = vmul.f32 %v4417, 0.036000773
  %v4538 = vmul.f32 %v4418, 0.036000773
  %v4539 = vmul.f32 %v4419, 0.036000773
  %v4540 = vmul.f32 %v4420, 0.036000773
  %v4541 = vmul.f32 %v4421, 0.036000773
  %v4542 = vmul.f32 %v4422, 0.036000773
  %v4543 = vmul.f32 %v4423, 0.036000773
  %v4544 = vmul.f32 %v4424, 0.036000773
  %v4545 = vmul.f32 %v4425, 0.036000773
  %v4546 = vmul.f32 %v4426, 0.036000773
  %v4547 = vmul.f32 %v4427, 0.036000773
  %v4548 = vmul.f32 %v4428, 0.036000773
  %v4549 = vmul.f32 %v4429, 0.036000773
  %v4550 = vmul.f32 %v4430, 0.036000773
  %v4551 = vmul.f32 %v4431, 0.036000773
  %v4552 = vmul.f32 %v4432, 0.036000773
  %v4553 = vmul.f32 %v4433, 0.036000773
  %v4554 = vmul.f32 %v4434, 0.036000773
  %v4555 = vmul.f32 %v4435, 0.036000773
  %v4556 = vmul.f32 %v4436, 0.036000773
  %v4557 = vmul.f32 %v4437, 0.036000773
  %v4558 = vmul.f32 %v4438, 0.036000773
  %v4559 = vmul.f32 %v4439, 0.036000773
  %v4560 = vadd.f32 %v4512, %v4536
  %v4561 = vadd.f32 %v4513, %v4537
  %v4562 = vadd.f32 %v4514, %v4538
  %v4563 = vadd.f32 %v4515, %v4539
  %v4564 = vadd.f32 %v4516, %v4540
  %v4565 = vadd.f32 %v4517, %v4541
  %v4566 = vadd.f32 %v4518, %v4542
  %v4567 = vadd.f32 %v4519, %v4543
  %v4568 = vadd.f32 %v4520, %v4544
  %v4569 = vadd.f32 %v4521, %v4545
  %v4570 = vadd.f32 %v4522, %v4546
  %v4571 = vadd.f32 %v4523, %v4547
  %v4572 = vadd.f32 %v4524, %v4548
  %v4573 = vadd.f32 %v4525, %v4549
  %v4574 = vadd.f32 %v4526, %v4550
  %v4575 = vadd.f32 %v4527, %v4551
  %v4576 = vadd.f32 %v4528, %v4552
  %v4577 = vadd.f32 %v4529, %v4553
  %v4578 = vadd.f32 %v4530, %v4554
  %v4579 = vadd.f32 %v4531, %v4555
  %v4580 = vadd.f32 %v4532, %v4556
  %v4581 = vadd.f32 %v4533, %v4557
  %v4582 = vadd.f32 %v4534, %v4558
  %v4583 = vadd.f32 %v4535, %v4559
  %v4584 = vmul.f32 %v4419, 0.10936069
  %v4585 = vmul.f32 %v4420, 0.10936069
  %v4586 = vmul.f32 %v4421, 0.10936069
  %v4587 = vmul.f32 %v4422, 0.10936069
  %v4588 = vmul.f32 %v4423, 0.10936069
  %v4589 = vmul.f32 %v4424, 0.10936069
  %v4590 = vmul.f32 %v4425, 0.10936069
  %v4591 = vmul.f32 %v4426, 0.10936069
  %v4592 = vmul.f32 %v4427, 0.10936069
  %v4593 = vmul.f32 %v4428, 0.10936069
  %v4594 = vmul.f32 %v4429, 0.10936069
  %v4595 = vmul.f32 %v4430, 0.10936069
  %v4596 = vmul.f32 %v4431, 0.10936069
  %v4597 = vmul.f32 %v4432, 0.10936069
  %v4598 = vmul.f32 %v4433, 0.10936069
  %v4599 = vmul.f32 %v4434, 0.10936069
  %v4600 = vmul.f32 %v4435, 0.10936069
  %v4601 = vmul.f32 %v4436, 0.10936069
  %v4602 = vmul.f32 %v4437, 0.10936069
  %v4603 = vmul.f32 %v4438, 0.10936069
  %v4604 = vmul.f32 %v4439, 0.10936069
  %v4605 = vmul.f32 %v4440, 0.10936069
  %v4606 = vmul.f32 %v4441, 0.10936069
  %v4607 = vmul.f32 %v4442, 0.10936069
  %v4608 = vadd.f32 %v4560, %v4584
  %v4609 = vadd.f32 %v4561, %v4585
  %v4610 = vadd.f32 %v4562, %v4586
  %v4611 = vadd.f32 %v4563, %v4587
  %v4612 = vadd.f32 %v4564, %v4588
  %v4613 = vadd.f32 %v4565, %v4589
  %v4614 = vadd.f32 %v4566, %v4590
  %v4615 = vadd.f32 %v4567, %v4591
  %v4616 = vadd.f32 %v4568, %v4592
  %v4617 = vadd.f32 %v4569, %v4593
  %v4618 = vadd.f32 %v4570, %v4594
  %v4619 = vadd.f32 %v4571, %v4595
  %v4620 = vadd.f32 %v4572, %v4596
  %v4621 = vadd.f32 %v4573, %v4597
  %v4622 = vadd.f32 %v4574, %v4598
  %v4623 = vadd.f32 %v4575, %v4599
  %v4624 = vadd.f32 %v4576, %v4600
  %v4625 = vadd.f32 %v4577, %v4601
  %v4626 = vadd.f32 %v4578, %v4602
  %v4627 = vadd.f32 %v4579, %v4603
  %v4628 = vadd.f32 %v4580, %v4604
  %v4629 = vadd.f32 %v4581, %v4605
  %v4630 = vadd.f32 %v4582, %v4606
  %v4631 = vadd.f32 %v4583, %v4607
  %v4632 = vmul.f32 %v4422, 0.21300554
  %v4633 = vmul.f32 %v4423, 0.21300554
  %v4634 = vmul.f32 %v4424, 0.21300554
  %v4635 = vmul.f32 %v4425, 0.21300554
  %v4636 = vmul.f32 %v4426, 0.21300554
  %v4637 = vmul.f32 %v4427, 0.21300554
  %v4638 = vmul.f32 %v4428, 0.21300554
  %v4639 = vmul.f32 %v4429, 0.21300554
  %v4640 = vmul.f32 %v4430, 0.21300554
  %v4641 = vmul.f32 %v4431, 0.21300554
  %v4642 = vmul.f32 %v4432, 0.21300554
  %v4643 = vmul.f32 %v4433, 0.21300554
  %v4644 = vmul.f32 %v4434, 0.21300554
  %v4645 = vmul.f32 %v4435, 0.21300554
  %v4646 = vmul.f32 %v4436, 0.21300554
  %v4647 = vmul.f32 %v4437, 0.21300554
  %v4648 = vmul.f32 %v4438, 0.21300554
  %v4649 = vmul.f32 %v4439, 0.21300554
  %v4650 = vmul.f32 %v4440, 0.21300554
  %v4651 = vmul.f32 %v4441, 0.21300554
  %v4652 = vmul.f32 %v4442, 0.21300554
  %v4653 = vmul.f32 %v4443, 0.21300554
  %v4654 = vmul.f32 %v4444, 0.21300554
  %v4655 = vmul.f32 %v4445, 0.21300554
  %v4656 = vadd.f32 %v4608, %v4632
  %v4657 = vadd.f32 %v4609, %v4633
  %v4658 = vadd.f32 %v4610, %v4634
  %v4659 = vadd.f32 %v4611, %v4635
  %v4660 = vadd.f32 %v4612, %v4636
  %v4661 = vadd.f32 %v4613, %v4637
  %v4662 = vadd.f32 %v4614, %v4638
  %v4663 = vadd.f32 %v4615, %v4639
  %v4664 = vadd.f32 %v4616, %v4640
  %v4665 = vadd.f32 %v4617, %v4641
  %v4666 = vadd.f32 %v4618, %v4642
  %v4667 = vadd.f32 %v4619, %v4643
  %v4668 = vadd.f32 %v4620, %v4644
  %v4669 = vadd.f32 %v4621, %v4645
  %v4670 = vadd.f32 %v4622, %v4646
  %v4671 = vadd.f32 %v4623, %v4647
  %v4672 = vadd.f32 %v4624, %v4648
  %v4673 = vadd.f32 %v4625, %v4649
  %v4674 = vadd.f32 %v4626, %v4650
  %v4675 = vadd.f32 %v4627, %v4651
  %v4676 = vadd.f32 %v4628, %v4652
  %v4677 = vadd.f32 %v4629, %v4653
  %v4678 = vadd.f32 %v4630, %v4654
  %v4679 = vadd.f32 %v4631, %v4655
  %v4680 = vmul.f32 %v4425, 0.26601171
  %v4681 = vmul.f32 %v4426, 0.26601171
  %v4682 = vmul.f32 %v4427, 0.26601171
  %v4683 = vmul.f32 %v4428, 0.26601171
  %v4684 = vmul.f32 %v4429, 0.26601171
  %v4685 = vmul.f32 %v4430, 0.26601171
  %v4686 = vmul.f32 %v4431, 0.26601171
  %v4687 = vmul.f32 %v4432, 0.26601171
  %v4688 = vmul.f32 %v4433, 0.26601171
  %v4689 = vmul.f32 %v4434, 0.26601171
  %v4690 = vmul.f32 %v4435, 0.26601171
  %v4691 = vmul.f32 %v4436, 0.26601171
  %v4692 = vmul.f32 %v4437, 0.26601171
  %v4693 = vmul.f32 %v4438, 0.26601171
  %v4694 = vmul.f32 %v4439, 0.26601171
  %v4695 = vmul.f32 %v4440, 0.26601171
  %v4696 = vmul.f32 %v4441, 0.26601171
  %v4697 = vmul.f32 %v4442, 0.26601171
  %v4698 = vmul.f32 %v4443, 0.26601171
  %v4699 = vmul.f32 %v4444, 0.26601171
  %v4700 = vmul.f32 %v4445, 0.26601171
  %v4701 = vmul.f32 %v4446, 0.26601171
  %v4702 = vmul.f32 %v4447, 0.26601171
  %v4703 = vmul.f32 %v4448, 0.26601171
  %v4704 = vadd.f32 %v4656, %v4680
  %v4705 = vadd.f32 %v4657, %v4681
  %v4706 = vadd.f32 %v4658, %v4682
  %v4707 = vadd.f32 %v4659, %v4683
  %v4708 = vadd.f32 %v4660, %v4684
  %v4709 = vadd.f32 %v4661, %v4685
  %v4710 = vadd.f32 %v4662, %v4686
  %v4711 = vadd.f32 %v4663, %v4687
  %v4712 = vadd.f32 %v4664, %v4688
  %v4713 = vadd.f32 %v4665, %v4689
  %v4714 = vadd.f32 %v4666, %v4690
  %v4715 = vadd.f32 %v4667, %v4691
  %v4716 = vadd.f32 %v4668, %v4692
  %v4717 = vadd.f32 %v4669, %v4693
  %v4718 = vadd.f32 %v4670, %v4694
  %v4719 = vadd.f32 %v4671, %v4695
  %v4720 = vadd.f32 %v4672, %v4696
  %v4721 = vadd.f32 %v4673, %v4697
  %v4722 = vadd.f32 %v4674, %v4698
  %v4723 = vadd.f32 %v4675, %v4699
  %v4724 = vadd.f32 %v4676, %v4700
  %v4725 = vadd.f32 %v4677, %v4701
  %v4726 = vadd.f32 %v4678, %v4702
  %v4727 = vadd.f32 %v4679, %v4703
  %v4728 = vmul.f32 %v4446, 0.21300554
  %v4729 = vmul.f32 %v4447, 0.21300554
  %v4730 = vmul.f32 %v4448, 0.21300554
  %v4731 = vmul.f32 %v4449, 0.21300554
  %v4732 = vmul.f32 %v4450, 0.21300554
  %v4733 = vmul.f32 %v4451, 0.21300554
  %v4734 = vadd.f32 %v4704, %v4638
  %v4735 = vadd.f32 %v4705, %v4639
  %v4736 = vadd.f32 %v4706, %v4640
  %v4737 = vadd.f32 %v4707, %v4641
  %v4738 = vadd.f32 %v4708, %v4642
  %v4739 = vadd.f32 %v4709, %v4643
  %v4740 = vadd.f32 %v4710, %v4644
  %v4741 = vadd.f32 %v4711, %v4645
  %v4742 = vadd.f32 %v4712, %v4646
  %v4743 = vadd.f32 %v4713, %v4647
  %v4744 = vadd.f32 %v4714, %v4648
  %v4745 = vadd.f32 %v4715, %v4649
  %v4746 = vadd.f32 %v4716, %v4650
  %v4747 = vadd.f32 %v4717, %v4651
  %v4748 = vadd.f32 %v4718, %v4652
  %v4749 = vadd.f32 %v4719, %v4653
  %v4750 = vadd.f32 %v4720, %v4654
  %v4751 = vadd.f32 %v4721, %v4655
  %v4752 = vadd.f32 %v4722, %v4728
  %v4753 = vadd.f32 %v4723, %v4729
  %v4754 = vadd.f32 %v4724, %v4730
  %v4755 = vadd.f32 %v4725, %v4731
  %v4756 = vadd.f32 %v4726, %v4732
  %v4757 = vadd.f32 %v4727, %v4733
  %v4758 = vmul.f32 %v4443, 0.10936069
  %v4759 = vmul.f32 %v4444, 0.10936069
  %v4760 = vmul.f32 %v4445, 0.10936069
  %v4761 = vmul.f32 %v4446, 0.10936069
  %v4762 = vmul.f32 %v4447, 0.10936069
  %v4763 = vmul.f32 %v4448, 0.10936069
  %v4764 = vmul.f32 %v4449, 0.10936069
  %v4765 = vmul.f32 %v4450, 0.10936069
  %v4766 = vmul.f32 %v4451, 0.10936069
  %v4767 = vmul.f32 %v4452, 0.10936069
  %v4768 = vmul.f32 %v4453, 0.10936069
  %v4769 = vmul.f32 %v4454, 0.10936069
  %v4770 = vadd.f32 %v4734, %v4596
  %v4771 = vadd.f32 %v4735, %v4597
  %v4772 = vadd.f32 %v4736, %v4598
  %v4773 = vadd.f32 %v4737, %v4599
  %v4774 = vadd.f32 %v4738, %v4600
  %v4775 = vadd.f32 %v4739, %v4601
  %v4776 = vadd.f32 %v4740, %v4602
  %v4777 = vadd.f32 %v4741, %v4603
  %v4778 = vadd.f32 %v4742, %v4604
  %v4779 = vadd.f32 %v4743, %v4605
  %v4780 = vadd.f32 %v4744, %v4606
  %v4781 = vadd.f32 %v4745, %v4607
  %v4782 = vadd.f32 %v4746, %v4758
  %v4783 = vadd.f32 %v4747, %v4759
  %v4784 = vadd.f32 %v4748, %v4760
  %v4785 = vadd.f32 %v4749, %v4761
  %v4786 = vadd.f32 %v4750, %v4762
  %v4787 = vadd.f32 %v4751, %v4763
  %v4788 = vadd.f32 %v4752, %v4764
  %v4789 = vadd.f32 %v4753, %v4765
  %v4790 = vadd.f32 %v4754, %v4766
  %v4791 = vadd.f32 %v4755, %v4767
  %v4792 = vadd.f32 %v4756, %v4768
  %v4793 = vadd.f32 %v4757, %v4769
  %v4794 = vmul.f32 %v4440, 0.036000773
  %v4795 = vmul.f32 %v4441, 0.036000773
  %v4796 = vmul.f32 %v4442, 0.036000773
  %v4797 = vmul.f32 %v4443, 0.036000773
  %v4798 = vmul.f32 %v4444, 0.036000773
  %v4799 = vmul.f32 %v4445, 0.036000773
  %v4800 = vmul.f32 %v4446, 0.036000773
  %v4801 = vmul.f32 %v4447, 0.036000773
  %v4802 = vmul.f32 %v4448, 0.036000773
  %v4803 = vmul.f32 %v4449, 0.036000773
  %v4804 = vmul.f32 %v4450, 0.036000773
  %v4805 = vmul.f32 %v4451, 0.036000773
  %v4806 = vmul.f32 %v4452, 0.036000773
  %v4807 = vmul.f32 %v4453, 0.036000773
  %v4808 = vmul.f32 %v4454, 0.036000773
  %v4809 = vmul.f32 %v4455, 0.036000773
  %v4810 = vmul.f32 %v4456, 0.036000773
  %v4811 = vmul.f32 %v4457, 0.036000773
  %v4812 = vadd.f32 %v4770, %v4554
  %v4813 = vadd.f32 %v4771, %v4555
  %v4814 = vadd.f32 %v4772, %v4556
  %v4815 = vadd.f32 %v4773, %v4557
  %v4816 = vadd.f32 %v4774, %v4558
  %v4817 = vadd.f32 %v4775, %v4559
  %v4818 = vadd.f32 %v4776, %v4794
  %v4819 = vadd.f32 %v4777, %v4795
  %v4820 = vadd.f32 %v4778, %v4796
  %v4821 = vadd.f32 %v4779, %v4797
  %v4822 = vadd.f32 %v4780, %v4798
  %v4823 = vadd.f32 %v4781, %v4799
  %v4824 = vadd.f32 %v4782, %v4800
  %v4825 = vadd.f32 %v4783, %v4801
  %v4826 = vadd.f32 %v4784, %v4802
  %v4827 = vadd.f32 %v4785, %v4803
  %v4828 = vadd.f32 %v4786, %v4804
  %v4829 = vadd.f32 %v4787, %v4805
  %v4830 = vadd.f32 %v4788, %v4806
  %v4831 = vadd.f32 %v4789, %v4807
  %v4832 = vadd.f32 %v4790, %v4808
  %v4833 = vadd.f32 %v4791, %v4809
  %v4834 = vadd.f32 %v4792, %v4810
  %v4835 = vadd.f32 %v4793, %v4811
  %v4836 = vmul.f32 %v4437, 0.007598758
  %v4837 = vmul.f32 %v4438, 0.007598758
  %v4838 = vmul.f32 %v4439, 0.007598758
  %v4839 = vmul.f32 %v4440, 0.007598758
  %v4840 = vmul.f32 %v4441, 0.007598758
  %v4841 = vmul.f32 %v4442, 0.007598758
  %v4842 = vmul.f32 %v4443, 0.007598758
  %v4843 = vmul.f32 %v4444, 0.007598758
  %v4844 = vmul.f32 %v4445, 0.007598758
  %v4845 = vmul.f32 %v4446, 0.007598758
  %v4846 = vmul.f32 %v4447, 0.007598758
  %v4847 = vmul.f32 %v4448, 0.007598758
  %v4848 = vmul.f32 %v4449, 0.007598758
  %v4849 = vmul.f32 %v4450, 0.007598758
  %v4850 = vmul.f32 %v4451, 0.007598758
  %v4851 = vmul.f32 %v4452, 0.007598758
  %v4852 = vmul.f32 %v4453, 0.007598758
  %v4853 = vmul.f32 %v4454, 0.007598758
  %v4854 = vmul.f32 %v4455, 0.007598758
  %v4855 = vmul.f32 %v4456, 0.007598758
  %v4856 = vmul.f32 %v4457, 0.007598758
  %v4857 = vmul.f32 %v4458, 0.007598758
  %v4858 = vmul.f32 %v4459, 0.007598758
  %v4859 = vmul.f32 %v4460, 0.007598758
  %v4860 = vadd.f32 %v4812, %v4836
  %v4861 = vadd.f32 %v4813, %v4837
  %v4862 = vadd.f32 %v4814, %v4838
  %v4863 = vadd.f32 %v4815, %v4839
  %v4864 = vadd.f32 %v4816, %v4840
  %v4865 = vadd.f32 %v4817, %v4841
  %v4866 = vadd.f32 %v4818, %v4842
  %v4867 = vadd.f32 %v4819, %v4843
  %v4868 = vadd.f32 %v4820, %v4844
  %v4869 = vadd.f32 %v4821, %v4845
  %v4870 = vadd.f32 %v4822, %v4846
  %v4871 = vadd.f32 %v4823, %v4847
  %v4872 = vadd.f32 %v4824, %v4848
  %v4873 = vadd.f32 %v4825, %v4849
  %v4874 = vadd.f32 %v4826, %v4850
  %v4875 = vadd.f32 %v4827, %v4851
  %v4876 = vadd.f32 %v4828, %v4852
  %v4877 = vadd.f32 %v4829, %v4853
  %v4878 = vadd.f32 %v4830, %v4854
  %v4879 = vadd.f32 %v4831, %v4855
  %v4880 = vadd.f32 %v4832, %v4856
  %v4881 = vadd.f32 %v4833, %v4857
  %v4882 = vadd.f32 %v4834, %v4858
  %v4883 = vadd.f32 %v4835, %v4859
  %v4884 = vmul.f32 %v4440, 0.0010283801
  %v4885 = vmul.f32 %v4441, 0.0010283801
  %v4886 = vmul.f32 %v4442, 0.0010283801
  %v4887 = vmul.f32 %v4443, 0.0010283801
  %v4888 = vmul.f32 %v4444, 0.0010283801
  %v4889 = vmul.f32 %v4445, 0.0010283801
  %v4890 = vmul.f32 %v4446, 0.0010283801
  %v4891 = vmul.f32 %v4447, 0.0010283801
  %v4892 = vmul.f32 %v4448, 0.0010283801
  %v4893 = vmul.f32 %v4449, 0.0010283801
  %v4894 = vmul.f32 %v4450, 0.0010283801
  %v4895 = vmul.f32 %v4451, 0.0010283801
  %v4896 = vmul.f32 %v4452, 0.0010283801
  %v4897 = vmul.f32 %v4453, 0.0010283801
  %v4898 = vmul.f32 %v4454, 0.0010283801
  %v4899 = vmul.f32 %v4455, 0.0010283801
  %v4900 = vmul.f32 %v4456, 0.0010283801
  %v4901 = vmul.f32 %v4457, 0.0010283801
  %v4902 = vmul.f32 %v4458, 0.0010283801
  %v4903 = vmul.f32 %v4459, 0.0010283801
  %v4904 = vmul.f32 %v4460, 0.0010283801
  %v4905 = vmul.f32 %v4461, 0.0010283801
  %v4906 = vmul.f32 %v4462, 0.0010283801
  %v4907 = vmul.f32 %v4463, 0.0010283801
  %v4908 = vadd.f32 %v4860, %v4884
  %v4909 = vadd.f32 %v4861, %v4885
  %v4910 = vadd.f32 %v4862, %v4886
  %v4911 = vadd.f32 %v4863, %v4887
  %v4912 = vadd.f32 %v4864, %v4888
  %v4913 = vadd.f32 %v4865, %v4889
  %v4914 = vadd.f32 %v4866, %v4890
  %v4915 = vadd.f32 %v4867, %v4891
  %v4916 = vadd.f32 %v4868, %v4892
  %v4917 = vadd.f32 %v4869, %v4893
  %v4918 = vadd.f32 %v4870, %v4894
  %v4919 = vadd.f32 %v4871, %v4895
  %v4920 = vadd.f32 %v4872, %v4896
  %v4921 = vadd.f32 %v4873, %v4897
  %v4922 = vadd.f32 %v4874, %v4898
  %v4923 = vadd.f32 %v4875, %v4899
  %v4924 = vadd.f32 %v4876, %v4900
  %v4925 = vadd.f32 %v4877, %v4901
  %v4926 = vadd.f32 %v4878, %v4902
  %v4927 = vadd.f32 %v4879, %v4903
  %v4928 = vadd.f32 %v4880, %v4904
  %v4929 = vadd.f32 %v4881, %v4905
  %v4930 = vadd.f32 %v4882, %v4906
  %v4931 = vadd.f32 %v4883, %v4907
  %v4932 = vmul.f32 %v4908, 0.0010283801
  %v4933 = vmul.f32 %v4911, 0.0010283801
  %v4934 = vmul.f32 %v4914, 0.0010283801
  %v4935 = vmul.f32 %v4917, 0.0010283801
  %v4936 = vmul.f32 %v4920, 0.0010283801
  %v4937 = vmul.f32 %v4923, 0.0010283801
  %v4938 = vmul.f32 %v4926, 0.0010283801
  %v4939 = vmul.f32 %v4929, 0.0010283801
  %v4940 = vmul.f32 %v4908, 0.007598758
  %v4941 = vmul.f32 %v4909, 0.007598758
  %v4942 = vmul.f32 %v4911, 0.007598758
  %v4943 = vmul.f32 %v4912, 0.007598758
  %v4944 = vmul.f32 %v4914, 0.007598758
  %v4945 = vmul.f32 %v4915, 0.007598758
  %v4946 = vmul.f32 %v4917, 0.007598758
  %v4947 = vmul.f32 %v4918, 0.007598758
  %v4948 = vmul.f32 %v4920, 0.007598758
  %v4949 = vmul.f32 %v4921, 0.007598758
  %v4950 = vmul.f32 %v4923, 0.007598758
  %v4951 = vmul.f32 %v4924, 0.007598758
  %v4952 = vmul.f32 %v4926, 0.007598758
  %v4953 = vmul.f32 %v4927, 0.007598758
  %v4954 = vmul.f32 %v4929, 0.007598758
  %v4955 = vmul.f32 %v4930, 0.007598758
  %v4972 = vrot.slane %v4940, 1
  %v4973 = vrot.slane %v4941, 1
  %v4974 = vsel %vm627, %v4972, %v4973
  %v4975 = vrot.slane %v4942, 1
  %v4976 = vrot.slane %v4943, 1
  %v4977 = vsel %vm627, %v4975, %v4976
  %v4978 = vrot.slane %v4944, 1
  %v4979 = vrot.slane %v4945, 1
  %v4980 = vsel %vm627, %v4978, %v4979
  %v4981 = vrot.slane %v4946, 1
  %v4982 = vrot.slane %v4947, 1
  %v4983 = vsel %vm627, %v4981, %v4982
  %v4984 = vrot.slane %v4948, 1
  %v4985 = vrot.slane %v4949, 1
  %v4986 = vsel %vm627, %v4984, %v4985
  %v4987 = vrot.slane %v4950, 1
  %v4988 = vrot.slane %v4951, 1
  %v4989 = vsel %vm627, %v4987, %v4988
  %v4990 = vrot.slane %v4952, 1
  %v4991 = vrot.slane %v4953, 1
  %v4992 = vsel %vm627, %v4990, %v4991
  %v4993 = vrot.slane %v4954, 1
  %v4994 = vrot.slane %v4955, 1
  %v4995 = vsel %vm627, %v4993, %v4994
  %v5004 = vadd.f32 %v4932, %v4974
  %v5005 = vadd.f32 %v4933, %v4977
  %v5006 = vadd.f32 %v4934, %v4980
  %v5007 = vadd.f32 %v4935, %v4983
  %v5008 = vadd.f32 %v4936, %v4986
  %v5009 = vadd.f32 %v4937, %v4989
  %v5010 = vadd.f32 %v4938, %v4992
  %v5011 = vadd.f32 %v4939, %v4995
  %v5012 = vmul.f32 %v4908, 0.036000773
  %v5013 = vmul.f32 %v4909, 0.036000773
  %v5014 = vmul.f32 %v4911, 0.036000773
  %v5015 = vmul.f32 %v4912, 0.036000773
  %v5016 = vmul.f32 %v4914, 0.036000773
  %v5017 = vmul.f32 %v4915, 0.036000773
  %v5018 = vmul.f32 %v4917, 0.036000773
  %v5019 = vmul.f32 %v4918, 0.036000773
  %v5020 = vmul.f32 %v4920, 0.036000773
  %v5021 = vmul.f32 %v4921, 0.036000773
  %v5022 = vmul.f32 %v4923, 0.036000773
  %v5023 = vmul.f32 %v4924, 0.036000773
  %v5024 = vmul.f32 %v4926, 0.036000773
  %v5025 = vmul.f32 %v4927, 0.036000773
  %v5026 = vmul.f32 %v4929, 0.036000773
  %v5027 = vmul.f32 %v4930, 0.036000773
  %v5044 = vrot.slane %v5012, 2
  %v5045 = vrot.slane %v5013, 2
  %v5046 = vsel %vm700, %v5044, %v5045
  %v5047 = vrot.slane %v5014, 2
  %v5048 = vrot.slane %v5015, 2
  %v5049 = vsel %vm700, %v5047, %v5048
  %v5050 = vrot.slane %v5016, 2
  %v5051 = vrot.slane %v5017, 2
  %v5052 = vsel %vm700, %v5050, %v5051
  %v5053 = vrot.slane %v5018, 2
  %v5054 = vrot.slane %v5019, 2
  %v5055 = vsel %vm700, %v5053, %v5054
  %v5056 = vrot.slane %v5020, 2
  %v5057 = vrot.slane %v5021, 2
  %v5058 = vsel %vm700, %v5056, %v5057
  %v5059 = vrot.slane %v5022, 2
  %v5060 = vrot.slane %v5023, 2
  %v5061 = vsel %vm700, %v5059, %v5060
  %v5062 = vrot.slane %v5024, 2
  %v5063 = vrot.slane %v5025, 2
  %v5064 = vsel %vm700, %v5062, %v5063
  %v5065 = vrot.slane %v5026, 2
  %v5066 = vrot.slane %v5027, 2
  %v5067 = vsel %vm700, %v5065, %v5066
  %v5076 = vadd.f32 %v5004, %v5046
  %v5077 = vadd.f32 %v5005, %v5049
  %v5078 = vadd.f32 %v5006, %v5052
  %v5079 = vadd.f32 %v5007, %v5055
  %v5080 = vadd.f32 %v5008, %v5058
  %v5081 = vadd.f32 %v5009, %v5061
  %v5082 = vadd.f32 %v5010, %v5064
  %v5083 = vadd.f32 %v5011, %v5067
  %v5084 = vmul.f32 %v4908, 0.10936069
  %v5085 = vmul.f32 %v4909, 0.10936069
  %v5086 = vmul.f32 %v4911, 0.10936069
  %v5087 = vmul.f32 %v4912, 0.10936069
  %v5088 = vmul.f32 %v4914, 0.10936069
  %v5089 = vmul.f32 %v4915, 0.10936069
  %v5090 = vmul.f32 %v4917, 0.10936069
  %v5091 = vmul.f32 %v4918, 0.10936069
  %v5092 = vmul.f32 %v4920, 0.10936069
  %v5093 = vmul.f32 %v4921, 0.10936069
  %v5094 = vmul.f32 %v4923, 0.10936069
  %v5095 = vmul.f32 %v4924, 0.10936069
  %v5096 = vmul.f32 %v4926, 0.10936069
  %v5097 = vmul.f32 %v4927, 0.10936069
  %v5098 = vmul.f32 %v4929, 0.10936069
  %v5099 = vmul.f32 %v4930, 0.10936069
  %v5116 = vrot.slane %v5084, 3
  %v5117 = vrot.slane %v5085, 3
  %v5118 = vsel %vm773, %v5116, %v5117
  %v5119 = vrot.slane %v5086, 3
  %v5120 = vrot.slane %v5087, 3
  %v5121 = vsel %vm773, %v5119, %v5120
  %v5122 = vrot.slane %v5088, 3
  %v5123 = vrot.slane %v5089, 3
  %v5124 = vsel %vm773, %v5122, %v5123
  %v5125 = vrot.slane %v5090, 3
  %v5126 = vrot.slane %v5091, 3
  %v5127 = vsel %vm773, %v5125, %v5126
  %v5128 = vrot.slane %v5092, 3
  %v5129 = vrot.slane %v5093, 3
  %v5130 = vsel %vm773, %v5128, %v5129
  %v5131 = vrot.slane %v5094, 3
  %v5132 = vrot.slane %v5095, 3
  %v5133 = vsel %vm773, %v5131, %v5132
  %v5134 = vrot.slane %v5096, 3
  %v5135 = vrot.slane %v5097, 3
  %v5136 = vsel %vm773, %v5134, %v5135
  %v5137 = vrot.slane %v5098, 3
  %v5138 = vrot.slane %v5099, 3
  %v5139 = vsel %vm773, %v5137, %v5138
  %v5148 = vadd.f32 %v5076, %v5118
  %v5149 = vadd.f32 %v5077, %v5121
  %v5150 = vadd.f32 %v5078, %v5124
  %v5151 = vadd.f32 %v5079, %v5127
  %v5152 = vadd.f32 %v5080, %v5130
  %v5153 = vadd.f32 %v5081, %v5133
  %v5154 = vadd.f32 %v5082, %v5136
  %v5155 = vadd.f32 %v5083, %v5139
  %v5156 = vmul.f32 %v4908, 0.21300554
  %v5157 = vmul.f32 %v4909, 0.21300554
  %v5158 = vmul.f32 %v4911, 0.21300554
  %v5159 = vmul.f32 %v4912, 0.21300554
  %v5160 = vmul.f32 %v4914, 0.21300554
  %v5161 = vmul.f32 %v4915, 0.21300554
  %v5162 = vmul.f32 %v4917, 0.21300554
  %v5163 = vmul.f32 %v4918, 0.21300554
  %v5164 = vmul.f32 %v4920, 0.21300554
  %v5165 = vmul.f32 %v4921, 0.21300554
  %v5166 = vmul.f32 %v4923, 0.21300554
  %v5167 = vmul.f32 %v4924, 0.21300554
  %v5168 = vmul.f32 %v4926, 0.21300554
  %v5169 = vmul.f32 %v4927, 0.21300554
  %v5170 = vmul.f32 %v4929, 0.21300554
  %v5171 = vmul.f32 %v4930, 0.21300554
  %v5188 = vrot.slane %v5156, 4
  %v5189 = vrot.slane %v5157, 4
  %v5190 = vsel %vm846, %v5188, %v5189
  %v5191 = vrot.slane %v5158, 4
  %v5192 = vrot.slane %v5159, 4
  %v5193 = vsel %vm846, %v5191, %v5192
  %v5194 = vrot.slane %v5160, 4
  %v5195 = vrot.slane %v5161, 4
  %v5196 = vsel %vm846, %v5194, %v5195
  %v5197 = vrot.slane %v5162, 4
  %v5198 = vrot.slane %v5163, 4
  %v5199 = vsel %vm846, %v5197, %v5198
  %v5200 = vrot.slane %v5164, 4
  %v5201 = vrot.slane %v5165, 4
  %v5202 = vsel %vm846, %v5200, %v5201
  %v5203 = vrot.slane %v5166, 4
  %v5204 = vrot.slane %v5167, 4
  %v5205 = vsel %vm846, %v5203, %v5204
  %v5206 = vrot.slane %v5168, 4
  %v5207 = vrot.slane %v5169, 4
  %v5208 = vsel %vm846, %v5206, %v5207
  %v5209 = vrot.slane %v5170, 4
  %v5210 = vrot.slane %v5171, 4
  %v5211 = vsel %vm846, %v5209, %v5210
  %v5220 = vadd.f32 %v5148, %v5190
  %v5221 = vadd.f32 %v5149, %v5193
  %v5222 = vadd.f32 %v5150, %v5196
  %v5223 = vadd.f32 %v5151, %v5199
  %v5224 = vadd.f32 %v5152, %v5202
  %v5225 = vadd.f32 %v5153, %v5205
  %v5226 = vadd.f32 %v5154, %v5208
  %v5227 = vadd.f32 %v5155, %v5211
  %v5228 = vmul.f32 %v4908, 0.26601171
  %v5229 = vmul.f32 %v4909, 0.26601171
  %v5230 = vmul.f32 %v4911, 0.26601171
  %v5231 = vmul.f32 %v4912, 0.26601171
  %v5232 = vmul.f32 %v4914, 0.26601171
  %v5233 = vmul.f32 %v4915, 0.26601171
  %v5234 = vmul.f32 %v4917, 0.26601171
  %v5235 = vmul.f32 %v4918, 0.26601171
  %v5236 = vmul.f32 %v4920, 0.26601171
  %v5237 = vmul.f32 %v4921, 0.26601171
  %v5238 = vmul.f32 %v4923, 0.26601171
  %v5239 = vmul.f32 %v4924, 0.26601171
  %v5240 = vmul.f32 %v4926, 0.26601171
  %v5241 = vmul.f32 %v4927, 0.26601171
  %v5242 = vmul.f32 %v4929, 0.26601171
  %v5243 = vmul.f32 %v4930, 0.26601171
  %v5260 = vrot.slane %v5228, 5
  %v5261 = vrot.slane %v5229, 5
  %v5262 = vsel %vm919, %v5260, %v5261
  %v5263 = vrot.slane %v5230, 5
  %v5264 = vrot.slane %v5231, 5
  %v5265 = vsel %vm919, %v5263, %v5264
  %v5266 = vrot.slane %v5232, 5
  %v5267 = vrot.slane %v5233, 5
  %v5268 = vsel %vm919, %v5266, %v5267
  %v5269 = vrot.slane %v5234, 5
  %v5270 = vrot.slane %v5235, 5
  %v5271 = vsel %vm919, %v5269, %v5270
  %v5272 = vrot.slane %v5236, 5
  %v5273 = vrot.slane %v5237, 5
  %v5274 = vsel %vm919, %v5272, %v5273
  %v5275 = vrot.slane %v5238, 5
  %v5276 = vrot.slane %v5239, 5
  %v5277 = vsel %vm919, %v5275, %v5276
  %v5278 = vrot.slane %v5240, 5
  %v5279 = vrot.slane %v5241, 5
  %v5280 = vsel %vm919, %v5278, %v5279
  %v5281 = vrot.slane %v5242, 5
  %v5282 = vrot.slane %v5243, 5
  %v5283 = vsel %vm919, %v5281, %v5282
  %v5292 = vadd.f32 %v5220, %v5262
  %v5293 = vadd.f32 %v5221, %v5265
  %v5294 = vadd.f32 %v5222, %v5268
  %v5295 = vadd.f32 %v5223, %v5271
  %v5296 = vadd.f32 %v5224, %v5274
  %v5297 = vadd.f32 %v5225, %v5277
  %v5298 = vadd.f32 %v5226, %v5280
  %v5299 = vadd.f32 %v5227, %v5283
  %v5300 = vrot.slane %v5156, 6
  %v5301 = vrot.slane %v5157, 6
  %v5302 = vsel %vm960, %v5300, %v5301
  %v5303 = vrot.slane %v5158, 6
  %v5304 = vrot.slane %v5159, 6
  %v5305 = vsel %vm960, %v5303, %v5304
  %v5306 = vrot.slane %v5160, 6
  %v5307 = vrot.slane %v5161, 6
  %v5308 = vsel %vm960, %v5306, %v5307
  %v5309 = vrot.slane %v5162, 6
  %v5310 = vrot.slane %v5163, 6
  %v5311 = vsel %vm960, %v5309, %v5310
  %v5312 = vrot.slane %v5164, 6
  %v5313 = vrot.slane %v5165, 6
  %v5314 = vsel %vm960, %v5312, %v5313
  %v5315 = vrot.slane %v5166, 6
  %v5316 = vrot.slane %v5167, 6
  %v5317 = vsel %vm960, %v5315, %v5316
  %v5318 = vrot.slane %v5168, 6
  %v5319 = vrot.slane %v5169, 6
  %v5320 = vsel %vm960, %v5318, %v5319
  %v5321 = vrot.slane %v5170, 6
  %v5322 = vrot.slane %v5171, 6
  %v5323 = vsel %vm960, %v5321, %v5322
  %v5332 = vadd.f32 %v5292, %v5302
  %v5333 = vadd.f32 %v5293, %v5305
  %v5334 = vadd.f32 %v5294, %v5308
  %v5335 = vadd.f32 %v5295, %v5311
  %v5336 = vadd.f32 %v5296, %v5314
  %v5337 = vadd.f32 %v5297, %v5317
  %v5338 = vadd.f32 %v5298, %v5320
  %v5339 = vadd.f32 %v5299, %v5323
  %v5340 = vrot.slane %v5084, 7
  %v5341 = vrot.slane %v5085, 7
  %v5342 = vsel %vm1001, %v5340, %v5341
  %v5343 = vrot.slane %v5086, 7
  %v5344 = vrot.slane %v5087, 7
  %v5345 = vsel %vm1001, %v5343, %v5344
  %v5346 = vrot.slane %v5088, 7
  %v5347 = vrot.slane %v5089, 7
  %v5348 = vsel %vm1001, %v5346, %v5347
  %v5349 = vrot.slane %v5090, 7
  %v5350 = vrot.slane %v5091, 7
  %v5351 = vsel %vm1001, %v5349, %v5350
  %v5352 = vrot.slane %v5092, 7
  %v5353 = vrot.slane %v5093, 7
  %v5354 = vsel %vm1001, %v5352, %v5353
  %v5355 = vrot.slane %v5094, 7
  %v5356 = vrot.slane %v5095, 7
  %v5357 = vsel %vm1001, %v5355, %v5356
  %v5358 = vrot.slane %v5096, 7
  %v5359 = vrot.slane %v5097, 7
  %v5360 = vsel %vm1001, %v5358, %v5359
  %v5361 = vrot.slane %v5098, 7
  %v5362 = vrot.slane %v5099, 7
  %v5363 = vsel %vm1001, %v5361, %v5362
  %v5372 = vadd.f32 %v5332, %v5342
  %v5373 = vadd.f32 %v5333, %v5345
  %v5374 = vadd.f32 %v5334, %v5348
  %v5375 = vadd.f32 %v5335, %v5351
  %v5376 = vadd.f32 %v5336, %v5354
  %v5377 = vadd.f32 %v5337, %v5357
  %v5378 = vadd.f32 %v5338, %v5360
  %v5379 = vadd.f32 %v5339, %v5363
  %v5380 = vadd.f32 %v5372, %v5013
  %v5381 = vadd.f32 %v5373, %v5015
  %v5382 = vadd.f32 %v5374, %v5017
  %v5383 = vadd.f32 %v5375, %v5019
  %v5384 = vadd.f32 %v5376, %v5021
  %v5385 = vadd.f32 %v5377, %v5023
  %v5386 = vadd.f32 %v5378, %v5025
  %v5387 = vadd.f32 %v5379, %v5027
  %v5388 = vmul.f32 %v4910, 0.007598758
  %v5389 = vmul.f32 %v4913, 0.007598758
  %v5390 = vmul.f32 %v4916, 0.007598758
  %v5391 = vmul.f32 %v4919, 0.007598758
  %v5392 = vmul.f32 %v4922, 0.007598758
  %v5393 = vmul.f32 %v4925, 0.007598758
  %v5394 = vmul.f32 %v4928, 0.007598758
  %v5395 = vmul.f32 %v4931, 0.007598758
  %v5404 = vrot.slane %v5388, 1
  %v5405 = vsel %vm627, %v4973, %v5404
  %v5406 = vrot.slane %v5389, 1
  %v5407 = vsel %vm627, %v4976, %v5406
  %v5408 = vrot.slane %v5390, 1
  %v5409 = vsel %vm627, %v4979, %v5408
  %v5410 = vrot.slane %v5391, 1
  %v5411 = vsel %vm627, %v4982, %v5410
  %v5412 = vrot.slane %v5392, 1
  %v5413 = vsel %vm627, %v4985, %v5412
  %v5414 = vrot.slane %v5393, 1
  %v5415 = vsel %vm627, %v4988, %v5414
  %v5416 = vrot.slane %v5394, 1
  %v5417 = vsel %vm627, %v4991, %v5416
  %v5418 = vrot.slane %v5395, 1
  %v5419 = vsel %vm627, %v4994, %v5418
  %v5428 = vadd.f32 %v5380, %v5405
  %v5429 = vadd.f32 %v5381, %v5407
  %v5430 = vadd.f32 %v5382, %v5409
  %v5431 = vadd.f32 %v5383, %v5411
  %v5432 = vadd.f32 %v5384, %v5413
  %v5433 = vadd.f32 %v5385, %v5415
  %v5434 = vadd.f32 %v5386, %v5417
  %v5435 = vadd.f32 %v5387, %v5419
  %v5436 = vmul.f32 %v4909, 0.0010283801
  %v5437 = vmul.f32 %v4910, 0.0010283801
  %v5438 = vmul.f32 %v4912, 0.0010283801
  %v5439 = vmul.f32 %v4913, 0.0010283801
  %v5440 = vmul.f32 %v4915, 0.0010283801
  %v5441 = vmul.f32 %v4916, 0.0010283801
  %v5442 = vmul.f32 %v4918, 0.0010283801
  %v5443 = vmul.f32 %v4919, 0.0010283801
  %v5444 = vmul.f32 %v4921, 0.0010283801
  %v5445 = vmul.f32 %v4922, 0.0010283801
  %v5446 = vmul.f32 %v4924, 0.0010283801
  %v5447 = vmul.f32 %v4925, 0.0010283801
  %v5448 = vmul.f32 %v4927, 0.0010283801
  %v5449 = vmul.f32 %v4928, 0.0010283801
  %v5450 = vmul.f32 %v4930, 0.0010283801
  %v5451 = vmul.f32 %v4931, 0.0010283801
  %v5468 = vrot.slane %v5436, 2
  %v5469 = vrot.slane %v5437, 2
  %v5470 = vsel %vm700, %v5468, %v5469
  %v5471 = vrot.slane %v5438, 2
  %v5472 = vrot.slane %v5439, 2
  %v5473 = vsel %vm700, %v5471, %v5472
  %v5474 = vrot.slane %v5440, 2
  %v5475 = vrot.slane %v5441, 2
  %v5476 = vsel %vm700, %v5474, %v5475
  %v5477 = vrot.slane %v5442, 2
  %v5478 = vrot.slane %v5443, 2
  %v5479 = vsel %vm700, %v5477, %v5478
  %v5480 = vrot.slane %v5444, 2
  %v5481 = vrot.slane %v5445, 2
  %v5482 = vsel %vm700, %v5480, %v5481
  %v5483 = vrot.slane %v5446, 2
  %v5484 = vrot.slane %v5447, 2
  %v5485 = vsel %vm700, %v5483, %v5484
  %v5486 = vrot.slane %v5448, 2
  %v5487 = vrot.slane %v5449, 2
  %v5488 = vsel %vm700, %v5486, %v5487
  %v5489 = vrot.slane %v5450, 2
  %v5490 = vrot.slane %v5451, 2
  %v5491 = vsel %vm700, %v5489, %v5490
  %v5500 = vadd.f32 %v5428, %v5470
  %v5501 = vadd.f32 %v5429, %v5473
  %v5502 = vadd.f32 %v5430, %v5476
  %v5503 = vadd.f32 %v5431, %v5479
  %v5504 = vadd.f32 %v5432, %v5482
  %v5505 = vadd.f32 %v5433, %v5485
  %v5506 = vadd.f32 %v5434, %v5488
  %v5507 = vadd.f32 %v5435, %v5491
  %v5508 = vmul.f32 %v1162, %v1162
  %v5509 = vmul.f32 %v1163, %v1163
  %v5510 = vmul.f32 %v1164, %v1164
  %v5511 = vmul.f32 %v1165, %v1165
  %v5512 = vmul.f32 %v1166, %v1166
  %v5513 = vmul.f32 %v1167, %v1167
  %v5514 = vmul.f32 %v1168, %v1168
  %v5515 = vmul.f32 %v1169, %v1169
  %v5516 = vmul.f32 %v2206, %v2206
  %v5517 = vmul.f32 %v2207, %v2207
  %v5518 = vmul.f32 %v2208, %v2208
  %v5519 = vmul.f32 %v2209, %v2209
  %v5520 = vmul.f32 %v2210, %v2210
  %v5521 = vmul.f32 %v2211, %v2211
  %v5522 = vmul.f32 %v2212, %v2212
  %v5523 = vmul.f32 %v2213, %v2213
  %v5524 = vmul.f32 %v1162, %v2206
  %v5525 = vmul.f32 %v1163, %v2207
  %v5526 = vmul.f32 %v1164, %v2208
  %v5527 = vmul.f32 %v1165, %v2209
  %v5528 = vmul.f32 %v1166, %v2210
  %v5529 = vmul.f32 %v1167, %v2211
  %v5530 = vmul.f32 %v1168, %v2212
  %v5531 = vmul.f32 %v1169, %v2213
  %v5532 = vsub.f32 %v3304, %v5508
  %v5533 = vsub.f32 %v3305, %v5509
  %v5534 = vsub.f32 %v3306, %v5510
  %v5535 = vsub.f32 %v3307, %v5511
  %v5536 = vsub.f32 %v3308, %v5512
  %v5537 = vsub.f32 %v3309, %v5513
  %v5538 = vsub.f32 %v3310, %v5514
  %v5539 = vsub.f32 %v3311, %v5515
  %v5540 = vsub.f32 %v4402, %v5516
  %v5541 = vsub.f32 %v4403, %v5517
  %v5542 = vsub.f32 %v4404, %v5518
  %v5543 = vsub.f32 %v4405, %v5519
  %v5544 = vsub.f32 %v4406, %v5520
  %v5545 = vsub.f32 %v4407, %v5521
  %v5546 = vsub.f32 %v4408, %v5522
  %v5547 = vsub.f32 %v4409, %v5523
  %v5548 = vsub.f32 %v5500, %v5524
  %v5549 = vsub.f32 %v5501, %v5525
  %v5550 = vsub.f32 %v5502, %v5526
  %v5551 = vsub.f32 %v5503, %v5527
  %v5552 = vsub.f32 %v5504, %v5528
  %v5553 = vsub.f32 %v5505, %v5529
  %v5554 = vsub.f32 %v5506, %v5530
  %v5555 = vsub.f32 %v5507, %v5531
  %v5556 = vmul.f32 %v5524, 2.0
  %v5557 = vmul.f32 %v5525, 2.0
  %v5558 = vmul.f32 %v5526, 2.0
  %v5559 = vmul.f32 %v5527, 2.0
  %v5560 = vmul.f32 %v5528, 2.0
  %v5561 = vmul.f32 %v5529, 2.0
  %v5562 = vmul.f32 %v5530, 2.0
  %v5563 = vmul.f32 %v5531, 2.0
  %v5564 = vadd.f32 %v5556, 0.0001
  %v5565 = vadd.f32 %v5557, 0.0001
  %v5566 = vadd.f32 %v5558, 0.0001
  %v5567 = vadd.f32 %v5559, 0.0001
  %v5568 = vadd.f32 %v5560, 0.0001
  %v5569 = vadd.f32 %v5561, 0.0001
  %v5570 = vadd.f32 %v5562, 0.0001
  %v5571 = vadd.f32 %v5563, 0.0001
  %v5572 = vmul.f32 %v5548, 2.0
  %v5573 = vmul.f32 %v5549, 2.0
  %v5574 = vmul.f32 %v5550, 2.0
  %v5575 = vmul.f32 %v5551, 2.0
  %v5576 = vmul.f32 %v5552, 2.0
  %v5577 = vmul.f32 %v5553, 2.0
  %v5578 = vmul.f32 %v5554, 2.0
  %v5579 = vmul.f32 %v5555, 2.0
  %v5580 = vadd.f32 %v5572, 0.0009
  %v5581 = vadd.f32 %v5573, 0.0009
  %v5582 = vadd.f32 %v5574, 0.0009
  %v5583 = vadd.f32 %v5575, 0.0009
  %v5584 = vadd.f32 %v5576, 0.0009
  %v5585 = vadd.f32 %v5577, 0.0009
  %v5586 = vadd.f32 %v5578, 0.0009
  %v5587 = vadd.f32 %v5579, 0.0009
  %v5588 = vmul.f32 %v5564, %v5580
  %v5589 = vmul.f32 %v5565, %v5581
  %v5590 = vmul.f32 %v5566, %v5582
  %v5591 = vmul.f32 %v5567, %v5583
  %v5592 = vmul.f32 %v5568, %v5584
  %v5593 = vmul.f32 %v5569, %v5585
  %v5594 = vmul.f32 %v5570, %v5586
  %v5595 = vmul.f32 %v5571, %v5587
  %v5596 = vadd.f32 %v5508, %v5516
  %v5597 = vadd.f32 %v5509, %v5517
  %v5598 = vadd.f32 %v5510, %v5518
  %v5599 = vadd.f32 %v5511, %v5519
  %v5600 = vadd.f32 %v5512, %v5520
  %v5601 = vadd.f32 %v5513, %v5521
  %v5602 = vadd.f32 %v5514, %v5522
  %v5603 = vadd.f32 %v5515, %v5523
  %v5604 = vadd.f32 %v5596, 0.0001
  %v5605 = vadd.f32 %v5597, 0.0001
  %v5606 = vadd.f32 %v5598, 0.0001
  %v5607 = vadd.f32 %v5599, 0.0001
  %v5608 = vadd.f32 %v5600, 0.0001
  %v5609 = vadd.f32 %v5601, 0.0001
  %v5610 = vadd.f32 %v5602, 0.0001
  %v5611 = vadd.f32 %v5603, 0.0001
  %v5612 = vadd.f32 %v5532, %v5540
  %v5613 = vadd.f32 %v5533, %v5541
  %v5614 = vadd.f32 %v5534, %v5542
  %v5615 = vadd.f32 %v5535, %v5543
  %v5616 = vadd.f32 %v5536, %v5544
  %v5617 = vadd.f32 %v5537, %v5545
  %v5618 = vadd.f32 %v5538, %v5546
  %v5619 = vadd.f32 %v5539, %v5547
  %v5620 = vadd.f32 %v5612, 0.0009
  %v5621 = vadd.f32 %v5613, 0.0009
  %v5622 = vadd.f32 %v5614, 0.0009
  %v5623 = vadd.f32 %v5615, 0.0009
  %v5624 = vadd.f32 %v5616, 0.0009
  %v5625 = vadd.f32 %v5617, 0.0009
  %v5626 = vadd.f32 %v5618, 0.0009
  %v5627 = vadd.f32 %v5619, 0.0009
  %v5628 = vmul.f32 %v5604, %v5620
  %v5629 = vmul.f32 %v5605, %v5621
  %v5630 = vmul.f32 %v5606, %v5622
  %v5631 = vmul.f32 %v5607, %v5623
  %v5632 = vmul.f32 %v5608, %v5624
  %v5633 = vmul.f32 %v5609, %v5625
  %v5634 = vmul.f32 %v5610, %v5626
  %v5635 = vmul.f32 %v5611, %v5627
  %v5636 = vrcp.pop %v5628
  %v5637 = vmul.f32 %v5588, %v5636
  %v5638 = vrcp.pop %v5629
  %v5639 = vmul.f32 %v5589, %v5638
  %v5640 = vrcp.pop %v5630
  %v5641 = vmul.f32 %v5590, %v5640
  %v5642 = vrcp.pop %v5631
  %v5643 = vmul.f32 %v5591, %v5642
  %v5644 = vrcp.pop %v5632
  %v5645 = vmul.f32 %v5592, %v5644
  %v5646 = vrcp.pop %v5633
  %v5647 = vmul.f32 %v5593, %v5646
  %v5648 = vrcp.pop %v5634
  %v5649 = vmul.f32 %v5594, %v5648
  %v5650 = vrcp.pop %v5635
  %v5651 = vmul.f32 %v5595, %v5650
  %v5652 = vadd.f32 %v5637, %v5639
  %v5653 = vadd.f32 %v5652, %v5641
  %v5654 = vadd.f32 %v5653, %v5643
  %v5655 = vadd.f32 %v5654, %v5645
  %v5656 = vadd.f32 %v5655, %v5647
  %v5657 = vadd.f32 %v5656, %v5649
  %v5658 = vadd.f32 %v5657, %v5651
  %v5659 = vrot.slane %v5658, 4
  %v5660 = vadd.f32 %v5658, %v5659
  %v5661 = vrot.slane %v5660, 2
  %v5662 = vadd.f32 %v5660, %v5661
  %v5663 = vrot.slane %v5662, 1
  %v5664 = vadd.f32 %v5662, %v5663
  %5665 = vst [vmem:[%s2] sm:$0x1] %v5664
  // Predicated region
  $region10: #{l_ssim.1} parent=0 // pred_check
    _
  $region11: #{l_ssim.1} parent=0 // pred_check_branch
    %5667 = sbr.rel (0) target = $region13
  $region12: #{l_ssim.1} parent=0 // pred_region
    _
  $region13: #{l_ssim.1} parent=0 // pred_fallthru
    _
  // Predicated region
  $region14: #{l_ssim.1} parent=0 // pred_check
    _
  $region15: #{l_ssim.1} parent=0 // pred_check_branch
    %5669 = sbr.rel (0) target = $region17
  $region16: #{l_ssim.1} parent=0 // pred_region
    _
  $region17: #{l_ssim.1} parent=0 // pred_fallthru
    _

</llo_original>
